<compile_context>
chip_gen: v6e
topology: v6e:2x2x1
jax: 0.10.0
libtpu: 0.0.40
codegen_flags: <defaults>
</compile_context>

<pallas_src>
import functools

import jax
import jax.numpy as jnp
from jax import lax
from jax.experimental import pallas as pl
from jax.experimental.pallas import tpu as pltpu

# ----------------------------- configuration -------------------------------
MAX_LENGTH = 128          # tokenizer(..., max_length=128)
VOCAB = 256               # synthetic tokenizer vocabulary
D_MODEL = 32              # embedding size
HIDDEN = 32               # real classifier intermediate size
HIDDEN_PAD = 128          # padded to a full lane width (zero-padded, exact)
NUM_CLASSES = 3           # Negative / Neutral / Positive
CLASS_PAD = 128           # padded class dim -> dense lane stores
DEVICE_COUNT = 4          # emulates torch.cuda.device_count() for batch padding
PAD_TOKEN_ID = 0          # synthetic tokenizer pad id (mask == (ids != PAD))
L_CHUNK = 8               # sequence chunk per histogram step (= f32 sublane tile)
LABEL_MAP = {0: "Negative", 1: "Neutral", 2: "Positive"}


def _round_up(x, m):
    return ((x + m - 1) // m) * m


def _choose_b_tile(batch):
    """Rows per grid step.

    After the chunked-histogram restructure the per-row VMEM footprint is only
    ~1.3 KiB (ids + logits + hist scratch), so the tile is sized for:
      (a) >= 2 grid steps whenever there are >= 16 rows, so v7x's two
          TensorCores both get work under dimension_semantics=("parallel",);
      (b) a 256-row cap so the per-chunk [Bt, L_CHUNK, VOCAB] one-hot slab
          stays <= ~2 MiB (f32) / ~1 MiB (bf16) -- comfortably inside the
          scoped-VMEM default on v5e / v6e / v7x;
      (c) multiples of 8 so sublane tiles stay dense and padding waste is small.
    """
    b8 = _round_up(max(batch, 1), 8)
    if b8 <= 8:
        return 8
    return min(256, _round_up(pl.cdiv(b8, 2), 8))


def _onehot_dtype():
    """bf16 one-hot on bf16-VALU chips (v6e / v7x); f32 on v5e and older."""
    try:
        kind = jax.devices()[0].device_kind.lower()
    except Exception:
        return jnp.float32
    if any(g in kind for g in ("v2", "v3", "v4", "v5")):
        return jnp.float32
    return jnp.bfloat16


# ------------------------------ Pallas kernel ------------------------------
def classifier_kernel(ids_ref, ew1_ref, b1_ref, w2_ref, b2_ref,
                      logits_ref, hist_ref, *, onehot_dtype):
    # ids_ref:    [Bt, L]   int32 token ids (PAD_TOKEN_ID for padding)
    # ew1_ref:    [V, Hp]   f32   fused emb_table @ w1 (resident across steps)
    # b1_ref:     [1, Hp]   f32
    # w2_ref:     [Hp, Cp]  f32
    # b2_ref:     [1, Cp]   f32
    # logits_ref: [Bt, Cp]  f32   (first NUM_CLASSES lanes meaningful)
    # hist_ref:   [Bt, V]   f32   VMEM scratch: per-row vocab histogram
    bt, seq = ids_ref.shape
    vocab = ew1_ref.shape[0]
    assert seq % L_CHUNK == 0

    hist_ref[...] = jnp.zeros_like(hist_ref)

    # Hoisted once: per-chunk vocab iota (JAX does not CSE broadcast_in_dim).
    viota = lax.broadcasted_iota(jnp.int32, (1, L_CHUNK, vocab), 2)

    # Chunked one-hot histogram: only a [Bt, L_CHUNK, V] slab is ever live
    # instead of the full [Bt, L, V] one-hot; the L_CHUNK-deep reduce is a
    # cheap intra-vreg sublane reduce.
    for c in range(seq // L_CHUNK):
        ids_c = ids_ref[:, c * L_CHUNK:(c + 1) * L_CHUNK]            # [Bt, Lc] i32
        onehot = (ids_c[:, :, None] == viota).astype(onehot_dtype)   # [Bt, Lc, V]
        hist_ref[...] += jnp.sum(onehot, axis=1).astype(jnp.float32)

    hist = hist_ref[...]                                             # [Bt, V]

    # Drop the pad-token bin: the remaining mass equals the attention-mask
    # weighted histogram, and its row-sum is the real-token count.
    lane = lax.broadcasted_iota(jnp.int32, (bt, vocab), 1)
    hist = jnp.where(lane == PAD_TOKEN_ID, 0.0, hist)
    count = jnp.maximum(jnp.sum(hist, axis=1, keepdims=True), 1.0)   # [Bt, 1]
    inv_count = pl.reciprocal(count, approx=True)                    # EUP slot

    # h = relu(mean_pooled_emb @ w1 + b1) == relu((hist @ (E @ w1)) / count + b1)
    ph = jnp.dot(hist, ew1_ref[...], preferred_element_type=jnp.float32)  # [Bt, Hp]
    h = jnp.maximum(ph * inv_count + b1_ref[...], 0.0)

    # Dense(Hp -> Cp) logits; padded lanes stay exactly zero-biased.
    logits_ref[...] = (
        jnp.dot(h, w2_ref[...], preferred_element_type=jnp.float32) + b2_ref[...]
    )


def classifier_forward(input_ids, params):
    """Run the fused classifier kernel over the (device-count padded) batch."""
    ew1, b1, w2, b2 = params["ew1"], params["b1"], params["w2"], params["b2"]
    batch, seq = input_ids.shape

    b_tile = _choose_b_tile(batch)
    b_pad = _round_up(batch, b_tile)
    if b_pad != batch:
        input_ids = jnp.pad(input_ids, ((0, b_pad - batch), (0, 0)))

    kernel = functools.partial(classifier_kernel, onehot_dtype=_onehot_dtype())

    logits_p = pl.pallas_call(
        kernel,
        out_shape=jax.ShapeDtypeStruct((b_pad, CLASS_PAD), jnp.float32),
        grid_spec=pltpu.PrefetchScalarGridSpec(
            num_scalar_prefetch=0,
            grid=(b_pad // b_tile,),
            in_specs=[
                pl.BlockSpec((b_tile, seq), lambda i: (i, 0)),            # token ids
                pl.BlockSpec((VOCAB, HIDDEN_PAD), lambda i: (0, 0)),      # E @ w1 (resident)
                pl.BlockSpec((1, HIDDEN_PAD), lambda i: (0, 0)),          # b1
                pl.BlockSpec((HIDDEN_PAD, CLASS_PAD), lambda i: (0, 0)),  # w2
                pl.BlockSpec((1, CLASS_PAD), lambda i: (0, 0)),           # b2
            ],
            out_specs=pl.BlockSpec((b_tile, CLASS_PAD), lambda i: (i, 0)),
            scratch_shapes=[pltpu.VMEM((b_tile, VOCAB), jnp.float32)],
        ),
        compiler_params=pltpu.CompilerParams(
            # Batch axis is embarrassingly parallel: with >= 2 grid steps this
            # shards across v7x's 2 TensorCores; harmless on v5e / v6e.
            dimension_semantics=("parallel",),
        ),
    )(input_ids, ew1, b1, w2, b2)

    return logits_p[:batch, :NUM_CLASSES]


# ------------------------------ Pipeline glue ------------------------------
def make_params(key):
    k_emb, k_w1, k_b1, k_w2, k_b2 = jax.random.split(key, 5)
    emb = jax.random.normal(k_emb, (VOCAB, D_MODEL), jnp.float32) * 0.02
    w1_real = jax.random.normal(k_w1, (D_MODEL, HIDDEN), jnp.float32) * 0.1
    b1_real = jax.random.normal(k_b1, (1, HIDDEN), jnp.float32) * 0.01
    w2_real = jax.random.normal(k_w2, (HIDDEN, NUM_CLASSES), jnp.float32) * 0.1
    b2_real = jax.random.normal(k_b2, (1, NUM_CLASSES), jnp.float32) * 0.01
    # Zero-pad hidden and class dims to full 128-lane widths; padded rows/cols
    # are exactly zero, so the real logits are unchanged.
    w1 = jnp.zeros((D_MODEL, HIDDEN_PAD), jnp.float32).at[:, :HIDDEN].set(w1_real)
    b1 = jnp.zeros((1, HIDDEN_PAD), jnp.float32).at[:, :HIDDEN].set(b1_real)
    w2 = jnp.zeros((HIDDEN_PAD, CLASS_PAD), jnp.float32).at[:HIDDEN, :NUM_CLASSES].set(w2_real)
    b2 = jnp.zeros((1, CLASS_PAD), jnp.float32).at[:, :NUM_CLASSES].set(b2_real)
    # Fuse the embedding table with the first dense layer: EW1 = E @ w1
    # ([VOCAB, HIDDEN_PAD] = 128 KiB f32) -- algebraically identical since the
    # ReLU comes after, and it leaves the kernel with one lane-dense matmul.
    ew1 = jnp.dot(emb, w1, precision=lax.Precision.HIGHEST)
    return dict(emb=emb, w1=w1, b1=b1, w2=w2, b2=b2, ew1=ew1)


def pipeline_forward(input_ids, attention_mask, params):
    """Mirrors Pipeline.forward after tokenization: pad batch to a multiple of
    DEVICE_COUNT, run the model, slice logits back, argmax -> label ids."""
    batch_size = input_ids.shape[0]
    remainder = batch_size % DEVICE_COUNT
    if remainder != 0:
        padding_size = DEVICE_COUNT - remainder
        pad_ids = jnp.zeros((padding_size, input_ids.shape[1]), input_ids.dtype)
        pad_mask = jnp.zeros((padding_size, attention_mask.shape[1]), attention_mask.dtype)
        input_ids = jnp.concatenate([input_ids, pad_ids], axis=0)
        attention_mask = jnp.concatenate([attention_mask, pad_mask], axis=0)

    # The kernel derives the attention mask in-kernel from ids != PAD_TOKEN_ID
    # (identical to the synthetic tokenizer's mask), so only int32 ids stream.
    logits = classifier_forward(input_ids, params)

    logits = logits[:batch_size]
    pred_labels = jnp.argmax(logits, axis=1)   # 3-lane argmax: trivial, wrapper-side
    return logits, pred_labels


def reference_forward(input_ids, attention_mask, params):
    """Pure-JAX reference (gather -> masked mean -> two dense layers)."""
    emb, w1, b1, w2, b2 = params["emb"], params["w1"], params["b1"], params["w2"], params["b2"]
    x = emb[input_ids]                                          # [B, L, D]
    m = attention_mask.astype(jnp.float32)
    summed = jnp.einsum("bld,bl->bd", x, m, precision=lax.Precision.HIGHEST)
    count = jnp.maximum(jnp.sum(m, axis=1, keepdims=True), 1.0)
    pooled = summed / count
    h = jnp.maximum(jnp.dot(pooled, w1, precision=lax.Precision.HIGHEST) + b1, 0.0)
    logits = jnp.dot(h, w2, precision=lax.Precision.HIGHEST) + b2
    return logits[:, :NUM_CLASSES]


# TODO(synk): the HuggingFace tokenizer (string -> ids) has no Pallas/JAX
# equivalent; token ids are synthesized deterministically instead.
def fake_tokenize(num_texts, key):
    k_ids, k_len = jax.random.split(key)
    input_ids = jax.random.randint(k_ids, (num_texts, MAX_LENGTH), 1, VOCAB, jnp.int32)
    lengths = jax.random.randint(k_len, (num_texts,), 8, MAX_LENGTH + 1, jnp.int32)
    pos = jnp.arange(MAX_LENGTH)[None, :]
    attention_mask = (pos < lengths[:, None]).astype(jnp.int32)
    input_ids = input_ids * attention_mask  # pad token id 0 beyond length
    return input_ids, attention_mask


if __name__ == "__main__":
    key = jax.random.PRNGKey(0)
    k_params, k_tok = jax.random.split(key)

    params = make_params(k_params)

    # "texts" -> deterministic synthetic tokenization; batch of 2 strings
    num_texts = 2
    input_ids, attention_mask = fake_tokenize(num_texts, k_tok)

    logits, pred_labels = pipeline_forward(input_ids, attention_mask, params)
    logits = jax.block_until_ready(logits)
    pred_labels = jax.block_until_ready(pred_labels)

    # correctness check vs. a pure-JAX reference of the same model
    ref_logits = reference_forward(input_ids, attention_mask, params)
    assert logits.shape == (num_texts, NUM_CLASSES)
    assert bool(jnp.allclose(logits, ref_logits, atol=1e-3, rtol=1e-3))

    predictions = [LABEL_MAP[int(l)] for l in pred_labels]
    assert len(predictions) == num_texts
    assert all(p in LABEL_MAP.values() for p in predictions)
    print("KERNEL_OK")
</pallas_src>

<mosaic_0001>
module attributes {stable_mosaic.version = 11 : i64} {
  func.func @classifier_kernel(%arg0: i32, %arg1: memref<8x128xi32, #tpu.memory_space<vmem>>, %arg2: memref<256x128xf32, #tpu.memory_space<vmem>>, %arg3: memref<1x128xf32, #tpu.memory_space<vmem>>, %arg4: memref<128x128xf32, #tpu.memory_space<vmem>>, %arg5: memref<1x128xf32, #tpu.memory_space<vmem>>, %arg6: memref<8x128xf32, #tpu.memory_space<vmem>>, %arg7: memref<8x256xf32, #tpu.memory_space<vmem>>) attributes {dimension_semantics = [#tpu.dimension_semantics<parallel>], iteration_bounds = array<i64: 1>, scalar_prefetch = 0 : i64, scratch_operands = 1 : i64, tpu.core_type = #tpu.core_type<tc>, window_params = [{transform_indices = @transform_0, window_bounds = array<i64: 8, 128>}, {pipeline_mode = #tpu.pipeline_mode<synchronous>, transform_indices = @transform_1, window_bounds = array<i64: 256, 128>}, {pipeline_mode = #tpu.pipeline_mode<synchronous>, transform_indices = @transform_2, window_bounds = array<i64: 1, 128>}, {pipeline_mode = #tpu.pipeline_mode<synchronous>, transform_indices = @transform_3, window_bounds = array<i64: 128, 128>}, {pipeline_mode = #tpu.pipeline_mode<synchronous>, transform_indices = @transform_4, window_bounds = array<i64: 1, 128>}, {transform_indices = @transform_5, window_bounds = array<i64: 8, 128>}]} {
    %cst = arith.constant 0.000000e+00 : f32
    %0 = vector.broadcast %cst : f32 to vector<8x256xf32>
    %c0 = arith.constant 0 : index
    %c0_0 = arith.constant 0 : index
    %1 = vector.load %arg7[%c0, %c0_0] : memref<8x256xf32, #tpu.memory_space<vmem>>, vector<8x256xf32>
    tpu.vector_store %arg7[%c0, %c0_0], %0 {strides = array<i32>} : memref<8x256xf32, #tpu.memory_space<vmem>>, vector<8x256xf32>,
    %2 = tpu.iota {dimensions = array<i32: 2>} : vector<1x8x256xi32>
    %c0_1 = arith.constant 0 : index
    %c0_2 = arith.constant 0 : index
    %3 = vector.load %arg1[%c0_1, %c0_2] : memref<8x128xi32, #tpu.memory_space<vmem>>, vector<8x8xi32>
    %4 = vector.shape_cast %3 : vector<8x8xi32> to vector<8x8x1xi32>
    %5 = vector.broadcast %4 : vector<8x8x1xi32> to vector<8x8x256xi32>
    %6 = vector.broadcast %2 : vector<1x8x256xi32> to vector<8x8x256xi32>
    %7 = arith.cmpi eq, %5, %6 : vector<8x8x256xi32>
    %8 = arith.extui %7 : vector<8x8x256xi1> to vector<8x8x256xi32>
    %9 = arith.sitofp %8 : vector<8x8x256xi32> to vector<8x8x256xf32>
    %10 = arith.truncf %9 : vector<8x8x256xf32> to vector<8x8x256xbf16>
    %c0_3 = arith.constant 0 : index
    %c0_4 = arith.constant 0 : index
    %11 = vector.load %arg7[%c0_3, %c0_4] : memref<8x256xf32, #tpu.memory_space<vmem>>, vector<8x256xf32>
    %12 = arith.extf %10 : vector<8x8x256xbf16> to vector<8x8x256xf32>
    %cst_5 = arith.constant dense<0.000000e+00> : vector<8x256xf32>
    %13 = vector.multi_reduction <add>, %12, %cst_5 [1] : vector<8x8x256xf32> to vector<8x256xf32>
    %14 = arith.truncf %13 : vector<8x256xf32> to vector<8x256xbf16>
    %15 = arith.extf %14 : vector<8x256xbf16> to vector<8x256xf32>
    %16 = arith.addf %11, %15 : vector<8x256xf32>
    %c0_6 = arith.constant 0 : index
    %c0_7 = arith.constant 0 : index
    %17 = vector.load %arg7[%c0_6, %c0_7] : memref<8x256xf32, #tpu.memory_space<vmem>>, vector<8x256xf32>
    tpu.vector_store %arg7[%c0_6, %c0_7], %16 {strides = array<i32>} : memref<8x256xf32, #tpu.memory_space<vmem>>, vector<8x256xf32>,
    %c0_8 = arith.constant 0 : index
    %c8 = arith.constant 8 : index
    %18 = vector.load %arg1[%c0_8, %c8] : memref<8x128xi32, #tpu.memory_space<vmem>>, vector<8x8xi32>
    %19 = vector.shape_cast %18 : vector<8x8xi32> to vector<8x8x1xi32>
    %20 = vector.broadcast %19 : vector<8x8x1xi32> to vector<8x8x256xi32>
    %21 = vector.broadcast %2 : vector<1x8x256xi32> to vector<8x8x256xi32>
    %22 = arith.cmpi eq, %20, %21 : vector<8x8x256xi32>
    %23 = arith.extui %22 : vector<8x8x256xi1> to vector<8x8x256xi32>
    %24 = arith.sitofp %23 : vector<8x8x256xi32> to vector<8x8x256xf32>
    %25 = arith.truncf %24 : vector<8x8x256xf32> to vector<8x8x256xbf16>
    %c0_9 = arith.constant 0 : index
    %c0_10 = arith.constant 0 : index
    %26 = vector.load %arg7[%c0_9, %c0_10] : memref<8x256xf32, #tpu.memory_space<vmem>>, vector<8x256xf32>
    %27 = arith.extf %25 : vector<8x8x256xbf16> to vector<8x8x256xf32>
    %cst_11 = arith.constant dense<0.000000e+00> : vector<8x256xf32>
    %28 = vector.multi_reduction <add>, %27, %cst_11 [1] : vector<8x8x256xf32> to vector<8x256xf32>
    %29 = arith.truncf %28 : vector<8x256xf32> to vector<8x256xbf16>
    %30 = arith.extf %29 : vector<8x256xbf16> to vector<8x256xf32>
    %31 = arith.addf %26, %30 : vector<8x256xf32>
    %c0_12 = arith.constant 0 : index
    %c0_13 = arith.constant 0 : index
    %32 = vector.load %arg7[%c0_12, %c0_13] : memref<8x256xf32, #tpu.memory_space<vmem>>, vector<8x256xf32>
    tpu.vector_store %arg7[%c0_12, %c0_13], %31 {strides = array<i32>} : memref<8x256xf32, #tpu.memory_space<vmem>>, vector<8x256xf32>,
    %c0_14 = arith.constant 0 : index
    %c16 = arith.constant 16 : index
    %33 = vector.load %arg1[%c0_14, %c16] : memref<8x128xi32, #tpu.memory_space<vmem>>, vector<8x8xi32>
    %34 = vector.shape_cast %33 : vector<8x8xi32> to vector<8x8x1xi32>
    %35 = vector.broadcast %34 : vector<8x8x1xi32> to vector<8x8x256xi32>
    %36 = vector.broadcast %2 : vector<1x8x256xi32> to vector<8x8x256xi32>
    %37 = arith.cmpi eq, %35, %36 : vector<8x8x256xi32>
    %38 = arith.extui %37 : vector<8x8x256xi1> to vector<8x8x256xi32>
    %39 = arith.sitofp %38 : vector<8x8x256xi32> to vector<8x8x256xf32>
    %40 = arith.truncf %39 : vector<8x8x256xf32> to vector<8x8x256xbf16>
    %c0_15 = arith.constant 0 : index
    %c0_16 = arith.constant 0 : index
    %41 = vector.load %arg7[%c0_15, %c0_16] : memref<8x256xf32, #tpu.memory_space<vmem>>, vector<8x256xf32>
    %42 = arith.extf %40 : vector<8x8x256xbf16> to vector<8x8x256xf32>
    %cst_17 = arith.constant dense<0.000000e+00> : vector<8x256xf32>
    %43 = vector.multi_reduction <add>, %42, %cst_17 [1] : vector<8x8x256xf32> to vector<8x256xf32>
    %44 = arith.truncf %43 : vector<8x256xf32> to vector<8x256xbf16>
    %45 = arith.extf %44 : vector<8x256xbf16> to vector<8x256xf32>
    %46 = arith.addf %41, %45 : vector<8x256xf32>
    %c0_18 = arith.constant 0 : index
    %c0_19 = arith.constant 0 : index
    %47 = vector.load %arg7[%c0_18, %c0_19] : memref<8x256xf32, #tpu.memory_space<vmem>>, vector<8x256xf32>
    tpu.vector_store %arg7[%c0_18, %c0_19], %46 {strides = array<i32>} : memref<8x256xf32, #tpu.memory_space<vmem>>, vector<8x256xf32>,
    %c0_20 = arith.constant 0 : index
    %c24 = arith.constant 24 : index
    %48 = vector.load %arg1[%c0_20, %c24] : memref<8x128xi32, #tpu.memory_space<vmem>>, vector<8x8xi32>
    %49 = vector.shape_cast %48 : vector<8x8xi32> to vector<8x8x1xi32>
    %50 = vector.broadcast %49 : vector<8x8x1xi32> to vector<8x8x256xi32>
    %51 = vector.broadcast %2 : vector<1x8x256xi32> to vector<8x8x256xi32>
    %52 = arith.cmpi eq, %50, %51 : vector<8x8x256xi32>
    %53 = arith.extui %52 : vector<8x8x256xi1> to vector<8x8x256xi32>
    %54 = arith.sitofp %53 : vector<8x8x256xi32> to vector<8x8x256xf32>
    %55 = arith.truncf %54 : vector<8x8x256xf32> to vector<8x8x256xbf16>
    %c0_21 = arith.constant 0 : index
    %c0_22 = arith.constant 0 : index
    %56 = vector.load %arg7[%c0_21, %c0_22] : memref<8x256xf32, #tpu.memory_space<vmem>>, vector<8x256xf32>
    %57 = arith.extf %55 : vector<8x8x256xbf16> to vector<8x8x256xf32>
    %cst_23 = arith.constant dense<0.000000e+00> : vector<8x256xf32>
    %58 = vector.multi_reduction <add>, %57, %cst_23 [1] : vector<8x8x256xf32> to vector<8x256xf32>
    %59 = arith.truncf %58 : vector<8x256xf32> to vector<8x256xbf16>
    %60 = arith.extf %59 : vector<8x256xbf16> to vector<8x256xf32>
    %61 = arith.addf %56, %60 : vector<8x256xf32>
    %c0_24 = arith.constant 0 : index
    %c0_25 = arith.constant 0 : index
    %62 = vector.load %arg7[%c0_24, %c0_25] : memref<8x256xf32, #tpu.memory_space<vmem>>, vector<8x256xf32>
    tpu.vector_store %arg7[%c0_24, %c0_25], %61 {strides = array<i32>} : memref<8x256xf32, #tpu.memory_space<vmem>>, vector<8x256xf32>,
    %c0_26 = arith.constant 0 : index
    %c32 = arith.constant 32 : index
    %63 = vector.load %arg1[%c0_26, %c32] : memref<8x128xi32, #tpu.memory_space<vmem>>, vector<8x8xi32>
    %64 = vector.shape_cast %63 : vector<8x8xi32> to vector<8x8x1xi32>
    %65 = vector.broadcast %64 : vector<8x8x1xi32> to vector<8x8x256xi32>
    %66 = vector.broadcast %2 : vector<1x8x256xi32> to vector<8x8x256xi32>
    %67 = arith.cmpi eq, %65, %66 : vector<8x8x256xi32>
    %68 = arith.extui %67 : vector<8x8x256xi1> to vector<8x8x256xi32>
    %69 = arith.sitofp %68 : vector<8x8x256xi32> to vector<8x8x256xf32>
    %70 = arith.truncf %69 : vector<8x8x256xf32> to vector<8x8x256xbf16>
    %c0_27 = arith.constant 0 : index
    %c0_28 = arith.constant 0 : index
    %71 = vector.load %arg7[%c0_27, %c0_28] : memref<8x256xf32, #tpu.memory_space<vmem>>, vector<8x256xf32>
    %72 = arith.extf %70 : vector<8x8x256xbf16> to vector<8x8x256xf32>
    %cst_29 = arith.constant dense<0.000000e+00> : vector<8x256xf32>
    %73 = vector.multi_reduction <add>, %72, %cst_29 [1] : vector<8x8x256xf32> to vector<8x256xf32>
    %74 = arith.truncf %73 : vector<8x256xf32> to vector<8x256xbf16>
    %75 = arith.extf %74 : vector<8x256xbf16> to vector<8x256xf32>
    %76 = arith.addf %71, %75 : vector<8x256xf32>
    %c0_30 = arith.constant 0 : index
    %c0_31 = arith.constant 0 : index
    %77 = vector.load %arg7[%c0_30, %c0_31] : memref<8x256xf32, #tpu.memory_space<vmem>>, vector<8x256xf32>
    tpu.vector_store %arg7[%c0_30, %c0_31], %76 {strides = array<i32>} : memref<8x256xf32, #tpu.memory_space<vmem>>, vector<8x256xf32>,
    %c0_32 = arith.constant 0 : index
    %c40 = arith.constant 40 : index
    %78 = vector.load %arg1[%c0_32, %c40] : memref<8x128xi32, #tpu.memory_space<vmem>>, vector<8x8xi32>
    %79 = vector.shape_cast %78 : vector<8x8xi32> to vector<8x8x1xi32>
    %80 = vector.broadcast %79 : vector<8x8x1xi32> to vector<8x8x256xi32>
    %81 = vector.broadcast %2 : vector<1x8x256xi32> to vector<8x8x256xi32>
    %82 = arith.cmpi eq, %80, %81 : vector<8x8x256xi32>
    %83 = arith.extui %82 : vector<8x8x256xi1> to vector<8x8x256xi32>
    %84 = arith.sitofp %83 : vector<8x8x256xi32> to vector<8x8x256xf32>
    %85 = arith.truncf %84 : vector<8x8x256xf32> to vector<8x8x256xbf16>
    %c0_33 = arith.constant 0 : index
    %c0_34 = arith.constant 0 : index
    %86 = vector.load %arg7[%c0_33, %c0_34] : memref<8x256xf32, #tpu.memory_space<vmem>>, vector<8x256xf32>
    %87 = arith.extf %85 : vector<8x8x256xbf16> to vector<8x8x256xf32>
    %cst_35 = arith.constant dense<0.000000e+00> : vector<8x256xf32>
    %88 = vector.multi_reduction <add>, %87, %cst_35 [1] : vector<8x8x256xf32> to vector<8x256xf32>
    %89 = arith.truncf %88 : vector<8x256xf32> to vector<8x256xbf16>
    %90 = arith.extf %89 : vector<8x256xbf16> to vector<8x256xf32>
    %91 = arith.addf %86, %90 : vector<8x256xf32>
    %c0_36 = arith.constant 0 : index
    %c0_37 = arith.constant 0 : index
    %92 = vector.load %arg7[%c0_36, %c0_37] : memref<8x256xf32, #tpu.memory_space<vmem>>, vector<8x256xf32>
    tpu.vector_store %arg7[%c0_36, %c0_37], %91 {strides = array<i32>} : memref<8x256xf32, #tpu.memory_space<vmem>>, vector<8x256xf32>,
    %c0_38 = arith.constant 0 : index
    %c48 = arith.constant 48 : index
    %93 = vector.load %arg1[%c0_38, %c48] : memref<8x128xi32, #tpu.memory_space<vmem>>, vector<8x8xi32>
    %94 = vector.shape_cast %93 : vector<8x8xi32> to vector<8x8x1xi32>
    %95 = vector.broadcast %94 : vector<8x8x1xi32> to vector<8x8x256xi32>
    %96 = vector.broadcast %2 : vector<1x8x256xi32> to vector<8x8x256xi32>
    %97 = arith.cmpi eq, %95, %96 : vector<8x8x256xi32>
    %98 = arith.extui %97 : vector<8x8x256xi1> to vector<8x8x256xi32>
    %99 = arith.sitofp %98 : vector<8x8x256xi32> to vector<8x8x256xf32>
    %100 = arith.truncf %99 : vector<8x8x256xf32> to vector<8x8x256xbf16>
    %c0_39 = arith.constant 0 : index
    %c0_40 = arith.constant 0 : index
    %101 = vector.load %arg7[%c0_39, %c0_40] : memref<8x256xf32, #tpu.memory_space<vmem>>, vector<8x256xf32>
    %102 = arith.extf %100 : vector<8x8x256xbf16> to vector<8x8x256xf32>
    %cst_41 = arith.constant dense<0.000000e+00> : vector<8x256xf32>
    %103 = vector.multi_reduction <add>, %102, %cst_41 [1] : vector<8x8x256xf32> to vector<8x256xf32>
    %104 = arith.truncf %103 : vector<8x256xf32> to vector<8x256xbf16>
    %105 = arith.extf %104 : vector<8x256xbf16> to vector<8x256xf32>
    %106 = arith.addf %101, %105 : vector<8x256xf32>
    %c0_42 = arith.constant 0 : index
    %c0_43 = arith.constant 0 : index
    %107 = vector.load %arg7[%c0_42, %c0_43] : memref<8x256xf32, #tpu.memory_space<vmem>>, vector<8x256xf32>
    tpu.vector_store %arg7[%c0_42, %c0_43], %106 {strides = array<i32>} : memref<8x256xf32, #tpu.memory_space<vmem>>, vector<8x256xf32>,
    %c0_44 = arith.constant 0 : index
    %c56 = arith.constant 56 : index
    %108 = vector.load %arg1[%c0_44, %c56] : memref<8x128xi32, #tpu.memory_space<vmem>>, vector<8x8xi32>
    %109 = vector.shape_cast %108 : vector<8x8xi32> to vector<8x8x1xi32>
    %110 = vector.broadcast %109 : vector<8x8x1xi32> to vector<8x8x256xi32>
    %111 = vector.broadcast %2 : vector<1x8x256xi32> to vector<8x8x256xi32>
    %112 = arith.cmpi eq, %110, %111 : vector<8x8x256xi32>
    %113 = arith.extui %112 : vector<8x8x256xi1> to vector<8x8x256xi32>
    %114 = arith.sitofp %113 : vector<8x8x256xi32> to vector<8x8x256xf32>
    %115 = arith.truncf %114 : vector<8x8x256xf32> to vector<8x8x256xbf16>
    %c0_45 = arith.constant 0 : index
    %c0_46 = arith.constant 0 : index
    %116 = vector.load %arg7[%c0_45, %c0_46] : memref<8x256xf32, #tpu.memory_space<vmem>>, vector<8x256xf32>
    %117 = arith.extf %115 : vector<8x8x256xbf16> to vector<8x8x256xf32>
    %cst_47 = arith.constant dense<0.000000e+00> : vector<8x256xf32>
    %118 = vector.multi_reduction <add>, %117, %cst_47 [1] : vector<8x8x256xf32> to vector<8x256xf32>
    %119 = arith.truncf %118 : vector<8x256xf32> to vector<8x256xbf16>
    %120 = arith.extf %119 : vector<8x256xbf16> to vector<8x256xf32>
    %121 = arith.addf %116, %120 : vector<8x256xf32>
    %c0_48 = arith.constant 0 : index
    %c0_49 = arith.constant 0 : index
    %122 = vector.load %arg7[%c0_48, %c0_49] : memref<8x256xf32, #tpu.memory_space<vmem>>, vector<8x256xf32>
    tpu.vector_store %arg7[%c0_48, %c0_49], %121 {strides = array<i32>} : memref<8x256xf32, #tpu.memory_space<vmem>>, vector<8x256xf32>,
    %c0_50 = arith.constant 0 : index
    %c64 = arith.constant 64 : index
    %123 = vector.load %arg1[%c0_50, %c64] : memref<8x128xi32, #tpu.memory_space<vmem>>, vector<8x8xi32>
    %124 = vector.shape_cast %123 : vector<8x8xi32> to vector<8x8x1xi32>
    %125 = vector.broadcast %124 : vector<8x8x1xi32> to vector<8x8x256xi32>
    %126 = vector.broadcast %2 : vector<1x8x256xi32> to vector<8x8x256xi32>
    %127 = arith.cmpi eq, %125, %126 : vector<8x8x256xi32>
    %128 = arith.extui %127 : vector<8x8x256xi1> to vector<8x8x256xi32>
    %129 = arith.sitofp %128 : vector<8x8x256xi32> to vector<8x8x256xf32>
    %130 = arith.truncf %129 : vector<8x8x256xf32> to vector<8x8x256xbf16>
    %c0_51 = arith.constant 0 : index
    %c0_52 = arith.constant 0 : index
    %131 = vector.load %arg7[%c0_51, %c0_52] : memref<8x256xf32, #tpu.memory_space<vmem>>, vector<8x256xf32>
    %132 = arith.extf %130 : vector<8x8x256xbf16> to vector<8x8x256xf32>
    %cst_53 = arith.constant dense<0.000000e+00> : vector<8x256xf32>
    %133 = vector.multi_reduction <add>, %132, %cst_53 [1] : vector<8x8x256xf32> to vector<8x256xf32>
    %134 = arith.truncf %133 : vector<8x256xf32> to vector<8x256xbf16>
    %135 = arith.extf %134 : vector<8x256xbf16> to vector<8x256xf32>
    %136 = arith.addf %131, %135 : vector<8x256xf32>
    %c0_54 = arith.constant 0 : index
    %c0_55 = arith.constant 0 : index
    %137 = vector.load %arg7[%c0_54, %c0_55] : memref<8x256xf32, #tpu.memory_space<vmem>>, vector<8x256xf32>
    tpu.vector_store %arg7[%c0_54, %c0_55], %136 {strides = array<i32>} : memref<8x256xf32, #tpu.memory_space<vmem>>, vector<8x256xf32>,
    %c0_56 = arith.constant 0 : index
    %c72 = arith.constant 72 : index
    %138 = vector.load %arg1[%c0_56, %c72] : memref<8x128xi32, #tpu.memory_space<vmem>>, vector<8x8xi32>
    %139 = vector.shape_cast %138 : vector<8x8xi32> to vector<8x8x1xi32>
    %140 = vector.broadcast %139 : vector<8x8x1xi32> to vector<8x8x256xi32>
    %141 = vector.broadcast %2 : vector<1x8x256xi32> to vector<8x8x256xi32>
    %142 = arith.cmpi eq, %140, %141 : vector<8x8x256xi32>
    %143 = arith.extui %142 : vector<8x8x256xi1> to vector<8x8x256xi32>
    %144 = arith.sitofp %143 : vector<8x8x256xi32> to vector<8x8x256xf32>
    %145 = arith.truncf %144 : vector<8x8x256xf32> to vector<8x8x256xbf16>
    %c0_57 = arith.constant 0 : index
    %c0_58 = arith.constant 0 : index
    %146 = vector.load %arg7[%c0_57, %c0_58] : memref<8x256xf32, #tpu.memory_space<vmem>>, vector<8x256xf32>
    %147 = arith.extf %145 : vector<8x8x256xbf16> to vector<8x8x256xf32>
    %cst_59 = arith.constant dense<0.000000e+00> : vector<8x256xf32>
    %148 = vector.multi_reduction <add>, %147, %cst_59 [1] : vector<8x8x256xf32> to vector<8x256xf32>
    %149 = arith.truncf %148 : vector<8x256xf32> to vector<8x256xbf16>
    %150 = arith.extf %149 : vector<8x256xbf16> to vector<8x256xf32>
    %151 = arith.addf %146, %150 : vector<8x256xf32>
    %c0_60 = arith.constant 0 : index
    %c0_61 = arith.constant 0 : index
    %152 = vector.load %arg7[%c0_60, %c0_61] : memref<8x256xf32, #tpu.memory_space<vmem>>, vector<8x256xf32>
    tpu.vector_store %arg7[%c0_60, %c0_61], %151 {strides = array<i32>} : memref<8x256xf32, #tpu.memory_space<vmem>>, vector<8x256xf32>,
    %c0_62 = arith.constant 0 : index
    %c80 = arith.constant 80 : index
    %153 = vector.load %arg1[%c0_62, %c80] : memref<8x128xi32, #tpu.memory_space<vmem>>, vector<8x8xi32>
    %154 = vector.shape_cast %153 : vector<8x8xi32> to vector<8x8x1xi32>
    %155 = vector.broadcast %154 : vector<8x8x1xi32> to vector<8x8x256xi32>
    %156 = vector.broadcast %2 : vector<1x8x256xi32> to vector<8x8x256xi32>
    %157 = arith.cmpi eq, %155, %156 : vector<8x8x256xi32>
    %158 = arith.extui %157 : vector<8x8x256xi1> to vector<8x8x256xi32>
    %159 = arith.sitofp %158 : vector<8x8x256xi32> to vector<8x8x256xf32>
    %160 = arith.truncf %159 : vector<8x8x256xf32> to vector<8x8x256xbf16>
    %c0_63 = arith.constant 0 : index
    %c0_64 = arith.constant 0 : index
    %161 = vector.load %arg7[%c0_63, %c0_64] : memref<8x256xf32, #tpu.memory_space<vmem>>, vector<8x256xf32>
    %162 = arith.extf %160 : vector<8x8x256xbf16> to vector<8x8x256xf32>
    %cst_65 = arith.constant dense<0.000000e+00> : vector<8x256xf32>
    %163 = vector.multi_reduction <add>, %162, %cst_65 [1] : vector<8x8x256xf32> to vector<8x256xf32>
    %164 = arith.truncf %163 : vector<8x256xf32> to vector<8x256xbf16>
    %165 = arith.extf %164 : vector<8x256xbf16> to vector<8x256xf32>
    %166 = arith.addf %161, %165 : vector<8x256xf32>
    %c0_66 = arith.constant 0 : index
    %c0_67 = arith.constant 0 : index
    %167 = vector.load %arg7[%c0_66, %c0_67] : memref<8x256xf32, #tpu.memory_space<vmem>>, vector<8x256xf32>
    tpu.vector_store %arg7[%c0_66, %c0_67], %166 {strides = array<i32>} : memref<8x256xf32, #tpu.memory_space<vmem>>, vector<8x256xf32>,
    %c0_68 = arith.constant 0 : index
    %c88 = arith.constant 88 : index
    %168 = vector.load %arg1[%c0_68, %c88] : memref<8x128xi32, #tpu.memory_space<vmem>>, vector<8x8xi32>
    %169 = vector.shape_cast %168 : vector<8x8xi32> to vector<8x8x1xi32>
    %170 = vector.broadcast %169 : vector<8x8x1xi32> to vector<8x8x256xi32>
    %171 = vector.broadcast %2 : vector<1x8x256xi32> to vector<8x8x256xi32>
    %172 = arith.cmpi eq, %170, %171 : vector<8x8x256xi32>
    %173 = arith.extui %172 : vector<8x8x256xi1> to vector<8x8x256xi32>
    %174 = arith.sitofp %173 : vector<8x8x256xi32> to vector<8x8x256xf32>
    %175 = arith.truncf %174 : vector<8x8x256xf32> to vector<8x8x256xbf16>
    %c0_69 = arith.constant 0 : index
    %c0_70 = arith.constant 0 : index
    %176 = vector.load %arg7[%c0_69, %c0_70] : memref<8x256xf32, #tpu.memory_space<vmem>>, vector<8x256xf32>
    %177 = arith.extf %175 : vector<8x8x256xbf16> to vector<8x8x256xf32>
    %cst_71 = arith.constant dense<0.000000e+00> : vector<8x256xf32>
    %178 = vector.multi_reduction <add>, %177, %cst_71 [1] : vector<8x8x256xf32> to vector<8x256xf32>
    %179 = arith.truncf %178 : vector<8x256xf32> to vector<8x256xbf16>
    %180 = arith.extf %179 : vector<8x256xbf16> to vector<8x256xf32>
    %181 = arith.addf %176, %180 : vector<8x256xf32>
    %c0_72 = arith.constant 0 : index
    %c0_73 = arith.constant 0 : index
    %182 = vector.load %arg7[%c0_72, %c0_73] : memref<8x256xf32, #tpu.memory_space<vmem>>, vector<8x256xf32>
    tpu.vector_store %arg7[%c0_72, %c0_73], %181 {strides = array<i32>} : memref<8x256xf32, #tpu.memory_space<vmem>>, vector<8x256xf32>,
    %c0_74 = arith.constant 0 : index
    %c96 = arith.constant 96 : index
    %183 = vector.load %arg1[%c0_74, %c96] : memref<8x128xi32, #tpu.memory_space<vmem>>, vector<8x8xi32>
    %184 = vector.shape_cast %183 : vector<8x8xi32> to vector<8x8x1xi32>
    %185 = vector.broadcast %184 : vector<8x8x1xi32> to vector<8x8x256xi32>
    %186 = vector.broadcast %2 : vector<1x8x256xi32> to vector<8x8x256xi32>
    %187 = arith.cmpi eq, %185, %186 : vector<8x8x256xi32>
    %188 = arith.extui %187 : vector<8x8x256xi1> to vector<8x8x256xi32>
    %189 = arith.sitofp %188 : vector<8x8x256xi32> to vector<8x8x256xf32>
    %190 = arith.truncf %189 : vector<8x8x256xf32> to vector<8x8x256xbf16>
    %c0_75 = arith.constant 0 : index
    %c0_76 = arith.constant 0 : index
    %191 = vector.load %arg7[%c0_75, %c0_76] : memref<8x256xf32, #tpu.memory_space<vmem>>, vector<8x256xf32>
    %192 = arith.extf %190 : vector<8x8x256xbf16> to vector<8x8x256xf32>
    %cst_77 = arith.constant dense<0.000000e+00> : vector<8x256xf32>
    %193 = vector.multi_reduction <add>, %192, %cst_77 [1] : vector<8x8x256xf32> to vector<8x256xf32>
    %194 = arith.truncf %193 : vector<8x256xf32> to vector<8x256xbf16>
    %195 = arith.extf %194 : vector<8x256xbf16> to vector<8x256xf32>
    %196 = arith.addf %191, %195 : vector<8x256xf32>
    %c0_78 = arith.constant 0 : index
    %c0_79 = arith.constant 0 : index
    %197 = vector.load %arg7[%c0_78, %c0_79] : memref<8x256xf32, #tpu.memory_space<vmem>>, vector<8x256xf32>
    tpu.vector_store %arg7[%c0_78, %c0_79], %196 {strides = array<i32>} : memref<8x256xf32, #tpu.memory_space<vmem>>, vector<8x256xf32>,
    %c0_80 = arith.constant 0 : index
    %c104 = arith.constant 104 : index
    %198 = vector.load %arg1[%c0_80, %c104] : memref<8x128xi32, #tpu.memory_space<vmem>>, vector<8x8xi32>
    %199 = vector.shape_cast %198 : vector<8x8xi32> to vector<8x8x1xi32>
    %200 = vector.broadcast %199 : vector<8x8x1xi32> to vector<8x8x256xi32>
    %201 = vector.broadcast %2 : vector<1x8x256xi32> to vector<8x8x256xi32>
    %202 = arith.cmpi eq, %200, %201 : vector<8x8x256xi32>
    %203 = arith.extui %202 : vector<8x8x256xi1> to vector<8x8x256xi32>
    %204 = arith.sitofp %203 : vector<8x8x256xi32> to vector<8x8x256xf32>
    %205 = arith.truncf %204 : vector<8x8x256xf32> to vector<8x8x256xbf16>
    %c0_81 = arith.constant 0 : index
    %c0_82 = arith.constant 0 : index
    %206 = vector.load %arg7[%c0_81, %c0_82] : memref<8x256xf32, #tpu.memory_space<vmem>>, vector<8x256xf32>
    %207 = arith.extf %205 : vector<8x8x256xbf16> to vector<8x8x256xf32>
    %cst_83 = arith.constant dense<0.000000e+00> : vector<8x256xf32>
    %208 = vector.multi_reduction <add>, %207, %cst_83 [1] : vector<8x8x256xf32> to vector<8x256xf32>
    %209 = arith.truncf %208 : vector<8x256xf32> to vector<8x256xbf16>
    %210 = arith.extf %209 : vector<8x256xbf16> to vector<8x256xf32>
    %211 = arith.addf %206, %210 : vector<8x256xf32>
    %c0_84 = arith.constant 0 : index
    %c0_85 = arith.constant 0 : index
    %212 = vector.load %arg7[%c0_84, %c0_85] : memref<8x256xf32, #tpu.memory_space<vmem>>, vector<8x256xf32>
    tpu.vector_store %arg7[%c0_84, %c0_85], %211 {strides = array<i32>} : memref<8x256xf32, #tpu.memory_space<vmem>>, vector<8x256xf32>,
    %c0_86 = arith.constant 0 : index
    %c112 = arith.constant 112 : index
    %213 = vector.load %arg1[%c0_86, %c112] : memref<8x128xi32, #tpu.memory_space<vmem>>, vector<8x8xi32>
    %214 = vector.shape_cast %213 : vector<8x8xi32> to vector<8x8x1xi32>
    %215 = vector.broadcast %214 : vector<8x8x1xi32> to vector<8x8x256xi32>
    %216 = vector.broadcast %2 : vector<1x8x256xi32> to vector<8x8x256xi32>
    %217 = arith.cmpi eq, %215, %216 : vector<8x8x256xi32>
    %218 = arith.extui %217 : vector<8x8x256xi1> to vector<8x8x256xi32>
    %219 = arith.sitofp %218 : vector<8x8x256xi32> to vector<8x8x256xf32>
    %220 = arith.truncf %219 : vector<8x8x256xf32> to vector<8x8x256xbf16>
    %c0_87 = arith.constant 0 : index
    %c0_88 = arith.constant 0 : index
    %221 = vector.load %arg7[%c0_87, %c0_88] : memref<8x256xf32, #tpu.memory_space<vmem>>, vector<8x256xf32>
    %222 = arith.extf %220 : vector<8x8x256xbf16> to vector<8x8x256xf32>
    %cst_89 = arith.constant dense<0.000000e+00> : vector<8x256xf32>
    %223 = vector.multi_reduction <add>, %222, %cst_89 [1] : vector<8x8x256xf32> to vector<8x256xf32>
    %224 = arith.truncf %223 : vector<8x256xf32> to vector<8x256xbf16>
    %225 = arith.extf %224 : vector<8x256xbf16> to vector<8x256xf32>
    %226 = arith.addf %221, %225 : vector<8x256xf32>
    %c0_90 = arith.constant 0 : index
    %c0_91 = arith.constant 0 : index
    %227 = vector.load %arg7[%c0_90, %c0_91] : memref<8x256xf32, #tpu.memory_space<vmem>>, vector<8x256xf32>
    tpu.vector_store %arg7[%c0_90, %c0_91], %226 {strides = array<i32>} : memref<8x256xf32, #tpu.memory_space<vmem>>, vector<8x256xf32>,
    %c0_92 = arith.constant 0 : index
    %c120 = arith.constant 120 : index
    %228 = vector.load %arg1[%c0_92, %c120] : memref<8x128xi32, #tpu.memory_space<vmem>>, vector<8x8xi32>
    %229 = vector.shape_cast %228 : vector<8x8xi32> to vector<8x8x1xi32>
    %230 = vector.broadcast %229 : vector<8x8x1xi32> to vector<8x8x256xi32>
    %231 = vector.broadcast %2 : vector<1x8x256xi32> to vector<8x8x256xi32>
    %232 = arith.cmpi eq, %230, %231 : vector<8x8x256xi32>
    %233 = arith.extui %232 : vector<8x8x256xi1> to vector<8x8x256xi32>
    %234 = arith.sitofp %233 : vector<8x8x256xi32> to vector<8x8x256xf32>
    %235 = arith.truncf %234 : vector<8x8x256xf32> to vector<8x8x256xbf16>
    %c0_93 = arith.constant 0 : index
    %c0_94 = arith.constant 0 : index
    %236 = vector.load %arg7[%c0_93, %c0_94] : memref<8x256xf32, #tpu.memory_space<vmem>>, vector<8x256xf32>
    %237 = arith.extf %235 : vector<8x8x256xbf16> to vector<8x8x256xf32>
    %cst_95 = arith.constant dense<0.000000e+00> : vector<8x256xf32>
    %238 = vector.multi_reduction <add>, %237, %cst_95 [1] : vector<8x8x256xf32> to vector<8x256xf32>
    %239 = arith.truncf %238 : vector<8x256xf32> to vector<8x256xbf16>
    %240 = arith.extf %239 : vector<8x256xbf16> to vector<8x256xf32>
    %241 = arith.addf %236, %240 : vector<8x256xf32>
    %c0_96 = arith.constant 0 : index
    %c0_97 = arith.constant 0 : index
    %242 = vector.load %arg7[%c0_96, %c0_97] : memref<8x256xf32, #tpu.memory_space<vmem>>, vector<8x256xf32>
    tpu.vector_store %arg7[%c0_96, %c0_97], %241 {strides = array<i32>} : memref<8x256xf32, #tpu.memory_space<vmem>>, vector<8x256xf32>,
    %c0_98 = arith.constant 0 : index
    %c0_99 = arith.constant 0 : index
    %243 = vector.load %arg7[%c0_98, %c0_99] : memref<8x256xf32, #tpu.memory_space<vmem>>, vector<8x256xf32>
    %244 = tpu.iota {dimensions = array<i32: 1>} : vector<8x256xi32>
    %c0_i32 = arith.constant 0 : i32
    %245 = vector.broadcast %c0_i32 : i32 to vector<8x256xi32>
    %246 = arith.cmpi eq, %244, %245 : vector<8x256xi32>
    %cst_100 = arith.constant 0.000000e+00 : f32
    %247 = vector.broadcast %cst_100 : f32 to vector<8x256xf32>
    %248 = arith.select %246, %247, %243 : vector<8x256xi1>, vector<8x256xf32>
    %cst_101 = arith.constant dense<0.000000e+00> : vector<8xf32>
    %249 = vector.multi_reduction <add>, %248, %cst_101 [1] : vector<8x256xf32> to vector<8xf32>
    %250 = vector.shape_cast %249 : vector<8xf32> to vector<8x1xf32>
    %cst_102 = arith.constant 1.000000e+00 : f32
    %251 = vector.broadcast %cst_102 : f32 to vector<8x1xf32>
    %252 = arith.maximumf %250, %251 : vector<8x1xf32>
    %253 = tpu.reciprocal %252 {approx = true} : vector<8x1xf32> -> vector<8x1xf32>
    %c0_103 = arith.constant 0 : index
    %c0_104 = arith.constant 0 : index
    %254 = vector.load %arg2[%c0_103, %c0_104] : memref<256x128xf32, #tpu.memory_space<vmem>>, vector<256x128xf32>
    %cst_105 = arith.constant dense<0.000000e+00> : vector<8x128xf32>
    %255 = tpu.matmul %248, %254, %cst_105 {dimension_numbers = #tpu.dot_dimension_numbers<[1], [0], [0], [1], [0, 0, 1, 1], [], []>} : vector<8x256xf32>, vector<256x128xf32>, vector<8x128xf32> -> vector<8x128xf32>
    %256 = vector.broadcast %253 : vector<8x1xf32> to vector<8x128xf32>
    %257 = arith.mulf %255, %256 : vector<8x128xf32>
    %c0_106 = arith.constant 0 : index
    %c0_107 = arith.constant 0 : index
    %258 = vector.load %arg3[%c0_106, %c0_107] : memref<1x128xf32, #tpu.memory_space<vmem>>, vector<1x128xf32>
    %259 = vector.broadcast %258 : vector<1x128xf32> to vector<8x128xf32>
    %260 = arith.addf %257, %259 : vector<8x128xf32>
    %cst_108 = arith.constant 0.000000e+00 : f32
    %261 = vector.broadcast %cst_108 : f32 to vector<8x128xf32>
    %262 = arith.maximumf %260, %261 : vector<8x128xf32>
    %c0_109 = arith.constant 0 : index
    %c0_110 = arith.constant 0 : index
    %263 = vector.load %arg4[%c0_109, %c0_110] : memref<128x128xf32, #tpu.memory_space<vmem>>, vector<128x128xf32>
    %cst_111 = arith.constant dense<0.000000e+00> : vector<8x128xf32>
    %264 = tpu.matmul %262, %263, %cst_111 {dimension_numbers = #tpu.dot_dimension_numbers<[1], [0], [0], [1], [0, 0, 1, 1], [], []>} : vector<8x128xf32>, vector<128x128xf32>, vector<8x128xf32> -> vector<8x128xf32>
    %c0_112 = arith.constant 0 : index
    %c0_113 = arith.constant 0 : index
    %265 = vector.load %arg5[%c0_112, %c0_113] : memref<1x128xf32, #tpu.memory_space<vmem>>, vector<1x128xf32>
    %266 = vector.broadcast %265 : vector<1x128xf32> to vector<8x128xf32>
    %267 = arith.addf %264, %266 : vector<8x128xf32>
    %c0_114 = arith.constant 0 : index
    %c0_115 = arith.constant 0 : index
    %268 = vector.load %arg6[%c0_114, %c0_115] : memref<8x128xf32, #tpu.memory_space<vmem>>, vector<8x128xf32>
    tpu.vector_store %arg6[%c0_114, %c0_115], %267 {strides = array<i32>} : memref<8x128xf32, #tpu.memory_space<vmem>>, vector<8x128xf32>,
    return
  }
  func.func @transform_0(%arg0: i32) -> (i32, i32) {
    %c0_i32 = arith.constant 0 : i32
    %c0_i32_0 = arith.constant 0 : i32
    return %arg0, %c0_i32 : i32, i32
  }
  func.func @transform_1(%arg0: i32) -> (i32, i32) {
    %c0_i32 = arith.constant 0 : i32
    %c0_i32_0 = arith.constant 0 : i32
    %c0_i32_1 = arith.constant 0 : i32
    return %c0_i32, %c0_i32_0 : i32, i32
  }
  func.func @transform_2(%arg0: i32) -> (i32, i32) {
    %c0_i32 = arith.constant 0 : i32
    %c0_i32_0 = arith.constant 0 : i32
    %c0_i32_1 = arith.constant 0 : i32
    return %c0_i32, %c0_i32_0 : i32, i32
  }
  func.func @transform_3(%arg0: i32) -> (i32, i32) {
    %c0_i32 = arith.constant 0 : i32
    %c0_i32_0 = arith.constant 0 : i32
    %c0_i32_1 = arith.constant 0 : i32
    return %c0_i32, %c0_i32_0 : i32, i32
  }
  func.func @transform_4(%arg0: i32) -> (i32, i32) {
    %c0_i32 = arith.constant 0 : i32
    %c0_i32_0 = arith.constant 0 : i32
    %c0_i32_1 = arith.constant 0 : i32
    return %c0_i32, %c0_i32_0 : i32, i32
  }
  func.func @transform_5(%arg0: i32) -> (i32, i32) {
    %c0_i32 = arith.constant 0 : i32
    %c0_i32_0 = arith.constant 0 : i32
    return %arg0, %c0_i32 : i32, i32
  }
}

</mosaic_0001>

<llo_original>
// kernel: tpu_custom_call.1
$region0: #{tpu_custom_call.1}
  #allocation0 [shape = 'u32[]', space=smem, size = 0x4, offset = 0x4, fixed_abs, tag = 'smem constant byte address 0x4 - core index']
  #allocation1 [shape = 'u32[144,128]{1,0:T(1,128)}', space=vmem, size = 0x12000, scoped, tag = 'internal scratch']
  #allocation2 [shape = 'f32[8,256]{1,0:T(8,128)}', space=vmem, size = 0x2000, scoped, tag = 'scratch operand']
  %s0 = inlined_call_operand.hbm [shape: s32[8,128], index: 0, kind: input, shape index: {}]
  %s1 = inlined_call_operand.hbm [shape: f32[256,128], index: 1, kind: input, shape index: {}]
  %s2 = inlined_call_operand.vmem [shape: f32[1,128], index: 2, kind: input, shape index: {}]
  %s3 = inlined_call_operand.hbm [shape: f32[128,128], index: 3, kind: input, shape index: {}]
  %s4 = inlined_call_operand.vmem [shape: f32[1,128], index: 4, kind: input, shape index: {}]
  %s5 = inlined_call_operand.hbm [shape: f32[8,128], index: 5, kind: output, shape index: {}]
  %s6 = sld [smem:[#allocation0]]
  $region42: #{tpu_custom_call.1} parent=0
    _
  %s8 = ssub.s32 1, %s6
  %s9 = scalar_select 0, %s8, %s6
  $region1: #{tpu_custom_call.1} parent=0
    #allocation3 [shape = 'u8[4096]{0}', space=vmem, size = 0x1000, scoped, tag = 'input window, operand 0, single buffered']
    #allocation4 [shape = 's32[1]{0}', space=sflag, size = 0x4, scoped, tag = 'scoped memory for tpu_custom_call.1']
    #allocation5 [shape = 's32[1]{0}', space=sflag, size = 0x4, scoped, tag = 'scoped memory for tpu_custom_call.1']
    #allocation6 [shape = 'u8[131072]{0}', space=vmem, size = 0x20000, scoped, tag = 'input window, operand 1, single buffered']
    #allocation7 [shape = 's32[1]{0}', space=sflag, size = 0x4, scoped, tag = 'scoped memory for tpu_custom_call.1']
    #allocation8 [shape = 'u8[65536]{0}', space=vmem, size = 0x10000, scoped, tag = 'input window, operand 3, single buffered']
    #allocation9 [shape = 'u8[4096]{0}', space=vmem, size = 0x1000, scoped, tag = 'output window, operand 0, single buffered']
    %10 = vsyncpa [#allocation4], 0
    %11 = vsyncpa [#allocation7], 0
    %12 = vsyncpa [#allocation5], 0
    // Predicated region
    $region2: #{tpu_custom_call.1} parent=1 // pred_check
      _
    $region3: #{tpu_custom_call.1} parent=1 // pred_check_branch
      %14 = sbr.rel (0) target = $region5
    $region4: #{tpu_custom_call.1} parent=1 // pred_region
      %s16 = ssub.s32 128, 128
      %17 = vsyncadd [#allocation4], %s16
      %s19 = sshll.u32 [#allocation3], 4
      %s20 = int_to_ptr.vmem [resolvable:$true] %s19
      %22 = dma.hbm_to_vmem [thread:$0]  %s0, 128, %s20, [#allocation4]
    $region5: #{tpu_custom_call.1} parent=1 // pred_fallthru
      _
    // Predicated region
    $region6: #{tpu_custom_call.1} parent=1 // pred_check
      _
    $region7: #{tpu_custom_call.1} parent=1 // pred_check_branch
      %24 = sbr.rel (0) target = $region9
    $region8: #{tpu_custom_call.1} parent=1 // pred_region
      %s26 = ssub.s32 4096, 4096
      %27 = vsyncadd [#allocation7], %s26
      %s28 = sshll.u32 [#allocation6], 4
      %s29 = int_to_ptr.vmem [resolvable:$true] %s28
      %34 = dma.hbm_to_vmem [thread:$0]  %s1, 4096, %s29, [#allocation7], 128, 128, 8
    $region9: #{tpu_custom_call.1} parent=1 // pred_fallthru
      _
    // Predicated region
    $region10: #{tpu_custom_call.1} parent=1 // pred_check
      _
    $region11: #{tpu_custom_call.1} parent=1 // pred_check_branch
      %36 = sbr.rel (0) target = $region13
    $region12: #{tpu_custom_call.1} parent=1 // pred_region
      _
    $region13: #{tpu_custom_call.1} parent=1 // pred_fallthru
      _
    // Predicated region
    $region14: #{tpu_custom_call.1} parent=1 // pred_check
      _
    $region15: #{tpu_custom_call.1} parent=1 // pred_check_branch
      %38 = sbr.rel (0) target = $region17
    $region16: #{tpu_custom_call.1} parent=1 // pred_region
      %s40 = ssub.s32 2048, 2048
      %41 = vsyncadd [#allocation7], %s40
      %s42 = sshll.u32 [#allocation8], 4
      %s43 = int_to_ptr.vmem [resolvable:$true] %s42
      %48 = dma.hbm_to_vmem [thread:$0]  %s3, 2048, %s43, [#allocation7], 128, 128, 8
    $region17: #{tpu_custom_call.1} parent=1 // pred_fallthru
      _
    // Predicated region
    $region18: #{tpu_custom_call.1} parent=1 // pred_check
      _
    $region19: #{tpu_custom_call.1} parent=1 // pred_check_branch
      %50 = sbr.rel (0) target = $region21
    $region20: #{tpu_custom_call.1} parent=1 // pred_region
      _
    $region21: #{tpu_custom_call.1} parent=1 // pred_fallthru
      _
    // Predicated region
    $region22: #{tpu_custom_call.1} parent=1 // pred_check
      _
    $region23: #{tpu_custom_call.1} parent=1 // pred_check_branch
      %52 = sbr.rel (0) target = $region25
    $region24: #{tpu_custom_call.1} parent=1 // pred_region
      %53 = dma.done [#allocation4], 128
    $region25: #{tpu_custom_call.1} parent=1 // pred_fallthru
      _
    // Predicated region
    $region26: #{tpu_custom_call.1} parent=1 // pred_check
      _
    $region27: #{tpu_custom_call.1} parent=1 // pred_check_branch
      %55 = sbr.rel (0) target = $region29
    $region28: #{tpu_custom_call.1} parent=1 // pred_region
      %56 = dma.done [#allocation7], 4096
    $region29: #{tpu_custom_call.1} parent=1 // pred_fallthru
      _
    // Predicated region
    $region30: #{tpu_custom_call.1} parent=1 // pred_check
      _
    $region31: #{tpu_custom_call.1} parent=1 // pred_check_branch
      %58 = sbr.rel (0) target = $region33
    $region32: #{tpu_custom_call.1} parent=1 // pred_region
      %59 = dma.done [#allocation7], 2048
    $region33: #{tpu_custom_call.1} parent=1 // pred_fallthru
      _
    %60 = vst [vmem:[#allocation2] sm:$0xff] 0.0
    %61 = vst [vmem:[#allocation2 + $0x8] sm:$0xff] 0.0
    %v62 = vlaneseq
    %v63 = vand.u32 %v62, 127
    %v64 = vadd.s32 %v63, 128
    %v65 = vld [vmem:[#allocation3] sm:$0xff]
    %v66 = vlaneseq
    %v67 = vshrl.u32 %v66, 7
    %v68 = vsub.s32 0, %v67
    %v69 = vrot.slane %v65, %v68
    %71 = vbcast.lane.b32.xlu0 %v69, 256
    %v72 = vpop.permute.xlu0 %71
    %v73 = vlaneseq
    %v74 = vshrl.u32 %v73, 7
    %v75 = vsub.s32 1, %v74
    %v76 = vrot.slane %v65, %v75
    %78 = vbcast.lane.b32.xlu0 %v76, 256
    %v79 = vpop.permute.xlu0 %78
    %v80 = vlaneseq
    %v81 = vshrl.u32 %v80, 7
    %v82 = vsub.s32 2, %v81
    %v83 = vrot.slane %v65, %v82
    %85 = vbcast.lane.b32.xlu0 %v83, 256
    %v86 = vpop.permute.xlu0 %85
    %v87 = vlaneseq
    %v88 = vshrl.u32 %v87, 7
    %v89 = vsub.s32 3, %v88
    %v90 = vrot.slane %v65, %v89
    %92 = vbcast.lane.b32.xlu0 %v90, 256
    %v93 = vpop.permute.xlu0 %92
    %v94 = vlaneseq
    %v95 = vshrl.u32 %v94, 7
    %v96 = vsub.s32 4, %v95
    %v97 = vrot.slane %v65, %v96
    %99 = vbcast.lane.b32.xlu0 %v97, 256
    %v100 = vpop.permute.xlu0 %99
    %v101 = vlaneseq
    %v102 = vshrl.u32 %v101, 7
    %v103 = vsub.s32 5, %v102
    %v104 = vrot.slane %v65, %v103
    %106 = vbcast.lane.b32.xlu0 %v104, 256
    %v107 = vpop.permute.xlu0 %106
    %v108 = vlaneseq
    %v109 = vshrl.u32 %v108, 7
    %v110 = vsub.s32 6, %v109
    %v111 = vrot.slane %v65, %v110
    %113 = vbcast.lane.b32.xlu0 %v111, 256
    %v114 = vpop.permute.xlu0 %113
    %v115 = vlaneseq
    %v116 = vshrl.u32 %v115, 7
    %v117 = vsub.s32 7, %v116
    %v118 = vrot.slane %v65, %v117
    %120 = vbcast.lane.b32.xlu0 %v118, 256
    %v121 = vpop.permute.xlu0 %120
    %vm122 = vcmp.eq.s32.totalorder %v72, %v63
    %vm123 = vcmp.eq.s32.totalorder %v72, %v64
    %vm124 = vcmp.eq.s32.totalorder %v79, %v63
    %vm125 = vcmp.eq.s32.totalorder %v79, %v64
    %vm126 = vcmp.eq.s32.totalorder %v86, %v63
    %vm127 = vcmp.eq.s32.totalorder %v86, %v64
    %vm128 = vcmp.eq.s32.totalorder %v93, %v63
    %vm129 = vcmp.eq.s32.totalorder %v93, %v64
    %vm130 = vcmp.eq.s32.totalorder %v100, %v63
    %vm131 = vcmp.eq.s32.totalorder %v100, %v64
    %vm132 = vcmp.eq.s32.totalorder %v107, %v63
    %vm133 = vcmp.eq.s32.totalorder %v107, %v64
    %vm134 = vcmp.eq.s32.totalorder %v114, %v63
    %vm135 = vcmp.eq.s32.totalorder %v114, %v64
    %vm136 = vcmp.eq.s32.totalorder %v121, %v63
    %vm137 = vcmp.eq.s32.totalorder %v121, %v64
    %v138 = vsel %vm122, 1, 0
    %v139 = vsel %vm123, 1, 0
    %v140 = vsel %vm124, 1, 0
    %v141 = vsel %vm125, 1, 0
    %v142 = vsel %vm126, 1, 0
    %v143 = vsel %vm127, 1, 0
    %v144 = vsel %vm128, 1, 0
    %v145 = vsel %vm129, 1, 0
    %v146 = vsel %vm130, 1, 0
    %v147 = vsel %vm131, 1, 0
    %v148 = vsel %vm132, 1, 0
    %v149 = vsel %vm133, 1, 0
    %v150 = vsel %vm134, 1, 0
    %v151 = vsel %vm135, 1, 0
    %v152 = vsel %vm136, 1, 0
    %v153 = vsel %vm137, 1, 0
    %v154 = vcvt.s32.f32 %v138
    %v155 = vcvt.s32.f32 %v139
    %v156 = vcvt.s32.f32 %v140
    %v157 = vcvt.s32.f32 %v141
    %v158 = vcvt.s32.f32 %v142
    %v159 = vcvt.s32.f32 %v143
    %v160 = vcvt.s32.f32 %v144
    %v161 = vcvt.s32.f32 %v145
    %v162 = vcvt.s32.f32 %v146
    %v163 = vcvt.s32.f32 %v147
    %v164 = vcvt.s32.f32 %v148
    %v165 = vcvt.s32.f32 %v149
    %v166 = vcvt.s32.f32 %v150
    %v167 = vcvt.s32.f32 %v151
    %v168 = vcvt.s32.f32 %v152
    %v169 = vcvt.s32.f32 %v153
    %v170 = vpack.c.bf16 %v154, %v154
    %v171 = vpack.c.bf16 %v155, %v155
    %v172 = vpack.c.bf16 %v156, %v156
    %v173 = vpack.c.bf16 %v157, %v157
    %v174 = vpack.c.bf16 %v158, %v158
    %v175 = vpack.c.bf16 %v159, %v159
    %v176 = vpack.c.bf16 %v160, %v160
    %v177 = vpack.c.bf16 %v161, %v161
    %v178 = vpack.c.bf16 %v162, %v162
    %v179 = vpack.c.bf16 %v163, %v163
    %v180 = vpack.c.bf16 %v164, %v164
    %v181 = vpack.c.bf16 %v165, %v165
    %v182 = vpack.c.bf16 %v166, %v166
    %v183 = vpack.c.bf16 %v167, %v167
    %v184 = vpack.c.bf16 %v168, %v168
    %v185 = vpack.c.bf16 %v169, %v169
    %v186 = vld [vmem:[#allocation2] sm:$0xff]
    %v187 = vld [vmem:[#allocation2 + $0x8] sm:$0xff]
    %v188 = vunpack.c.l.bf16 %v170
    %v189 = vunpack.c.l.bf16 %v171
    %v190 = vunpack.c.l.bf16 %v172
    %v191 = vunpack.c.l.bf16 %v173
    %v192 = vunpack.c.l.bf16 %v174
    %v193 = vunpack.c.l.bf16 %v175
    %v194 = vunpack.c.l.bf16 %v176
    %v195 = vunpack.c.l.bf16 %v177
    %v196 = vunpack.c.l.bf16 %v178
    %v197 = vunpack.c.l.bf16 %v179
    %v198 = vunpack.c.l.bf16 %v180
    %v199 = vunpack.c.l.bf16 %v181
    %v200 = vunpack.c.l.bf16 %v182
    %v201 = vunpack.c.l.bf16 %v183
    %v202 = vunpack.c.l.bf16 %v184
    %v203 = vunpack.c.l.bf16 %v185
    %v204 = vrot.slane %v188, 4
    %v205 = vadd.f32 %v188, %v204
    %v206 = vrot.slane %v205, 2
    %v207 = vadd.f32 %v205, %v206
    %v208 = vrot.slane %v207, 1
    %v209 = vadd.f32 %v207, %v208
    %v210 = vrot.slane %v189, 4
    %v211 = vadd.f32 %v189, %v210
    %v212 = vrot.slane %v211, 2
    %v213 = vadd.f32 %v211, %v212
    %v214 = vrot.slane %v213, 1
    %v215 = vadd.f32 %v213, %v214
    %v216 = vrot.slane %v190, 4
    %v217 = vadd.f32 %v190, %v216
    %v218 = vrot.slane %v217, 2
    %v219 = vadd.f32 %v217, %v218
    %v220 = vrot.slane %v219, 1
    %v221 = vadd.f32 %v219, %v220
    %v222 = vrot.slane %v191, 4
    %v223 = vadd.f32 %v191, %v222
    %v224 = vrot.slane %v223, 2
    %v225 = vadd.f32 %v223, %v224
    %v226 = vrot.slane %v225, 1
    %v227 = vadd.f32 %v225, %v226
    %v228 = vrot.slane %v192, 4
    %v229 = vadd.f32 %v192, %v228
    %v230 = vrot.slane %v229, 2
    %v231 = vadd.f32 %v229, %v230
    %v232 = vrot.slane %v231, 1
    %v233 = vadd.f32 %v231, %v232
    %v234 = vrot.slane %v193, 4
    %v235 = vadd.f32 %v193, %v234
    %v236 = vrot.slane %v235, 2
    %v237 = vadd.f32 %v235, %v236
    %v238 = vrot.slane %v237, 1
    %v239 = vadd.f32 %v237, %v238
    %v240 = vrot.slane %v194, 4
    %v241 = vadd.f32 %v194, %v240
    %v242 = vrot.slane %v241, 2
    %v243 = vadd.f32 %v241, %v242
    %v244 = vrot.slane %v243, 1
    %v245 = vadd.f32 %v243, %v244
    %v246 = vrot.slane %v195, 4
    %v247 = vadd.f32 %v195, %v246
    %v248 = vrot.slane %v247, 2
    %v249 = vadd.f32 %v247, %v248
    %v250 = vrot.slane %v249, 1
    %v251 = vadd.f32 %v249, %v250
    %v252 = vrot.slane %v196, 4
    %v253 = vadd.f32 %v196, %v252
    %v254 = vrot.slane %v253, 2
    %v255 = vadd.f32 %v253, %v254
    %v256 = vrot.slane %v255, 1
    %v257 = vadd.f32 %v255, %v256
    %v258 = vrot.slane %v197, 4
    %v259 = vadd.f32 %v197, %v258
    %v260 = vrot.slane %v259, 2
    %v261 = vadd.f32 %v259, %v260
    %v262 = vrot.slane %v261, 1
    %v263 = vadd.f32 %v261, %v262
    %v264 = vrot.slane %v198, 4
    %v265 = vadd.f32 %v198, %v264
    %v266 = vrot.slane %v265, 2
    %v267 = vadd.f32 %v265, %v266
    %v268 = vrot.slane %v267, 1
    %v269 = vadd.f32 %v267, %v268
    %v270 = vrot.slane %v199, 4
    %v271 = vadd.f32 %v199, %v270
    %v272 = vrot.slane %v271, 2
    %v273 = vadd.f32 %v271, %v272
    %v274 = vrot.slane %v273, 1
    %v275 = vadd.f32 %v273, %v274
    %v276 = vrot.slane %v200, 4
    %v277 = vadd.f32 %v200, %v276
    %v278 = vrot.slane %v277, 2
    %v279 = vadd.f32 %v277, %v278
    %v280 = vrot.slane %v279, 1
    %v281 = vadd.f32 %v279, %v280
    %v282 = vrot.slane %v201, 4
    %v283 = vadd.f32 %v201, %v282
    %v284 = vrot.slane %v283, 2
    %v285 = vadd.f32 %v283, %v284
    %v286 = vrot.slane %v285, 1
    %v287 = vadd.f32 %v285, %v286
    %v288 = vrot.slane %v202, 4
    %v289 = vadd.f32 %v202, %v288
    %v290 = vrot.slane %v289, 2
    %v291 = vadd.f32 %v289, %v290
    %v292 = vrot.slane %v291, 1
    %v293 = vadd.f32 %v291, %v292
    %v294 = vrot.slane %v203, 4
    %v295 = vadd.f32 %v203, %v294
    %v296 = vrot.slane %v295, 2
    %v297 = vadd.f32 %v295, %v296
    %v298 = vrot.slane %v297, 1
    %v299 = vadd.f32 %v297, %v298
    %v300 = vpack.c.bf16 %v209, %v209
    %v301 = vpack.c.bf16 %v215, %v215
    %v302 = vpack.c.bf16 %v221, %v221
    %v303 = vpack.c.bf16 %v227, %v227
    %v304 = vpack.c.bf16 %v233, %v233
    %v305 = vpack.c.bf16 %v239, %v239
    %v306 = vpack.c.bf16 %v245, %v245
    %v307 = vpack.c.bf16 %v251, %v251
    %v308 = vpack.c.bf16 %v257, %v257
    %v309 = vpack.c.bf16 %v263, %v263
    %v310 = vpack.c.bf16 %v269, %v269
    %v311 = vpack.c.bf16 %v275, %v275
    %v312 = vpack.c.bf16 %v281, %v281
    %v313 = vpack.c.bf16 %v287, %v287
    %v314 = vpack.c.bf16 %v293, %v293
    %v315 = vpack.c.bf16 %v299, %v299
    %v316 = vunpack.c.l.bf16 %v300
    %v317 = vunpack.c.l.bf16 %v301
    %v318 = vunpack.c.l.bf16 %v302
    %v319 = vunpack.c.l.bf16 %v303
    %v320 = vunpack.c.l.bf16 %v304
    %v321 = vunpack.c.l.bf16 %v305
    %v322 = vunpack.c.l.bf16 %v306
    %v323 = vunpack.c.l.bf16 %v307
    %v324 = vunpack.c.l.bf16 %v308
    %v325 = vunpack.c.l.bf16 %v309
    %v326 = vunpack.c.l.bf16 %v310
    %v327 = vunpack.c.l.bf16 %v311
    %v328 = vunpack.c.l.bf16 %v312
    %v329 = vunpack.c.l.bf16 %v313
    %v330 = vunpack.c.l.bf16 %v314
    %v331 = vunpack.c.l.bf16 %v315
    %vm348 = vcmask 1041409
    %v349 = vsel %vm348, %v318, %v316
    %vm350 = vcmask 1042434
    %v351 = vsel %vm350, %v320, %v349
    %vm352 = vcmask 1043459
    %v353 = vsel %vm352, %v322, %v351
    %vm354 = vcmask 1044484
    %v355 = vsel %vm354, %v324, %v353
    %vm356 = vcmask 1045509
    %v357 = vsel %vm356, %v326, %v355
    %vm358 = vcmask 1046534
    %v359 = vsel %vm358, %v328, %v357
    %vm360 = vcmask 1047559
    %v361 = vsel %vm360, %v330, %v359
    %v362 = vsel %vm348, %v319, %v317
    %v363 = vsel %vm350, %v321, %v362
    %v364 = vsel %vm352, %v323, %v363
    %v365 = vsel %vm354, %v325, %v364
    %v366 = vsel %vm356, %v327, %v365
    %v367 = vsel %vm358, %v329, %v366
    %v368 = vsel %vm360, %v331, %v367
    %v371 = vadd.f32 %v186, %v361
    %v372 = vadd.f32 %v187, %v368
    %373 = vst [vmem:[#allocation2] sm:$0xff] %v371
    %374 = vst [vmem:[#allocation2 + $0x8] sm:$0xff] %v372
    %v375 = vld [vmem:[#allocation3] sm:$0xff]
    %v376 = vlaneseq
    %v377 = vshrl.u32 %v376, 7
    %v378 = vsub.s32 0, %v377
    %v379 = vrot.slane %v375, %v378
    %s381 = sor.u32 256, 8
    %382 = vbcast.lane.b32.xlu0 %v379, %s381
    %v383 = vpop.permute.xlu0 %382
    %v384 = vlaneseq
    %v385 = vshrl.u32 %v384, 7
    %v386 = vsub.s32 1, %v385
    %v387 = vrot.slane %v375, %v386
    %s389 = sor.u32 256, 8
    %390 = vbcast.lane.b32.xlu0 %v387, %s389
    %v391 = vpop.permute.xlu0 %390
    %v392 = vlaneseq
    %v393 = vshrl.u32 %v392, 7
    %v394 = vsub.s32 2, %v393
    %v395 = vrot.slane %v375, %v394
    %s397 = sor.u32 256, 8
    %398 = vbcast.lane.b32.xlu0 %v395, %s397
    %v399 = vpop.permute.xlu0 %398
    %v400 = vlaneseq
    %v401 = vshrl.u32 %v400, 7
    %v402 = vsub.s32 3, %v401
    %v403 = vrot.slane %v375, %v402
    %s405 = sor.u32 256, 8
    %406 = vbcast.lane.b32.xlu0 %v403, %s405
    %v407 = vpop.permute.xlu0 %406
    %v408 = vlaneseq
    %v409 = vshrl.u32 %v408, 7
    %v410 = vsub.s32 4, %v409
    %v411 = vrot.slane %v375, %v410
    %s413 = sor.u32 256, 8
    %414 = vbcast.lane.b32.xlu0 %v411, %s413
    %v415 = vpop.permute.xlu0 %414
    %v416 = vlaneseq
    %v417 = vshrl.u32 %v416, 7
    %v418 = vsub.s32 5, %v417
    %v419 = vrot.slane %v375, %v418
    %s421 = sor.u32 256, 8
    %422 = vbcast.lane.b32.xlu0 %v419, %s421
    %v423 = vpop.permute.xlu0 %422
    %v424 = vlaneseq
    %v425 = vshrl.u32 %v424, 7
    %v426 = vsub.s32 6, %v425
    %v427 = vrot.slane %v375, %v426
    %s429 = sor.u32 256, 8
    %430 = vbcast.lane.b32.xlu0 %v427, %s429
    %v431 = vpop.permute.xlu0 %430
    %v432 = vlaneseq
    %v433 = vshrl.u32 %v432, 7
    %v434 = vsub.s32 7, %v433
    %v435 = vrot.slane %v375, %v434
    %s437 = sor.u32 256, 8
    %438 = vbcast.lane.b32.xlu0 %v435, %s437
    %v439 = vpop.permute.xlu0 %438
    %vm440 = vcmp.eq.s32.totalorder %v383, %v63
    %vm441 = vcmp.eq.s32.totalorder %v383, %v64
    %vm442 = vcmp.eq.s32.totalorder %v391, %v63
    %vm443 = vcmp.eq.s32.totalorder %v391, %v64
    %vm444 = vcmp.eq.s32.totalorder %v399, %v63
    %vm445 = vcmp.eq.s32.totalorder %v399, %v64
    %vm446 = vcmp.eq.s32.totalorder %v407, %v63
    %vm447 = vcmp.eq.s32.totalorder %v407, %v64
    %vm448 = vcmp.eq.s32.totalorder %v415, %v63
    %vm449 = vcmp.eq.s32.totalorder %v415, %v64
    %vm450 = vcmp.eq.s32.totalorder %v423, %v63
    %vm451 = vcmp.eq.s32.totalorder %v423, %v64
    %vm452 = vcmp.eq.s32.totalorder %v431, %v63
    %vm453 = vcmp.eq.s32.totalorder %v431, %v64
    %vm454 = vcmp.eq.s32.totalorder %v439, %v63
    %vm455 = vcmp.eq.s32.totalorder %v439, %v64
    %v456 = vsel %vm440, 1, 0
    %v457 = vsel %vm441, 1, 0
    %v458 = vsel %vm442, 1, 0
    %v459 = vsel %vm443, 1, 0
    %v460 = vsel %vm444, 1, 0
    %v461 = vsel %vm445, 1, 0
    %v462 = vsel %vm446, 1, 0
    %v463 = vsel %vm447, 1, 0
    %v464 = vsel %vm448, 1, 0
    %v465 = vsel %vm449, 1, 0
    %v466 = vsel %vm450, 1, 0
    %v467 = vsel %vm451, 1, 0
    %v468 = vsel %vm452, 1, 0
    %v469 = vsel %vm453, 1, 0
    %v470 = vsel %vm454, 1, 0
    %v471 = vsel %vm455, 1, 0
    %v472 = vcvt.s32.f32 %v456
    %v473 = vcvt.s32.f32 %v457
    %v474 = vcvt.s32.f32 %v458
    %v475 = vcvt.s32.f32 %v459
    %v476 = vcvt.s32.f32 %v460
    %v477 = vcvt.s32.f32 %v461
    %v478 = vcvt.s32.f32 %v462
    %v479 = vcvt.s32.f32 %v463
    %v480 = vcvt.s32.f32 %v464
    %v481 = vcvt.s32.f32 %v465
    %v482 = vcvt.s32.f32 %v466
    %v483 = vcvt.s32.f32 %v467
    %v484 = vcvt.s32.f32 %v468
    %v485 = vcvt.s32.f32 %v469
    %v486 = vcvt.s32.f32 %v470
    %v487 = vcvt.s32.f32 %v471
    %v488 = vpack.c.bf16 %v472, %v472
    %v489 = vpack.c.bf16 %v473, %v473
    %v490 = vpack.c.bf16 %v474, %v474
    %v491 = vpack.c.bf16 %v475, %v475
    %v492 = vpack.c.bf16 %v476, %v476
    %v493 = vpack.c.bf16 %v477, %v477
    %v494 = vpack.c.bf16 %v478, %v478
    %v495 = vpack.c.bf16 %v479, %v479
    %v496 = vpack.c.bf16 %v480, %v480
    %v497 = vpack.c.bf16 %v481, %v481
    %v498 = vpack.c.bf16 %v482, %v482
    %v499 = vpack.c.bf16 %v483, %v483
    %v500 = vpack.c.bf16 %v484, %v484
    %v501 = vpack.c.bf16 %v485, %v485
    %v502 = vpack.c.bf16 %v486, %v486
    %v503 = vpack.c.bf16 %v487, %v487
    %v504 = vld [vmem:[#allocation2] sm:$0xff]
    %v505 = vld [vmem:[#allocation2 + $0x8] sm:$0xff]
    %v506 = vunpack.c.l.bf16 %v488
    %v507 = vunpack.c.l.bf16 %v489
    %v508 = vunpack.c.l.bf16 %v490
    %v509 = vunpack.c.l.bf16 %v491
    %v510 = vunpack.c.l.bf16 %v492
    %v511 = vunpack.c.l.bf16 %v493
    %v512 = vunpack.c.l.bf16 %v494
    %v513 = vunpack.c.l.bf16 %v495
    %v514 = vunpack.c.l.bf16 %v496
    %v515 = vunpack.c.l.bf16 %v497
    %v516 = vunpack.c.l.bf16 %v498
    %v517 = vunpack.c.l.bf16 %v499
    %v518 = vunpack.c.l.bf16 %v500
    %v519 = vunpack.c.l.bf16 %v501
    %v520 = vunpack.c.l.bf16 %v502
    %v521 = vunpack.c.l.bf16 %v503
    %v522 = vrot.slane %v506, 4
    %v523 = vadd.f32 %v506, %v522
    %v524 = vrot.slane %v523, 2
    %v525 = vadd.f32 %v523, %v524
    %v526 = vrot.slane %v525, 1
    %v527 = vadd.f32 %v525, %v526
    %v528 = vrot.slane %v507, 4
    %v529 = vadd.f32 %v507, %v528
    %v530 = vrot.slane %v529, 2
    %v531 = vadd.f32 %v529, %v530
    %v532 = vrot.slane %v531, 1
    %v533 = vadd.f32 %v531, %v532
    %v534 = vrot.slane %v508, 4
    %v535 = vadd.f32 %v508, %v534
    %v536 = vrot.slane %v535, 2
    %v537 = vadd.f32 %v535, %v536
    %v538 = vrot.slane %v537, 1
    %v539 = vadd.f32 %v537, %v538
    %v540 = vrot.slane %v509, 4
    %v541 = vadd.f32 %v509, %v540
    %v542 = vrot.slane %v541, 2
    %v543 = vadd.f32 %v541, %v542
    %v544 = vrot.slane %v543, 1
    %v545 = vadd.f32 %v543, %v544
    %v546 = vrot.slane %v510, 4
    %v547 = vadd.f32 %v510, %v546
    %v548 = vrot.slane %v547, 2
    %v549 = vadd.f32 %v547, %v548
    %v550 = vrot.slane %v549, 1
    %v551 = vadd.f32 %v549, %v550
    %v552 = vrot.slane %v511, 4
    %v553 = vadd.f32 %v511, %v552
    %v554 = vrot.slane %v553, 2
    %v555 = vadd.f32 %v553, %v554
    %v556 = vrot.slane %v555, 1
    %v557 = vadd.f32 %v555, %v556
    %v558 = vrot.slane %v512, 4
    %v559 = vadd.f32 %v512, %v558
    %v560 = vrot.slane %v559, 2
    %v561 = vadd.f32 %v559, %v560
    %v562 = vrot.slane %v561, 1
    %v563 = vadd.f32 %v561, %v562
    %v564 = vrot.slane %v513, 4
    %v565 = vadd.f32 %v513, %v564
    %v566 = vrot.slane %v565, 2
    %v567 = vadd.f32 %v565, %v566
    %v568 = vrot.slane %v567, 1
    %v569 = vadd.f32 %v567, %v568
    %v570 = vrot.slane %v514, 4
    %v571 = vadd.f32 %v514, %v570
    %v572 = vrot.slane %v571, 2
    %v573 = vadd.f32 %v571, %v572
    %v574 = vrot.slane %v573, 1
    %v575 = vadd.f32 %v573, %v574
    %v576 = vrot.slane %v515, 4
    %v577 = vadd.f32 %v515, %v576
    %v578 = vrot.slane %v577, 2
    %v579 = vadd.f32 %v577, %v578
    %v580 = vrot.slane %v579, 1
    %v581 = vadd.f32 %v579, %v580
    %v582 = vrot.slane %v516, 4
    %v583 = vadd.f32 %v516, %v582
    %v584 = vrot.slane %v583, 2
    %v585 = vadd.f32 %v583, %v584
    %v586 = vrot.slane %v585, 1
    %v587 = vadd.f32 %v585, %v586
    %v588 = vrot.slane %v517, 4
    %v589 = vadd.f32 %v517, %v588
    %v590 = vrot.slane %v589, 2
    %v591 = vadd.f32 %v589, %v590
    %v592 = vrot.slane %v591, 1
    %v593 = vadd.f32 %v591, %v592
    %v594 = vrot.slane %v518, 4
    %v595 = vadd.f32 %v518, %v594
    %v596 = vrot.slane %v595, 2
    %v597 = vadd.f32 %v595, %v596
    %v598 = vrot.slane %v597, 1
    %v599 = vadd.f32 %v597, %v598
    %v600 = vrot.slane %v519, 4
    %v601 = vadd.f32 %v519, %v600
    %v602 = vrot.slane %v601, 2
    %v603 = vadd.f32 %v601, %v602
    %v604 = vrot.slane %v603, 1
    %v605 = vadd.f32 %v603, %v604
    %v606 = vrot.slane %v520, 4
    %v607 = vadd.f32 %v520, %v606
    %v608 = vrot.slane %v607, 2
    %v609 = vadd.f32 %v607, %v608
    %v610 = vrot.slane %v609, 1
    %v611 = vadd.f32 %v609, %v610
    %v612 = vrot.slane %v521, 4
    %v613 = vadd.f32 %v521, %v612
    %v614 = vrot.slane %v613, 2
    %v615 = vadd.f32 %v613, %v614
    %v616 = vrot.slane %v615, 1
    %v617 = vadd.f32 %v615, %v616
    %v618 = vpack.c.bf16 %v527, %v527
    %v619 = vpack.c.bf16 %v533, %v533
    %v620 = vpack.c.bf16 %v539, %v539
    %v621 = vpack.c.bf16 %v545, %v545
    %v622 = vpack.c.bf16 %v551, %v551
    %v623 = vpack.c.bf16 %v557, %v557
    %v624 = vpack.c.bf16 %v563, %v563
    %v625 = vpack.c.bf16 %v569, %v569
    %v626 = vpack.c.bf16 %v575, %v575
    %v627 = vpack.c.bf16 %v581, %v581
    %v628 = vpack.c.bf16 %v587, %v587
    %v629 = vpack.c.bf16 %v593, %v593
    %v630 = vpack.c.bf16 %v599, %v599
    %v631 = vpack.c.bf16 %v605, %v605
    %v632 = vpack.c.bf16 %v611, %v611
    %v633 = vpack.c.bf16 %v617, %v617
    %v634 = vunpack.c.l.bf16 %v618
    %v635 = vunpack.c.l.bf16 %v619
    %v636 = vunpack.c.l.bf16 %v620
    %v637 = vunpack.c.l.bf16 %v621
    %v638 = vunpack.c.l.bf16 %v622
    %v639 = vunpack.c.l.bf16 %v623
    %v640 = vunpack.c.l.bf16 %v624
    %v641 = vunpack.c.l.bf16 %v625
    %v642 = vunpack.c.l.bf16 %v626
    %v643 = vunpack.c.l.bf16 %v627
    %v644 = vunpack.c.l.bf16 %v628
    %v645 = vunpack.c.l.bf16 %v629
    %v646 = vunpack.c.l.bf16 %v630
    %v647 = vunpack.c.l.bf16 %v631
    %v648 = vunpack.c.l.bf16 %v632
    %v649 = vunpack.c.l.bf16 %v633
    %v666 = vsel %vm348, %v636, %v634
    %v667 = vsel %vm350, %v638, %v666
    %v668 = vsel %vm352, %v640, %v667
    %v669 = vsel %vm354, %v642, %v668
    %v670 = vsel %vm356, %v644, %v669
    %v671 = vsel %vm358, %v646, %v670
    %v672 = vsel %vm360, %v648, %v671
    %v673 = vsel %vm348, %v637, %v635
    %v674 = vsel %vm350, %v639, %v673
    %v675 = vsel %vm352, %v641, %v674
    %v676 = vsel %vm354, %v643, %v675
    %v677 = vsel %vm356, %v645, %v676
    %v678 = vsel %vm358, %v647, %v677
    %v679 = vsel %vm360, %v649, %v678
    %v682 = vadd.f32 %v504, %v672
    %v683 = vadd.f32 %v505, %v679
    %684 = vst [vmem:[#allocation2] sm:$0xff] %v682
    %685 = vst [vmem:[#allocation2 + $0x8] sm:$0xff] %v683
    %v686 = vld [vmem:[#allocation3] sm:$0xff]
    %v687 = vlaneseq
    %v688 = vshrl.u32 %v687, 7
    %v689 = vsub.s32 0, %v688
    %v690 = vrot.slane %v686, %v689
    %s692 = sor.u32 256, 16
    %693 = vbcast.lane.b32.xlu0 %v690, %s692
    %v694 = vpop.permute.xlu0 %693
    %v695 = vlaneseq
    %v696 = vshrl.u32 %v695, 7
    %v697 = vsub.s32 1, %v696
    %v698 = vrot.slane %v686, %v697
    %s700 = sor.u32 256, 16
    %701 = vbcast.lane.b32.xlu0 %v698, %s700
    %v702 = vpop.permute.xlu0 %701
    %v703 = vlaneseq
    %v704 = vshrl.u32 %v703, 7
    %v705 = vsub.s32 2, %v704
    %v706 = vrot.slane %v686, %v705
    %s708 = sor.u32 256, 16
    %709 = vbcast.lane.b32.xlu0 %v706, %s708
    %v710 = vpop.permute.xlu0 %709
    %v711 = vlaneseq
    %v712 = vshrl.u32 %v711, 7
    %v713 = vsub.s32 3, %v712
    %v714 = vrot.slane %v686, %v713
    %s716 = sor.u32 256, 16
    %717 = vbcast.lane.b32.xlu0 %v714, %s716
    %v718 = vpop.permute.xlu0 %717
    %v719 = vlaneseq
    %v720 = vshrl.u32 %v719, 7
    %v721 = vsub.s32 4, %v720
    %v722 = vrot.slane %v686, %v721
    %s724 = sor.u32 256, 16
    %725 = vbcast.lane.b32.xlu0 %v722, %s724
    %v726 = vpop.permute.xlu0 %725
    %v727 = vlaneseq
    %v728 = vshrl.u32 %v727, 7
    %v729 = vsub.s32 5, %v728
    %v730 = vrot.slane %v686, %v729
    %s732 = sor.u32 256, 16
    %733 = vbcast.lane.b32.xlu0 %v730, %s732
    %v734 = vpop.permute.xlu0 %733
    %v735 = vlaneseq
    %v736 = vshrl.u32 %v735, 7
    %v737 = vsub.s32 6, %v736
    %v738 = vrot.slane %v686, %v737
    %s740 = sor.u32 256, 16
    %741 = vbcast.lane.b32.xlu0 %v738, %s740
    %v742 = vpop.permute.xlu0 %741
    %v743 = vlaneseq
    %v744 = vshrl.u32 %v743, 7
    %v745 = vsub.s32 7, %v744
    %v746 = vrot.slane %v686, %v745
    %s748 = sor.u32 256, 16
    %749 = vbcast.lane.b32.xlu0 %v746, %s748
    %v750 = vpop.permute.xlu0 %749
    %vm751 = vcmp.eq.s32.totalorder %v694, %v63
    %vm752 = vcmp.eq.s32.totalorder %v694, %v64
    %vm753 = vcmp.eq.s32.totalorder %v702, %v63
    %vm754 = vcmp.eq.s32.totalorder %v702, %v64
    %vm755 = vcmp.eq.s32.totalorder %v710, %v63
    %vm756 = vcmp.eq.s32.totalorder %v710, %v64
    %vm757 = vcmp.eq.s32.totalorder %v718, %v63
    %vm758 = vcmp.eq.s32.totalorder %v718, %v64
    %vm759 = vcmp.eq.s32.totalorder %v726, %v63
    %vm760 = vcmp.eq.s32.totalorder %v726, %v64
    %vm761 = vcmp.eq.s32.totalorder %v734, %v63
    %vm762 = vcmp.eq.s32.totalorder %v734, %v64
    %vm763 = vcmp.eq.s32.totalorder %v742, %v63
    %vm764 = vcmp.eq.s32.totalorder %v742, %v64
    %vm765 = vcmp.eq.s32.totalorder %v750, %v63
    %vm766 = vcmp.eq.s32.totalorder %v750, %v64
    %v767 = vsel %vm751, 1, 0
    %v768 = vsel %vm752, 1, 0
    %v769 = vsel %vm753, 1, 0
    %v770 = vsel %vm754, 1, 0
    %v771 = vsel %vm755, 1, 0
    %v772 = vsel %vm756, 1, 0
    %v773 = vsel %vm757, 1, 0
    %v774 = vsel %vm758, 1, 0
    %v775 = vsel %vm759, 1, 0
    %v776 = vsel %vm760, 1, 0
    %v777 = vsel %vm761, 1, 0
    %v778 = vsel %vm762, 1, 0
    %v779 = vsel %vm763, 1, 0
    %v780 = vsel %vm764, 1, 0
    %v781 = vsel %vm765, 1, 0
    %v782 = vsel %vm766, 1, 0
    %v783 = vcvt.s32.f32 %v767
    %v784 = vcvt.s32.f32 %v768
    %v785 = vcvt.s32.f32 %v769
    %v786 = vcvt.s32.f32 %v770
    %v787 = vcvt.s32.f32 %v771
    %v788 = vcvt.s32.f32 %v772
    %v789 = vcvt.s32.f32 %v773
    %v790 = vcvt.s32.f32 %v774
    %v791 = vcvt.s32.f32 %v775
    %v792 = vcvt.s32.f32 %v776
    %v793 = vcvt.s32.f32 %v777
    %v794 = vcvt.s32.f32 %v778
    %v795 = vcvt.s32.f32 %v779
    %v796 = vcvt.s32.f32 %v780
    %v797 = vcvt.s32.f32 %v781
    %v798 = vcvt.s32.f32 %v782
    %v799 = vpack.c.bf16 %v783, %v783
    %v800 = vpack.c.bf16 %v784, %v784
    %v801 = vpack.c.bf16 %v785, %v785
    %v802 = vpack.c.bf16 %v786, %v786
    %v803 = vpack.c.bf16 %v787, %v787
    %v804 = vpack.c.bf16 %v788, %v788
    %v805 = vpack.c.bf16 %v789, %v789
    %v806 = vpack.c.bf16 %v790, %v790
    %v807 = vpack.c.bf16 %v791, %v791
    %v808 = vpack.c.bf16 %v792, %v792
    %v809 = vpack.c.bf16 %v793, %v793
    %v810 = vpack.c.bf16 %v794, %v794
    %v811 = vpack.c.bf16 %v795, %v795
    %v812 = vpack.c.bf16 %v796, %v796
    %v813 = vpack.c.bf16 %v797, %v797
    %v814 = vpack.c.bf16 %v798, %v798
    %v815 = vld [vmem:[#allocation2] sm:$0xff]
    %v816 = vld [vmem:[#allocation2 + $0x8] sm:$0xff]
    %v817 = vunpack.c.l.bf16 %v799
    %v818 = vunpack.c.l.bf16 %v800
    %v819 = vunpack.c.l.bf16 %v801
    %v820 = vunpack.c.l.bf16 %v802
    %v821 = vunpack.c.l.bf16 %v803
    %v822 = vunpack.c.l.bf16 %v804
    %v823 = vunpack.c.l.bf16 %v805
    %v824 = vunpack.c.l.bf16 %v806
    %v825 = vunpack.c.l.bf16 %v807
    %v826 = vunpack.c.l.bf16 %v808
    %v827 = vunpack.c.l.bf16 %v809
    %v828 = vunpack.c.l.bf16 %v810
    %v829 = vunpack.c.l.bf16 %v811
    %v830 = vunpack.c.l.bf16 %v812
    %v831 = vunpack.c.l.bf16 %v813
    %v832 = vunpack.c.l.bf16 %v814
    %v833 = vrot.slane %v817, 4
    %v834 = vadd.f32 %v817, %v833
    %v835 = vrot.slane %v834, 2
    %v836 = vadd.f32 %v834, %v835
    %v837 = vrot.slane %v836, 1
    %v838 = vadd.f32 %v836, %v837
    %v839 = vrot.slane %v818, 4
    %v840 = vadd.f32 %v818, %v839
    %v841 = vrot.slane %v840, 2
    %v842 = vadd.f32 %v840, %v841
    %v843 = vrot.slane %v842, 1
    %v844 = vadd.f32 %v842, %v843
    %v845 = vrot.slane %v819, 4
    %v846 = vadd.f32 %v819, %v845
    %v847 = vrot.slane %v846, 2
    %v848 = vadd.f32 %v846, %v847
    %v849 = vrot.slane %v848, 1
    %v850 = vadd.f32 %v848, %v849
    %v851 = vrot.slane %v820, 4
    %v852 = vadd.f32 %v820, %v851
    %v853 = vrot.slane %v852, 2
    %v854 = vadd.f32 %v852, %v853
    %v855 = vrot.slane %v854, 1
    %v856 = vadd.f32 %v854, %v855
    %v857 = vrot.slane %v821, 4
    %v858 = vadd.f32 %v821, %v857
    %v859 = vrot.slane %v858, 2
    %v860 = vadd.f32 %v858, %v859
    %v861 = vrot.slane %v860, 1
    %v862 = vadd.f32 %v860, %v861
    %v863 = vrot.slane %v822, 4
    %v864 = vadd.f32 %v822, %v863
    %v865 = vrot.slane %v864, 2
    %v866 = vadd.f32 %v864, %v865
    %v867 = vrot.slane %v866, 1
    %v868 = vadd.f32 %v866, %v867
    %v869 = vrot.slane %v823, 4
    %v870 = vadd.f32 %v823, %v869
    %v871 = vrot.slane %v870, 2
    %v872 = vadd.f32 %v870, %v871
    %v873 = vrot.slane %v872, 1
    %v874 = vadd.f32 %v872, %v873
    %v875 = vrot.slane %v824, 4
    %v876 = vadd.f32 %v824, %v875
    %v877 = vrot.slane %v876, 2
    %v878 = vadd.f32 %v876, %v877
    %v879 = vrot.slane %v878, 1
    %v880 = vadd.f32 %v878, %v879
    %v881 = vrot.slane %v825, 4
    %v882 = vadd.f32 %v825, %v881
    %v883 = vrot.slane %v882, 2
    %v884 = vadd.f32 %v882, %v883
    %v885 = vrot.slane %v884, 1
    %v886 = vadd.f32 %v884, %v885
    %v887 = vrot.slane %v826, 4
    %v888 = vadd.f32 %v826, %v887
    %v889 = vrot.slane %v888, 2
    %v890 = vadd.f32 %v888, %v889
    %v891 = vrot.slane %v890, 1
    %v892 = vadd.f32 %v890, %v891
    %v893 = vrot.slane %v827, 4
    %v894 = vadd.f32 %v827, %v893
    %v895 = vrot.slane %v894, 2
    %v896 = vadd.f32 %v894, %v895
    %v897 = vrot.slane %v896, 1
    %v898 = vadd.f32 %v896, %v897
    %v899 = vrot.slane %v828, 4
    %v900 = vadd.f32 %v828, %v899
    %v901 = vrot.slane %v900, 2
    %v902 = vadd.f32 %v900, %v901
    %v903 = vrot.slane %v902, 1
    %v904 = vadd.f32 %v902, %v903
    %v905 = vrot.slane %v829, 4
    %v906 = vadd.f32 %v829, %v905
    %v907 = vrot.slane %v906, 2
    %v908 = vadd.f32 %v906, %v907
    %v909 = vrot.slane %v908, 1
    %v910 = vadd.f32 %v908, %v909
    %v911 = vrot.slane %v830, 4
    %v912 = vadd.f32 %v830, %v911
    %v913 = vrot.slane %v912, 2
    %v914 = vadd.f32 %v912, %v913
    %v915 = vrot.slane %v914, 1
    %v916 = vadd.f32 %v914, %v915
    %v917 = vrot.slane %v831, 4
    %v918 = vadd.f32 %v831, %v917
    %v919 = vrot.slane %v918, 2
    %v920 = vadd.f32 %v918, %v919
    %v921 = vrot.slane %v920, 1
    %v922 = vadd.f32 %v920, %v921
    %v923 = vrot.slane %v832, 4
    %v924 = vadd.f32 %v832, %v923
    %v925 = vrot.slane %v924, 2
    %v926 = vadd.f32 %v924, %v925
    %v927 = vrot.slane %v926, 1
    %v928 = vadd.f32 %v926, %v927
    %v929 = vpack.c.bf16 %v838, %v838
    %v930 = vpack.c.bf16 %v844, %v844
    %v931 = vpack.c.bf16 %v850, %v850
    %v932 = vpack.c.bf16 %v856, %v856
    %v933 = vpack.c.bf16 %v862, %v862
    %v934 = vpack.c.bf16 %v868, %v868
    %v935 = vpack.c.bf16 %v874, %v874
    %v936 = vpack.c.bf16 %v880, %v880
    %v937 = vpack.c.bf16 %v886, %v886
    %v938 = vpack.c.bf16 %v892, %v892
    %v939 = vpack.c.bf16 %v898, %v898
    %v940 = vpack.c.bf16 %v904, %v904
    %v941 = vpack.c.bf16 %v910, %v910
    %v942 = vpack.c.bf16 %v916, %v916
    %v943 = vpack.c.bf16 %v922, %v922
    %v944 = vpack.c.bf16 %v928, %v928
    %v945 = vunpack.c.l.bf16 %v929
    %v946 = vunpack.c.l.bf16 %v930
    %v947 = vunpack.c.l.bf16 %v931
    %v948 = vunpack.c.l.bf16 %v932
    %v949 = vunpack.c.l.bf16 %v933
    %v950 = vunpack.c.l.bf16 %v934
    %v951 = vunpack.c.l.bf16 %v935
    %v952 = vunpack.c.l.bf16 %v936
    %v953 = vunpack.c.l.bf16 %v937
    %v954 = vunpack.c.l.bf16 %v938
    %v955 = vunpack.c.l.bf16 %v939
    %v956 = vunpack.c.l.bf16 %v940
    %v957 = vunpack.c.l.bf16 %v941
    %v958 = vunpack.c.l.bf16 %v942
    %v959 = vunpack.c.l.bf16 %v943
    %v960 = vunpack.c.l.bf16 %v944
    %v977 = vsel %vm348, %v947, %v945
    %v978 = vsel %vm350, %v949, %v977
    %v979 = vsel %vm352, %v951, %v978
    %v980 = vsel %vm354, %v953, %v979
    %v981 = vsel %vm356, %v955, %v980
    %v982 = vsel %vm358, %v957, %v981
    %v983 = vsel %vm360, %v959, %v982
    %v984 = vsel %vm348, %v948, %v946
    %v985 = vsel %vm350, %v950, %v984
    %v986 = vsel %vm352, %v952, %v985
    %v987 = vsel %vm354, %v954, %v986
    %v988 = vsel %vm356, %v956, %v987
    %v989 = vsel %vm358, %v958, %v988
    %v990 = vsel %vm360, %v960, %v989
    %v993 = vadd.f32 %v815, %v983
    %v994 = vadd.f32 %v816, %v990
    %995 = vst [vmem:[#allocation2] sm:$0xff] %v993
    %996 = vst [vmem:[#allocation2 + $0x8] sm:$0xff] %v994
    %v997 = vld [vmem:[#allocation3] sm:$0xff]
    %v998 = vlaneseq
    %v999 = vshrl.u32 %v998, 7
    %v1000 = vsub.s32 0, %v999
    %v1001 = vrot.slane %v997, %v1000
    %s1003 = sor.u32 256, 24
    %1004 = vbcast.lane.b32.xlu0 %v1001, %s1003
    %v1005 = vpop.permute.xlu0 %1004
    %v1006 = vlaneseq
    %v1007 = vshrl.u32 %v1006, 7
    %v1008 = vsub.s32 1, %v1007
    %v1009 = vrot.slane %v997, %v1008
    %s1011 = sor.u32 256, 24
    %1012 = vbcast.lane.b32.xlu0 %v1009, %s1011
    %v1013 = vpop.permute.xlu0 %1012
    %v1014 = vlaneseq
    %v1015 = vshrl.u32 %v1014, 7
    %v1016 = vsub.s32 2, %v1015
    %v1017 = vrot.slane %v997, %v1016
    %s1019 = sor.u32 256, 24
    %1020 = vbcast.lane.b32.xlu0 %v1017, %s1019
    %v1021 = vpop.permute.xlu0 %1020
    %v1022 = vlaneseq
    %v1023 = vshrl.u32 %v1022, 7
    %v1024 = vsub.s32 3, %v1023
    %v1025 = vrot.slane %v997, %v1024
    %s1027 = sor.u32 256, 24
    %1028 = vbcast.lane.b32.xlu0 %v1025, %s1027
    %v1029 = vpop.permute.xlu0 %1028
    %v1030 = vlaneseq
    %v1031 = vshrl.u32 %v1030, 7
    %v1032 = vsub.s32 4, %v1031
    %v1033 = vrot.slane %v997, %v1032
    %s1035 = sor.u32 256, 24
    %1036 = vbcast.lane.b32.xlu0 %v1033, %s1035
    %v1037 = vpop.permute.xlu0 %1036
    %v1038 = vlaneseq
    %v1039 = vshrl.u32 %v1038, 7
    %v1040 = vsub.s32 5, %v1039
    %v1041 = vrot.slane %v997, %v1040
    %s1043 = sor.u32 256, 24
    %1044 = vbcast.lane.b32.xlu0 %v1041, %s1043
    %v1045 = vpop.permute.xlu0 %1044
    %v1046 = vlaneseq
    %v1047 = vshrl.u32 %v1046, 7
    %v1048 = vsub.s32 6, %v1047
    %v1049 = vrot.slane %v997, %v1048
    %s1051 = sor.u32 256, 24
    %1052 = vbcast.lane.b32.xlu0 %v1049, %s1051
    %v1053 = vpop.permute.xlu0 %1052
    %v1054 = vlaneseq
    %v1055 = vshrl.u32 %v1054, 7
    %v1056 = vsub.s32 7, %v1055
    %v1057 = vrot.slane %v997, %v1056
    %s1059 = sor.u32 256, 24
    %1060 = vbcast.lane.b32.xlu0 %v1057, %s1059
    %v1061 = vpop.permute.xlu0 %1060
    %vm1062 = vcmp.eq.s32.totalorder %v1005, %v63
    %vm1063 = vcmp.eq.s32.totalorder %v1005, %v64
    %vm1064 = vcmp.eq.s32.totalorder %v1013, %v63
    %vm1065 = vcmp.eq.s32.totalorder %v1013, %v64
    %vm1066 = vcmp.eq.s32.totalorder %v1021, %v63
    %vm1067 = vcmp.eq.s32.totalorder %v1021, %v64
    %vm1068 = vcmp.eq.s32.totalorder %v1029, %v63
    %vm1069 = vcmp.eq.s32.totalorder %v1029, %v64
    %vm1070 = vcmp.eq.s32.totalorder %v1037, %v63
    %vm1071 = vcmp.eq.s32.totalorder %v1037, %v64
    %vm1072 = vcmp.eq.s32.totalorder %v1045, %v63
    %vm1073 = vcmp.eq.s32.totalorder %v1045, %v64
    %vm1074 = vcmp.eq.s32.totalorder %v1053, %v63
    %vm1075 = vcmp.eq.s32.totalorder %v1053, %v64
    %vm1076 = vcmp.eq.s32.totalorder %v1061, %v63
    %vm1077 = vcmp.eq.s32.totalorder %v1061, %v64
    %v1078 = vsel %vm1062, 1, 0
    %v1079 = vsel %vm1063, 1, 0
    %v1080 = vsel %vm1064, 1, 0
    %v1081 = vsel %vm1065, 1, 0
    %v1082 = vsel %vm1066, 1, 0
    %v1083 = vsel %vm1067, 1, 0
    %v1084 = vsel %vm1068, 1, 0
    %v1085 = vsel %vm1069, 1, 0
    %v1086 = vsel %vm1070, 1, 0
    %v1087 = vsel %vm1071, 1, 0
    %v1088 = vsel %vm1072, 1, 0
    %v1089 = vsel %vm1073, 1, 0
    %v1090 = vsel %vm1074, 1, 0
    %v1091 = vsel %vm1075, 1, 0
    %v1092 = vsel %vm1076, 1, 0
    %v1093 = vsel %vm1077, 1, 0
    %v1094 = vcvt.s32.f32 %v1078
    %v1095 = vcvt.s32.f32 %v1079
    %v1096 = vcvt.s32.f32 %v1080
    %v1097 = vcvt.s32.f32 %v1081
    %v1098 = vcvt.s32.f32 %v1082
    %v1099 = vcvt.s32.f32 %v1083
    %v1100 = vcvt.s32.f32 %v1084
    %v1101 = vcvt.s32.f32 %v1085
    %v1102 = vcvt.s32.f32 %v1086
    %v1103 = vcvt.s32.f32 %v1087
    %v1104 = vcvt.s32.f32 %v1088
    %v1105 = vcvt.s32.f32 %v1089
    %v1106 = vcvt.s32.f32 %v1090
    %v1107 = vcvt.s32.f32 %v1091
    %v1108 = vcvt.s32.f32 %v1092
    %v1109 = vcvt.s32.f32 %v1093
    %v1110 = vpack.c.bf16 %v1094, %v1094
    %v1111 = vpack.c.bf16 %v1095, %v1095
    %v1112 = vpack.c.bf16 %v1096, %v1096
    %v1113 = vpack.c.bf16 %v1097, %v1097
    %v1114 = vpack.c.bf16 %v1098, %v1098
    %v1115 = vpack.c.bf16 %v1099, %v1099
    %v1116 = vpack.c.bf16 %v1100, %v1100
    %v1117 = vpack.c.bf16 %v1101, %v1101
    %v1118 = vpack.c.bf16 %v1102, %v1102
    %v1119 = vpack.c.bf16 %v1103, %v1103
    %v1120 = vpack.c.bf16 %v1104, %v1104
    %v1121 = vpack.c.bf16 %v1105, %v1105
    %v1122 = vpack.c.bf16 %v1106, %v1106
    %v1123 = vpack.c.bf16 %v1107, %v1107
    %v1124 = vpack.c.bf16 %v1108, %v1108
    %v1125 = vpack.c.bf16 %v1109, %v1109
    %v1126 = vld [vmem:[#allocation2] sm:$0xff]
    %v1127 = vld [vmem:[#allocation2 + $0x8] sm:$0xff]
    %v1128 = vunpack.c.l.bf16 %v1110
    %v1129 = vunpack.c.l.bf16 %v1111
    %v1130 = vunpack.c.l.bf16 %v1112
    %v1131 = vunpack.c.l.bf16 %v1113
    %v1132 = vunpack.c.l.bf16 %v1114
    %v1133 = vunpack.c.l.bf16 %v1115
    %v1134 = vunpack.c.l.bf16 %v1116
    %v1135 = vunpack.c.l.bf16 %v1117
    %v1136 = vunpack.c.l.bf16 %v1118
    %v1137 = vunpack.c.l.bf16 %v1119
    %v1138 = vunpack.c.l.bf16 %v1120
    %v1139 = vunpack.c.l.bf16 %v1121
    %v1140 = vunpack.c.l.bf16 %v1122
    %v1141 = vunpack.c.l.bf16 %v1123
    %v1142 = vunpack.c.l.bf16 %v1124
    %v1143 = vunpack.c.l.bf16 %v1125
    %v1144 = vrot.slane %v1128, 4
    %v1145 = vadd.f32 %v1128, %v1144
    %v1146 = vrot.slane %v1145, 2
    %v1147 = vadd.f32 %v1145, %v1146
    %v1148 = vrot.slane %v1147, 1
    %v1149 = vadd.f32 %v1147, %v1148
    %v1150 = vrot.slane %v1129, 4
    %v1151 = vadd.f32 %v1129, %v1150
    %v1152 = vrot.slane %v1151, 2
    %v1153 = vadd.f32 %v1151, %v1152
    %v1154 = vrot.slane %v1153, 1
    %v1155 = vadd.f32 %v1153, %v1154
    %v1156 = vrot.slane %v1130, 4
    %v1157 = vadd.f32 %v1130, %v1156
    %v1158 = vrot.slane %v1157, 2
    %v1159 = vadd.f32 %v1157, %v1158
    %v1160 = vrot.slane %v1159, 1
    %v1161 = vadd.f32 %v1159, %v1160
    %v1162 = vrot.slane %v1131, 4
    %v1163 = vadd.f32 %v1131, %v1162
    %v1164 = vrot.slane %v1163, 2
    %v1165 = vadd.f32 %v1163, %v1164
    %v1166 = vrot.slane %v1165, 1
    %v1167 = vadd.f32 %v1165, %v1166
    %v1168 = vrot.slane %v1132, 4
    %v1169 = vadd.f32 %v1132, %v1168
    %v1170 = vrot.slane %v1169, 2
    %v1171 = vadd.f32 %v1169, %v1170
    %v1172 = vrot.slane %v1171, 1
    %v1173 = vadd.f32 %v1171, %v1172
    %v1174 = vrot.slane %v1133, 4
    %v1175 = vadd.f32 %v1133, %v1174
    %v1176 = vrot.slane %v1175, 2
    %v1177 = vadd.f32 %v1175, %v1176
    %v1178 = vrot.slane %v1177, 1
    %v1179 = vadd.f32 %v1177, %v1178
    %v1180 = vrot.slane %v1134, 4
    %v1181 = vadd.f32 %v1134, %v1180
    %v1182 = vrot.slane %v1181, 2
    %v1183 = vadd.f32 %v1181, %v1182
    %v1184 = vrot.slane %v1183, 1
    %v1185 = vadd.f32 %v1183, %v1184
    %v1186 = vrot.slane %v1135, 4
    %v1187 = vadd.f32 %v1135, %v1186
    %v1188 = vrot.slane %v1187, 2
    %v1189 = vadd.f32 %v1187, %v1188
    %v1190 = vrot.slane %v1189, 1
    %v1191 = vadd.f32 %v1189, %v1190
    %v1192 = vrot.slane %v1136, 4
    %v1193 = vadd.f32 %v1136, %v1192
    %v1194 = vrot.slane %v1193, 2
    %v1195 = vadd.f32 %v1193, %v1194
    %v1196 = vrot.slane %v1195, 1
    %v1197 = vadd.f32 %v1195, %v1196
    %v1198 = vrot.slane %v1137, 4
    %v1199 = vadd.f32 %v1137, %v1198
    %v1200 = vrot.slane %v1199, 2
    %v1201 = vadd.f32 %v1199, %v1200
    %v1202 = vrot.slane %v1201, 1
    %v1203 = vadd.f32 %v1201, %v1202
    %v1204 = vrot.slane %v1138, 4
    %v1205 = vadd.f32 %v1138, %v1204
    %v1206 = vrot.slane %v1205, 2
    %v1207 = vadd.f32 %v1205, %v1206
    %v1208 = vrot.slane %v1207, 1
    %v1209 = vadd.f32 %v1207, %v1208
    %v1210 = vrot.slane %v1139, 4
    %v1211 = vadd.f32 %v1139, %v1210
    %v1212 = vrot.slane %v1211, 2
    %v1213 = vadd.f32 %v1211, %v1212
    %v1214 = vrot.slane %v1213, 1
    %v1215 = vadd.f32 %v1213, %v1214
    %v1216 = vrot.slane %v1140, 4
    %v1217 = vadd.f32 %v1140, %v1216
    %v1218 = vrot.slane %v1217, 2
    %v1219 = vadd.f32 %v1217, %v1218
    %v1220 = vrot.slane %v1219, 1
    %v1221 = vadd.f32 %v1219, %v1220
    %v1222 = vrot.slane %v1141, 4
    %v1223 = vadd.f32 %v1141, %v1222
    %v1224 = vrot.slane %v1223, 2
    %v1225 = vadd.f32 %v1223, %v1224
    %v1226 = vrot.slane %v1225, 1
    %v1227 = vadd.f32 %v1225, %v1226
    %v1228 = vrot.slane %v1142, 4
    %v1229 = vadd.f32 %v1142, %v1228
    %v1230 = vrot.slane %v1229, 2
    %v1231 = vadd.f32 %v1229, %v1230
    %v1232 = vrot.slane %v1231, 1
    %v1233 = vadd.f32 %v1231, %v1232
    %v1234 = vrot.slane %v1143, 4
    %v1235 = vadd.f32 %v1143, %v1234
    %v1236 = vrot.slane %v1235, 2
    %v1237 = vadd.f32 %v1235, %v1236
    %v1238 = vrot.slane %v1237, 1
    %v1239 = vadd.f32 %v1237, %v1238
    %v1240 = vpack.c.bf16 %v1149, %v1149
    %v1241 = vpack.c.bf16 %v1155, %v1155
    %v1242 = vpack.c.bf16 %v1161, %v1161
    %v1243 = vpack.c.bf16 %v1167, %v1167
    %v1244 = vpack.c.bf16 %v1173, %v1173
    %v1245 = vpack.c.bf16 %v1179, %v1179
    %v1246 = vpack.c.bf16 %v1185, %v1185
    %v1247 = vpack.c.bf16 %v1191, %v1191
    %v1248 = vpack.c.bf16 %v1197, %v1197
    %v1249 = vpack.c.bf16 %v1203, %v1203
    %v1250 = vpack.c.bf16 %v1209, %v1209
    %v1251 = vpack.c.bf16 %v1215, %v1215
    %v1252 = vpack.c.bf16 %v1221, %v1221
    %v1253 = vpack.c.bf16 %v1227, %v1227
    %v1254 = vpack.c.bf16 %v1233, %v1233
    %v1255 = vpack.c.bf16 %v1239, %v1239
    %v1256 = vunpack.c.l.bf16 %v1240
    %v1257 = vunpack.c.l.bf16 %v1241
    %v1258 = vunpack.c.l.bf16 %v1242
    %v1259 = vunpack.c.l.bf16 %v1243
    %v1260 = vunpack.c.l.bf16 %v1244
    %v1261 = vunpack.c.l.bf16 %v1245
    %v1262 = vunpack.c.l.bf16 %v1246
    %v1263 = vunpack.c.l.bf16 %v1247
    %v1264 = vunpack.c.l.bf16 %v1248
    %v1265 = vunpack.c.l.bf16 %v1249
    %v1266 = vunpack.c.l.bf16 %v1250
    %v1267 = vunpack.c.l.bf16 %v1251
    %v1268 = vunpack.c.l.bf16 %v1252
    %v1269 = vunpack.c.l.bf16 %v1253
    %v1270 = vunpack.c.l.bf16 %v1254
    %v1271 = vunpack.c.l.bf16 %v1255
    %v1288 = vsel %vm348, %v1258, %v1256
    %v1289 = vsel %vm350, %v1260, %v1288
    %v1290 = vsel %vm352, %v1262, %v1289
    %v1291 = vsel %vm354, %v1264, %v1290
    %v1292 = vsel %vm356, %v1266, %v1291
    %v1293 = vsel %vm358, %v1268, %v1292
    %v1294 = vsel %vm360, %v1270, %v1293
    %v1295 = vsel %vm348, %v1259, %v1257
    %v1296 = vsel %vm350, %v1261, %v1295
    %v1297 = vsel %vm352, %v1263, %v1296
    %v1298 = vsel %vm354, %v1265, %v1297
    %v1299 = vsel %vm356, %v1267, %v1298
    %v1300 = vsel %vm358, %v1269, %v1299
    %v1301 = vsel %vm360, %v1271, %v1300
    %v1304 = vadd.f32 %v1126, %v1294
    %v1305 = vadd.f32 %v1127, %v1301
    %1306 = vst [vmem:[#allocation2] sm:$0xff] %v1304
    %1307 = vst [vmem:[#allocation2 + $0x8] sm:$0xff] %v1305
    %v1308 = vld [vmem:[#allocation3] sm:$0xff]
    %v1309 = vlaneseq
    %v1310 = vshrl.u32 %v1309, 7
    %v1311 = vsub.s32 0, %v1310
    %v1312 = vrot.slane %v1308, %v1311
    %s1314 = sor.u32 256, 32
    %1315 = vbcast.lane.b32.xlu0 %v1312, %s1314
    %v1316 = vpop.permute.xlu0 %1315
    %v1317 = vlaneseq
    %v1318 = vshrl.u32 %v1317, 7
    %v1319 = vsub.s32 1, %v1318
    %v1320 = vrot.slane %v1308, %v1319
    %s1322 = sor.u32 256, 32
    %1323 = vbcast.lane.b32.xlu0 %v1320, %s1322
    %v1324 = vpop.permute.xlu0 %1323
    %v1325 = vlaneseq
    %v1326 = vshrl.u32 %v1325, 7
    %v1327 = vsub.s32 2, %v1326
    %v1328 = vrot.slane %v1308, %v1327
    %s1330 = sor.u32 256, 32
    %1331 = vbcast.lane.b32.xlu0 %v1328, %s1330
    %v1332 = vpop.permute.xlu0 %1331
    %v1333 = vlaneseq
    %v1334 = vshrl.u32 %v1333, 7
    %v1335 = vsub.s32 3, %v1334
    %v1336 = vrot.slane %v1308, %v1335
    %s1338 = sor.u32 256, 32
    %1339 = vbcast.lane.b32.xlu0 %v1336, %s1338
    %v1340 = vpop.permute.xlu0 %1339
    %v1341 = vlaneseq
    %v1342 = vshrl.u32 %v1341, 7
    %v1343 = vsub.s32 4, %v1342
    %v1344 = vrot.slane %v1308, %v1343
    %s1346 = sor.u32 256, 32
    %1347 = vbcast.lane.b32.xlu0 %v1344, %s1346
    %v1348 = vpop.permute.xlu0 %1347
    %v1349 = vlaneseq
    %v1350 = vshrl.u32 %v1349, 7
    %v1351 = vsub.s32 5, %v1350
    %v1352 = vrot.slane %v1308, %v1351
    %s1354 = sor.u32 256, 32
    %1355 = vbcast.lane.b32.xlu0 %v1352, %s1354
    %v1356 = vpop.permute.xlu0 %1355
    %v1357 = vlaneseq
    %v1358 = vshrl.u32 %v1357, 7
    %v1359 = vsub.s32 6, %v1358
    %v1360 = vrot.slane %v1308, %v1359
    %s1362 = sor.u32 256, 32
    %1363 = vbcast.lane.b32.xlu0 %v1360, %s1362
    %v1364 = vpop.permute.xlu0 %1363
    %v1365 = vlaneseq
    %v1366 = vshrl.u32 %v1365, 7
    %v1367 = vsub.s32 7, %v1366
    %v1368 = vrot.slane %v1308, %v1367
    %s1370 = sor.u32 256, 32
    %1371 = vbcast.lane.b32.xlu0 %v1368, %s1370
    %v1372 = vpop.permute.xlu0 %1371
    %vm1373 = vcmp.eq.s32.totalorder %v1316, %v63
    %vm1374 = vcmp.eq.s32.totalorder %v1316, %v64
    %vm1375 = vcmp.eq.s32.totalorder %v1324, %v63
    %vm1376 = vcmp.eq.s32.totalorder %v1324, %v64
    %vm1377 = vcmp.eq.s32.totalorder %v1332, %v63
    %vm1378 = vcmp.eq.s32.totalorder %v1332, %v64
    %vm1379 = vcmp.eq.s32.totalorder %v1340, %v63
    %vm1380 = vcmp.eq.s32.totalorder %v1340, %v64
    %vm1381 = vcmp.eq.s32.totalorder %v1348, %v63
    %vm1382 = vcmp.eq.s32.totalorder %v1348, %v64
    %vm1383 = vcmp.eq.s32.totalorder %v1356, %v63
    %vm1384 = vcmp.eq.s32.totalorder %v1356, %v64
    %vm1385 = vcmp.eq.s32.totalorder %v1364, %v63
    %vm1386 = vcmp.eq.s32.totalorder %v1364, %v64
    %vm1387 = vcmp.eq.s32.totalorder %v1372, %v63
    %vm1388 = vcmp.eq.s32.totalorder %v1372, %v64
    %v1389 = vsel %vm1373, 1, 0
    %v1390 = vsel %vm1374, 1, 0
    %v1391 = vsel %vm1375, 1, 0
    %v1392 = vsel %vm1376, 1, 0
    %v1393 = vsel %vm1377, 1, 0
    %v1394 = vsel %vm1378, 1, 0
    %v1395 = vsel %vm1379, 1, 0
    %v1396 = vsel %vm1380, 1, 0
    %v1397 = vsel %vm1381, 1, 0
    %v1398 = vsel %vm1382, 1, 0
    %v1399 = vsel %vm1383, 1, 0
    %v1400 = vsel %vm1384, 1, 0
    %v1401 = vsel %vm1385, 1, 0
    %v1402 = vsel %vm1386, 1, 0
    %v1403 = vsel %vm1387, 1, 0
    %v1404 = vsel %vm1388, 1, 0
    %v1405 = vcvt.s32.f32 %v1389
    %v1406 = vcvt.s32.f32 %v1390
    %v1407 = vcvt.s32.f32 %v1391
    %v1408 = vcvt.s32.f32 %v1392
    %v1409 = vcvt.s32.f32 %v1393
    %v1410 = vcvt.s32.f32 %v1394
    %v1411 = vcvt.s32.f32 %v1395
    %v1412 = vcvt.s32.f32 %v1396
    %v1413 = vcvt.s32.f32 %v1397
    %v1414 = vcvt.s32.f32 %v1398
    %v1415 = vcvt.s32.f32 %v1399
    %v1416 = vcvt.s32.f32 %v1400
    %v1417 = vcvt.s32.f32 %v1401
    %v1418 = vcvt.s32.f32 %v1402
    %v1419 = vcvt.s32.f32 %v1403
    %v1420 = vcvt.s32.f32 %v1404
    %v1421 = vpack.c.bf16 %v1405, %v1405
    %v1422 = vpack.c.bf16 %v1406, %v1406
    %v1423 = vpack.c.bf16 %v1407, %v1407
    %v1424 = vpack.c.bf16 %v1408, %v1408
    %v1425 = vpack.c.bf16 %v1409, %v1409
    %v1426 = vpack.c.bf16 %v1410, %v1410
    %v1427 = vpack.c.bf16 %v1411, %v1411
    %v1428 = vpack.c.bf16 %v1412, %v1412
    %v1429 = vpack.c.bf16 %v1413, %v1413
    %v1430 = vpack.c.bf16 %v1414, %v1414
    %v1431 = vpack.c.bf16 %v1415, %v1415
    %v1432 = vpack.c.bf16 %v1416, %v1416
    %v1433 = vpack.c.bf16 %v1417, %v1417
    %v1434 = vpack.c.bf16 %v1418, %v1418
    %v1435 = vpack.c.bf16 %v1419, %v1419
    %v1436 = vpack.c.bf16 %v1420, %v1420
    %v1437 = vld [vmem:[#allocation2] sm:$0xff]
    %v1438 = vld [vmem:[#allocation2 + $0x8] sm:$0xff]
    %v1439 = vunpack.c.l.bf16 %v1421
    %v1440 = vunpack.c.l.bf16 %v1422
    %v1441 = vunpack.c.l.bf16 %v1423
    %v1442 = vunpack.c.l.bf16 %v1424
    %v1443 = vunpack.c.l.bf16 %v1425
    %v1444 = vunpack.c.l.bf16 %v1426
    %v1445 = vunpack.c.l.bf16 %v1427
    %v1446 = vunpack.c.l.bf16 %v1428
    %v1447 = vunpack.c.l.bf16 %v1429
    %v1448 = vunpack.c.l.bf16 %v1430
    %v1449 = vunpack.c.l.bf16 %v1431
    %v1450 = vunpack.c.l.bf16 %v1432
    %v1451 = vunpack.c.l.bf16 %v1433
    %v1452 = vunpack.c.l.bf16 %v1434
    %v1453 = vunpack.c.l.bf16 %v1435
    %v1454 = vunpack.c.l.bf16 %v1436
    %v1455 = vrot.slane %v1439, 4
    %v1456 = vadd.f32 %v1439, %v1455
    %v1457 = vrot.slane %v1456, 2
    %v1458 = vadd.f32 %v1456, %v1457
    %v1459 = vrot.slane %v1458, 1
    %v1460 = vadd.f32 %v1458, %v1459
    %v1461 = vrot.slane %v1440, 4
    %v1462 = vadd.f32 %v1440, %v1461
    %v1463 = vrot.slane %v1462, 2
    %v1464 = vadd.f32 %v1462, %v1463
    %v1465 = vrot.slane %v1464, 1
    %v1466 = vadd.f32 %v1464, %v1465
    %v1467 = vrot.slane %v1441, 4
    %v1468 = vadd.f32 %v1441, %v1467
    %v1469 = vrot.slane %v1468, 2
    %v1470 = vadd.f32 %v1468, %v1469
    %v1471 = vrot.slane %v1470, 1
    %v1472 = vadd.f32 %v1470, %v1471
    %v1473 = vrot.slane %v1442, 4
    %v1474 = vadd.f32 %v1442, %v1473
    %v1475 = vrot.slane %v1474, 2
    %v1476 = vadd.f32 %v1474, %v1475
    %v1477 = vrot.slane %v1476, 1
    %v1478 = vadd.f32 %v1476, %v1477
    %v1479 = vrot.slane %v1443, 4
    %v1480 = vadd.f32 %v1443, %v1479
    %v1481 = vrot.slane %v1480, 2
    %v1482 = vadd.f32 %v1480, %v1481
    %v1483 = vrot.slane %v1482, 1
    %v1484 = vadd.f32 %v1482, %v1483
    %v1485 = vrot.slane %v1444, 4
    %v1486 = vadd.f32 %v1444, %v1485
    %v1487 = vrot.slane %v1486, 2
    %v1488 = vadd.f32 %v1486, %v1487
    %v1489 = vrot.slane %v1488, 1
    %v1490 = vadd.f32 %v1488, %v1489
    %v1491 = vrot.slane %v1445, 4
    %v1492 = vadd.f32 %v1445, %v1491
    %v1493 = vrot.slane %v1492, 2
    %v1494 = vadd.f32 %v1492, %v1493
    %v1495 = vrot.slane %v1494, 1
    %v1496 = vadd.f32 %v1494, %v1495
    %v1497 = vrot.slane %v1446, 4
    %v1498 = vadd.f32 %v1446, %v1497
    %v1499 = vrot.slane %v1498, 2
    %v1500 = vadd.f32 %v1498, %v1499
    %v1501 = vrot.slane %v1500, 1
    %v1502 = vadd.f32 %v1500, %v1501
    %v1503 = vrot.slane %v1447, 4
    %v1504 = vadd.f32 %v1447, %v1503
    %v1505 = vrot.slane %v1504, 2
    %v1506 = vadd.f32 %v1504, %v1505
    %v1507 = vrot.slane %v1506, 1
    %v1508 = vadd.f32 %v1506, %v1507
    %v1509 = vrot.slane %v1448, 4
    %v1510 = vadd.f32 %v1448, %v1509
    %v1511 = vrot.slane %v1510, 2
    %v1512 = vadd.f32 %v1510, %v1511
    %v1513 = vrot.slane %v1512, 1
    %v1514 = vadd.f32 %v1512, %v1513
    %v1515 = vrot.slane %v1449, 4
    %v1516 = vadd.f32 %v1449, %v1515
    %v1517 = vrot.slane %v1516, 2
    %v1518 = vadd.f32 %v1516, %v1517
    %v1519 = vrot.slane %v1518, 1
    %v1520 = vadd.f32 %v1518, %v1519
    %v1521 = vrot.slane %v1450, 4
    %v1522 = vadd.f32 %v1450, %v1521
    %v1523 = vrot.slane %v1522, 2
    %v1524 = vadd.f32 %v1522, %v1523
    %v1525 = vrot.slane %v1524, 1
    %v1526 = vadd.f32 %v1524, %v1525
    %v1527 = vrot.slane %v1451, 4
    %v1528 = vadd.f32 %v1451, %v1527
    %v1529 = vrot.slane %v1528, 2
    %v1530 = vadd.f32 %v1528, %v1529
    %v1531 = vrot.slane %v1530, 1
    %v1532 = vadd.f32 %v1530, %v1531
    %v1533 = vrot.slane %v1452, 4
    %v1534 = vadd.f32 %v1452, %v1533
    %v1535 = vrot.slane %v1534, 2
    %v1536 = vadd.f32 %v1534, %v1535
    %v1537 = vrot.slane %v1536, 1
    %v1538 = vadd.f32 %v1536, %v1537
    %v1539 = vrot.slane %v1453, 4
    %v1540 = vadd.f32 %v1453, %v1539
    %v1541 = vrot.slane %v1540, 2
    %v1542 = vadd.f32 %v1540, %v1541
    %v1543 = vrot.slane %v1542, 1
    %v1544 = vadd.f32 %v1542, %v1543
    %v1545 = vrot.slane %v1454, 4
    %v1546 = vadd.f32 %v1454, %v1545
    %v1547 = vrot.slane %v1546, 2
    %v1548 = vadd.f32 %v1546, %v1547
    %v1549 = vrot.slane %v1548, 1
    %v1550 = vadd.f32 %v1548, %v1549
    %v1551 = vpack.c.bf16 %v1460, %v1460
    %v1552 = vpack.c.bf16 %v1466, %v1466
    %v1553 = vpack.c.bf16 %v1472, %v1472
    %v1554 = vpack.c.bf16 %v1478, %v1478
    %v1555 = vpack.c.bf16 %v1484, %v1484
    %v1556 = vpack.c.bf16 %v1490, %v1490
    %v1557 = vpack.c.bf16 %v1496, %v1496
    %v1558 = vpack.c.bf16 %v1502, %v1502
    %v1559 = vpack.c.bf16 %v1508, %v1508
    %v1560 = vpack.c.bf16 %v1514, %v1514
    %v1561 = vpack.c.bf16 %v1520, %v1520
    %v1562 = vpack.c.bf16 %v1526, %v1526
    %v1563 = vpack.c.bf16 %v1532, %v1532
    %v1564 = vpack.c.bf16 %v1538, %v1538
    %v1565 = vpack.c.bf16 %v1544, %v1544
    %v1566 = vpack.c.bf16 %v1550, %v1550
    %v1567 = vunpack.c.l.bf16 %v1551
    %v1568 = vunpack.c.l.bf16 %v1552
    %v1569 = vunpack.c.l.bf16 %v1553
    %v1570 = vunpack.c.l.bf16 %v1554
    %v1571 = vunpack.c.l.bf16 %v1555
    %v1572 = vunpack.c.l.bf16 %v1556
    %v1573 = vunpack.c.l.bf16 %v1557
    %v1574 = vunpack.c.l.bf16 %v1558
    %v1575 = vunpack.c.l.bf16 %v1559
    %v1576 = vunpack.c.l.bf16 %v1560
    %v1577 = vunpack.c.l.bf16 %v1561
    %v1578 = vunpack.c.l.bf16 %v1562
    %v1579 = vunpack.c.l.bf16 %v1563
    %v1580 = vunpack.c.l.bf16 %v1564
    %v1581 = vunpack.c.l.bf16 %v1565
    %v1582 = vunpack.c.l.bf16 %v1566
    %v1599 = vsel %vm348, %v1569, %v1567
    %v1600 = vsel %vm350, %v1571, %v1599
    %v1601 = vsel %vm352, %v1573, %v1600
    %v1602 = vsel %vm354, %v1575, %v1601
    %v1603 = vsel %vm356, %v1577, %v1602
    %v1604 = vsel %vm358, %v1579, %v1603
    %v1605 = vsel %vm360, %v1581, %v1604
    %v1606 = vsel %vm348, %v1570, %v1568
    %v1607 = vsel %vm350, %v1572, %v1606
    %v1608 = vsel %vm352, %v1574, %v1607
    %v1609 = vsel %vm354, %v1576, %v1608
    %v1610 = vsel %vm356, %v1578, %v1609
    %v1611 = vsel %vm358, %v1580, %v1610
    %v1612 = vsel %vm360, %v1582, %v1611
    %v1615 = vadd.f32 %v1437, %v1605
    %v1616 = vadd.f32 %v1438, %v1612
    %1617 = vst [vmem:[#allocation2] sm:$0xff] %v1615
    %1618 = vst [vmem:[#allocation2 + $0x8] sm:$0xff] %v1616
    %v1619 = vld [vmem:[#allocation3] sm:$0xff]
    %v1620 = vlaneseq
    %v1621 = vshrl.u32 %v1620, 7
    %v1622 = vsub.s32 0, %v1621
    %v1623 = vrot.slane %v1619, %v1622
    %s1625 = sor.u32 256, 40
    %1626 = vbcast.lane.b32.xlu0 %v1623, %s1625
    %v1627 = vpop.permute.xlu0 %1626
    %v1628 = vlaneseq
    %v1629 = vshrl.u32 %v1628, 7
    %v1630 = vsub.s32 1, %v1629
    %v1631 = vrot.slane %v1619, %v1630
    %s1633 = sor.u32 256, 40
    %1634 = vbcast.lane.b32.xlu0 %v1631, %s1633
    %v1635 = vpop.permute.xlu0 %1634
    %v1636 = vlaneseq
    %v1637 = vshrl.u32 %v1636, 7
    %v1638 = vsub.s32 2, %v1637
    %v1639 = vrot.slane %v1619, %v1638
    %s1641 = sor.u32 256, 40
    %1642 = vbcast.lane.b32.xlu0 %v1639, %s1641
    %v1643 = vpop.permute.xlu0 %1642
    %v1644 = vlaneseq
    %v1645 = vshrl.u32 %v1644, 7
    %v1646 = vsub.s32 3, %v1645
    %v1647 = vrot.slane %v1619, %v1646
    %s1649 = sor.u32 256, 40
    %1650 = vbcast.lane.b32.xlu0 %v1647, %s1649
    %v1651 = vpop.permute.xlu0 %1650
    %v1652 = vlaneseq
    %v1653 = vshrl.u32 %v1652, 7
    %v1654 = vsub.s32 4, %v1653
    %v1655 = vrot.slane %v1619, %v1654
    %s1657 = sor.u32 256, 40
    %1658 = vbcast.lane.b32.xlu0 %v1655, %s1657
    %v1659 = vpop.permute.xlu0 %1658
    %v1660 = vlaneseq
    %v1661 = vshrl.u32 %v1660, 7
    %v1662 = vsub.s32 5, %v1661
    %v1663 = vrot.slane %v1619, %v1662
    %s1665 = sor.u32 256, 40
    %1666 = vbcast.lane.b32.xlu0 %v1663, %s1665
    %v1667 = vpop.permute.xlu0 %1666
    %v1668 = vlaneseq
    %v1669 = vshrl.u32 %v1668, 7
    %v1670 = vsub.s32 6, %v1669
    %v1671 = vrot.slane %v1619, %v1670
    %s1673 = sor.u32 256, 40
    %1674 = vbcast.lane.b32.xlu0 %v1671, %s1673
    %v1675 = vpop.permute.xlu0 %1674
    %v1676 = vlaneseq
    %v1677 = vshrl.u32 %v1676, 7
    %v1678 = vsub.s32 7, %v1677
    %v1679 = vrot.slane %v1619, %v1678
    %s1681 = sor.u32 256, 40
    %1682 = vbcast.lane.b32.xlu0 %v1679, %s1681
    %v1683 = vpop.permute.xlu0 %1682
    %vm1684 = vcmp.eq.s32.totalorder %v1627, %v63
    %vm1685 = vcmp.eq.s32.totalorder %v1627, %v64
    %vm1686 = vcmp.eq.s32.totalorder %v1635, %v63
    %vm1687 = vcmp.eq.s32.totalorder %v1635, %v64
    %vm1688 = vcmp.eq.s32.totalorder %v1643, %v63
    %vm1689 = vcmp.eq.s32.totalorder %v1643, %v64
    %vm1690 = vcmp.eq.s32.totalorder %v1651, %v63
    %vm1691 = vcmp.eq.s32.totalorder %v1651, %v64
    %vm1692 = vcmp.eq.s32.totalorder %v1659, %v63
    %vm1693 = vcmp.eq.s32.totalorder %v1659, %v64
    %vm1694 = vcmp.eq.s32.totalorder %v1667, %v63
    %vm1695 = vcmp.eq.s32.totalorder %v1667, %v64
    %vm1696 = vcmp.eq.s32.totalorder %v1675, %v63
    %vm1697 = vcmp.eq.s32.totalorder %v1675, %v64
    %vm1698 = vcmp.eq.s32.totalorder %v1683, %v63
    %vm1699 = vcmp.eq.s32.totalorder %v1683, %v64
    %v1700 = vsel %vm1684, 1, 0
    %v1701 = vsel %vm1685, 1, 0
    %v1702 = vsel %vm1686, 1, 0
    %v1703 = vsel %vm1687, 1, 0
    %v1704 = vsel %vm1688, 1, 0
    %v1705 = vsel %vm1689, 1, 0
    %v1706 = vsel %vm1690, 1, 0
    %v1707 = vsel %vm1691, 1, 0
    %v1708 = vsel %vm1692, 1, 0
    %v1709 = vsel %vm1693, 1, 0
    %v1710 = vsel %vm1694, 1, 0
    %v1711 = vsel %vm1695, 1, 0
    %v1712 = vsel %vm1696, 1, 0
    %v1713 = vsel %vm1697, 1, 0
    %v1714 = vsel %vm1698, 1, 0
    %v1715 = vsel %vm1699, 1, 0
    %v1716 = vcvt.s32.f32 %v1700
    %v1717 = vcvt.s32.f32 %v1701
    %v1718 = vcvt.s32.f32 %v1702
    %v1719 = vcvt.s32.f32 %v1703
    %v1720 = vcvt.s32.f32 %v1704
    %v1721 = vcvt.s32.f32 %v1705
    %v1722 = vcvt.s32.f32 %v1706
    %v1723 = vcvt.s32.f32 %v1707
    %v1724 = vcvt.s32.f32 %v1708
    %v1725 = vcvt.s32.f32 %v1709
    %v1726 = vcvt.s32.f32 %v1710
    %v1727 = vcvt.s32.f32 %v1711
    %v1728 = vcvt.s32.f32 %v1712
    %v1729 = vcvt.s32.f32 %v1713
    %v1730 = vcvt.s32.f32 %v1714
    %v1731 = vcvt.s32.f32 %v1715
    %v1732 = vpack.c.bf16 %v1716, %v1716
    %v1733 = vpack.c.bf16 %v1717, %v1717
    %v1734 = vpack.c.bf16 %v1718, %v1718
    %v1735 = vpack.c.bf16 %v1719, %v1719
    %v1736 = vpack.c.bf16 %v1720, %v1720
    %v1737 = vpack.c.bf16 %v1721, %v1721
    %v1738 = vpack.c.bf16 %v1722, %v1722
    %v1739 = vpack.c.bf16 %v1723, %v1723
    %v1740 = vpack.c.bf16 %v1724, %v1724
    %v1741 = vpack.c.bf16 %v1725, %v1725
    %v1742 = vpack.c.bf16 %v1726, %v1726
    %v1743 = vpack.c.bf16 %v1727, %v1727
    %v1744 = vpack.c.bf16 %v1728, %v1728
    %v1745 = vpack.c.bf16 %v1729, %v1729
    %v1746 = vpack.c.bf16 %v1730, %v1730
    %v1747 = vpack.c.bf16 %v1731, %v1731
    %v1748 = vld [vmem:[#allocation2] sm:$0xff]
    %v1749 = vld [vmem:[#allocation2 + $0x8] sm:$0xff]
    %v1750 = vunpack.c.l.bf16 %v1732
    %v1751 = vunpack.c.l.bf16 %v1733
    %v1752 = vunpack.c.l.bf16 %v1734
    %v1753 = vunpack.c.l.bf16 %v1735
    %v1754 = vunpack.c.l.bf16 %v1736
    %v1755 = vunpack.c.l.bf16 %v1737
    %v1756 = vunpack.c.l.bf16 %v1738
    %v1757 = vunpack.c.l.bf16 %v1739
    %v1758 = vunpack.c.l.bf16 %v1740
    %v1759 = vunpack.c.l.bf16 %v1741
    %v1760 = vunpack.c.l.bf16 %v1742
    %v1761 = vunpack.c.l.bf16 %v1743
    %v1762 = vunpack.c.l.bf16 %v1744
    %v1763 = vunpack.c.l.bf16 %v1745
    %v1764 = vunpack.c.l.bf16 %v1746
    %v1765 = vunpack.c.l.bf16 %v1747
    %v1766 = vrot.slane %v1750, 4
    %v1767 = vadd.f32 %v1750, %v1766
    %v1768 = vrot.slane %v1767, 2
    %v1769 = vadd.f32 %v1767, %v1768
    %v1770 = vrot.slane %v1769, 1
    %v1771 = vadd.f32 %v1769, %v1770
    %v1772 = vrot.slane %v1751, 4
    %v1773 = vadd.f32 %v1751, %v1772
    %v1774 = vrot.slane %v1773, 2
    %v1775 = vadd.f32 %v1773, %v1774
    %v1776 = vrot.slane %v1775, 1
    %v1777 = vadd.f32 %v1775, %v1776
    %v1778 = vrot.slane %v1752, 4
    %v1779 = vadd.f32 %v1752, %v1778
    %v1780 = vrot.slane %v1779, 2
    %v1781 = vadd.f32 %v1779, %v1780
    %v1782 = vrot.slane %v1781, 1
    %v1783 = vadd.f32 %v1781, %v1782
    %v1784 = vrot.slane %v1753, 4
    %v1785 = vadd.f32 %v1753, %v1784
    %v1786 = vrot.slane %v1785, 2
    %v1787 = vadd.f32 %v1785, %v1786
    %v1788 = vrot.slane %v1787, 1
    %v1789 = vadd.f32 %v1787, %v1788
    %v1790 = vrot.slane %v1754, 4
    %v1791 = vadd.f32 %v1754, %v1790
    %v1792 = vrot.slane %v1791, 2
    %v1793 = vadd.f32 %v1791, %v1792
    %v1794 = vrot.slane %v1793, 1
    %v1795 = vadd.f32 %v1793, %v1794
    %v1796 = vrot.slane %v1755, 4
    %v1797 = vadd.f32 %v1755, %v1796
    %v1798 = vrot.slane %v1797, 2
    %v1799 = vadd.f32 %v1797, %v1798
    %v1800 = vrot.slane %v1799, 1
    %v1801 = vadd.f32 %v1799, %v1800
    %v1802 = vrot.slane %v1756, 4
    %v1803 = vadd.f32 %v1756, %v1802
    %v1804 = vrot.slane %v1803, 2
    %v1805 = vadd.f32 %v1803, %v1804
    %v1806 = vrot.slane %v1805, 1
    %v1807 = vadd.f32 %v1805, %v1806
    %v1808 = vrot.slane %v1757, 4
    %v1809 = vadd.f32 %v1757, %v1808
    %v1810 = vrot.slane %v1809, 2
    %v1811 = vadd.f32 %v1809, %v1810
    %v1812 = vrot.slane %v1811, 1
    %v1813 = vadd.f32 %v1811, %v1812
    %v1814 = vrot.slane %v1758, 4
    %v1815 = vadd.f32 %v1758, %v1814
    %v1816 = vrot.slane %v1815, 2
    %v1817 = vadd.f32 %v1815, %v1816
    %v1818 = vrot.slane %v1817, 1
    %v1819 = vadd.f32 %v1817, %v1818
    %v1820 = vrot.slane %v1759, 4
    %v1821 = vadd.f32 %v1759, %v1820
    %v1822 = vrot.slane %v1821, 2
    %v1823 = vadd.f32 %v1821, %v1822
    %v1824 = vrot.slane %v1823, 1
    %v1825 = vadd.f32 %v1823, %v1824
    %v1826 = vrot.slane %v1760, 4
    %v1827 = vadd.f32 %v1760, %v1826
    %v1828 = vrot.slane %v1827, 2
    %v1829 = vadd.f32 %v1827, %v1828
    %v1830 = vrot.slane %v1829, 1
    %v1831 = vadd.f32 %v1829, %v1830
    %v1832 = vrot.slane %v1761, 4
    %v1833 = vadd.f32 %v1761, %v1832
    %v1834 = vrot.slane %v1833, 2
    %v1835 = vadd.f32 %v1833, %v1834
    %v1836 = vrot.slane %v1835, 1
    %v1837 = vadd.f32 %v1835, %v1836
    %v1838 = vrot.slane %v1762, 4
    %v1839 = vadd.f32 %v1762, %v1838
    %v1840 = vrot.slane %v1839, 2
    %v1841 = vadd.f32 %v1839, %v1840
    %v1842 = vrot.slane %v1841, 1
    %v1843 = vadd.f32 %v1841, %v1842
    %v1844 = vrot.slane %v1763, 4
    %v1845 = vadd.f32 %v1763, %v1844
    %v1846 = vrot.slane %v1845, 2
    %v1847 = vadd.f32 %v1845, %v1846
    %v1848 = vrot.slane %v1847, 1
    %v1849 = vadd.f32 %v1847, %v1848
    %v1850 = vrot.slane %v1764, 4
    %v1851 = vadd.f32 %v1764, %v1850
    %v1852 = vrot.slane %v1851, 2
    %v1853 = vadd.f32 %v1851, %v1852
    %v1854 = vrot.slane %v1853, 1
    %v1855 = vadd.f32 %v1853, %v1854
    %v1856 = vrot.slane %v1765, 4
    %v1857 = vadd.f32 %v1765, %v1856
    %v1858 = vrot.slane %v1857, 2
    %v1859 = vadd.f32 %v1857, %v1858
    %v1860 = vrot.slane %v1859, 1
    %v1861 = vadd.f32 %v1859, %v1860
    %v1862 = vpack.c.bf16 %v1771, %v1771
    %v1863 = vpack.c.bf16 %v1777, %v1777
    %v1864 = vpack.c.bf16 %v1783, %v1783
    %v1865 = vpack.c.bf16 %v1789, %v1789
    %v1866 = vpack.c.bf16 %v1795, %v1795
    %v1867 = vpack.c.bf16 %v1801, %v1801
    %v1868 = vpack.c.bf16 %v1807, %v1807
    %v1869 = vpack.c.bf16 %v1813, %v1813
    %v1870 = vpack.c.bf16 %v1819, %v1819
    %v1871 = vpack.c.bf16 %v1825, %v1825
    %v1872 = vpack.c.bf16 %v1831, %v1831
    %v1873 = vpack.c.bf16 %v1837, %v1837
    %v1874 = vpack.c.bf16 %v1843, %v1843
    %v1875 = vpack.c.bf16 %v1849, %v1849
    %v1876 = vpack.c.bf16 %v1855, %v1855
    %v1877 = vpack.c.bf16 %v1861, %v1861
    %v1878 = vunpack.c.l.bf16 %v1862
    %v1879 = vunpack.c.l.bf16 %v1863
    %v1880 = vunpack.c.l.bf16 %v1864
    %v1881 = vunpack.c.l.bf16 %v1865
    %v1882 = vunpack.c.l.bf16 %v1866
    %v1883 = vunpack.c.l.bf16 %v1867
    %v1884 = vunpack.c.l.bf16 %v1868
    %v1885 = vunpack.c.l.bf16 %v1869
    %v1886 = vunpack.c.l.bf16 %v1870
    %v1887 = vunpack.c.l.bf16 %v1871
    %v1888 = vunpack.c.l.bf16 %v1872
    %v1889 = vunpack.c.l.bf16 %v1873
    %v1890 = vunpack.c.l.bf16 %v1874
    %v1891 = vunpack.c.l.bf16 %v1875
    %v1892 = vunpack.c.l.bf16 %v1876
    %v1893 = vunpack.c.l.bf16 %v1877
    %v1910 = vsel %vm348, %v1880, %v1878
    %v1911 = vsel %vm350, %v1882, %v1910
    %v1912 = vsel %vm352, %v1884, %v1911
    %v1913 = vsel %vm354, %v1886, %v1912
    %v1914 = vsel %vm356, %v1888, %v1913
    %v1915 = vsel %vm358, %v1890, %v1914
    %v1916 = vsel %vm360, %v1892, %v1915
    %v1917 = vsel %vm348, %v1881, %v1879
    %v1918 = vsel %vm350, %v1883, %v1917
    %v1919 = vsel %vm352, %v1885, %v1918
    %v1920 = vsel %vm354, %v1887, %v1919
    %v1921 = vsel %vm356, %v1889, %v1920
    %v1922 = vsel %vm358, %v1891, %v1921
    %v1923 = vsel %vm360, %v1893, %v1922
    %v1926 = vadd.f32 %v1748, %v1916
    %v1927 = vadd.f32 %v1749, %v1923
    %1928 = vst [vmem:[#allocation2] sm:$0xff] %v1926
    %1929 = vst [vmem:[#allocation2 + $0x8] sm:$0xff] %v1927
    %v1930 = vld [vmem:[#allocation3] sm:$0xff]
    %v1931 = vlaneseq
    %v1932 = vshrl.u32 %v1931, 7
    %v1933 = vsub.s32 0, %v1932
    %v1934 = vrot.slane %v1930, %v1933
    %s1936 = sor.u32 256, 48
    %1937 = vbcast.lane.b32.xlu0 %v1934, %s1936
    %v1938 = vpop.permute.xlu0 %1937
    %v1939 = vlaneseq
    %v1940 = vshrl.u32 %v1939, 7
    %v1941 = vsub.s32 1, %v1940
    %v1942 = vrot.slane %v1930, %v1941
    %s1944 = sor.u32 256, 48
    %1945 = vbcast.lane.b32.xlu0 %v1942, %s1944
    %v1946 = vpop.permute.xlu0 %1945
    %v1947 = vlaneseq
    %v1948 = vshrl.u32 %v1947, 7
    %v1949 = vsub.s32 2, %v1948
    %v1950 = vrot.slane %v1930, %v1949
    %s1952 = sor.u32 256, 48
    %1953 = vbcast.lane.b32.xlu0 %v1950, %s1952
    %v1954 = vpop.permute.xlu0 %1953
    %v1955 = vlaneseq
    %v1956 = vshrl.u32 %v1955, 7
    %v1957 = vsub.s32 3, %v1956
    %v1958 = vrot.slane %v1930, %v1957
    %s1960 = sor.u32 256, 48
    %1961 = vbcast.lane.b32.xlu0 %v1958, %s1960
    %v1962 = vpop.permute.xlu0 %1961
    %v1963 = vlaneseq
    %v1964 = vshrl.u32 %v1963, 7
    %v1965 = vsub.s32 4, %v1964
    %v1966 = vrot.slane %v1930, %v1965
    %s1968 = sor.u32 256, 48
    %1969 = vbcast.lane.b32.xlu0 %v1966, %s1968
    %v1970 = vpop.permute.xlu0 %1969
    %v1971 = vlaneseq
    %v1972 = vshrl.u32 %v1971, 7
    %v1973 = vsub.s32 5, %v1972
    %v1974 = vrot.slane %v1930, %v1973
    %s1976 = sor.u32 256, 48
    %1977 = vbcast.lane.b32.xlu0 %v1974, %s1976
    %v1978 = vpop.permute.xlu0 %1977
    %v1979 = vlaneseq
    %v1980 = vshrl.u32 %v1979, 7
    %v1981 = vsub.s32 6, %v1980
    %v1982 = vrot.slane %v1930, %v1981
    %s1984 = sor.u32 256, 48
    %1985 = vbcast.lane.b32.xlu0 %v1982, %s1984
    %v1986 = vpop.permute.xlu0 %1985
    %v1987 = vlaneseq
    %v1988 = vshrl.u32 %v1987, 7
    %v1989 = vsub.s32 7, %v1988
    %v1990 = vrot.slane %v1930, %v1989
    %s1992 = sor.u32 256, 48
    %1993 = vbcast.lane.b32.xlu0 %v1990, %s1992
    %v1994 = vpop.permute.xlu0 %1993
    %vm1995 = vcmp.eq.s32.totalorder %v1938, %v63
    %vm1996 = vcmp.eq.s32.totalorder %v1938, %v64
    %vm1997 = vcmp.eq.s32.totalorder %v1946, %v63
    %vm1998 = vcmp.eq.s32.totalorder %v1946, %v64
    %vm1999 = vcmp.eq.s32.totalorder %v1954, %v63
    %vm2000 = vcmp.eq.s32.totalorder %v1954, %v64
    %vm2001 = vcmp.eq.s32.totalorder %v1962, %v63
    %vm2002 = vcmp.eq.s32.totalorder %v1962, %v64
    %vm2003 = vcmp.eq.s32.totalorder %v1970, %v63
    %vm2004 = vcmp.eq.s32.totalorder %v1970, %v64
    %vm2005 = vcmp.eq.s32.totalorder %v1978, %v63
    %vm2006 = vcmp.eq.s32.totalorder %v1978, %v64
    %vm2007 = vcmp.eq.s32.totalorder %v1986, %v63
    %vm2008 = vcmp.eq.s32.totalorder %v1986, %v64
    %vm2009 = vcmp.eq.s32.totalorder %v1994, %v63
    %vm2010 = vcmp.eq.s32.totalorder %v1994, %v64
    %v2011 = vsel %vm1995, 1, 0
    %v2012 = vsel %vm1996, 1, 0
    %v2013 = vsel %vm1997, 1, 0
    %v2014 = vsel %vm1998, 1, 0
    %v2015 = vsel %vm1999, 1, 0
    %v2016 = vsel %vm2000, 1, 0
    %v2017 = vsel %vm2001, 1, 0
    %v2018 = vsel %vm2002, 1, 0
    %v2019 = vsel %vm2003, 1, 0
    %v2020 = vsel %vm2004, 1, 0
    %v2021 = vsel %vm2005, 1, 0
    %v2022 = vsel %vm2006, 1, 0
    %v2023 = vsel %vm2007, 1, 0
    %v2024 = vsel %vm2008, 1, 0
    %v2025 = vsel %vm2009, 1, 0
    %v2026 = vsel %vm2010, 1, 0
    %v2027 = vcvt.s32.f32 %v2011
    %v2028 = vcvt.s32.f32 %v2012
    %v2029 = vcvt.s32.f32 %v2013
    %v2030 = vcvt.s32.f32 %v2014
    %v2031 = vcvt.s32.f32 %v2015
    %v2032 = vcvt.s32.f32 %v2016
    %v2033 = vcvt.s32.f32 %v2017
    %v2034 = vcvt.s32.f32 %v2018
    %v2035 = vcvt.s32.f32 %v2019
    %v2036 = vcvt.s32.f32 %v2020
    %v2037 = vcvt.s32.f32 %v2021
    %v2038 = vcvt.s32.f32 %v2022
    %v2039 = vcvt.s32.f32 %v2023
    %v2040 = vcvt.s32.f32 %v2024
    %v2041 = vcvt.s32.f32 %v2025
    %v2042 = vcvt.s32.f32 %v2026
    %v2043 = vpack.c.bf16 %v2027, %v2027
    %v2044 = vpack.c.bf16 %v2028, %v2028
    %v2045 = vpack.c.bf16 %v2029, %v2029
    %v2046 = vpack.c.bf16 %v2030, %v2030
    %v2047 = vpack.c.bf16 %v2031, %v2031
    %v2048 = vpack.c.bf16 %v2032, %v2032
    %v2049 = vpack.c.bf16 %v2033, %v2033
    %v2050 = vpack.c.bf16 %v2034, %v2034
    %v2051 = vpack.c.bf16 %v2035, %v2035
    %v2052 = vpack.c.bf16 %v2036, %v2036
    %v2053 = vpack.c.bf16 %v2037, %v2037
    %v2054 = vpack.c.bf16 %v2038, %v2038
    %v2055 = vpack.c.bf16 %v2039, %v2039
    %v2056 = vpack.c.bf16 %v2040, %v2040
    %v2057 = vpack.c.bf16 %v2041, %v2041
    %v2058 = vpack.c.bf16 %v2042, %v2042
    %v2059 = vld [vmem:[#allocation2] sm:$0xff]
    %v2060 = vld [vmem:[#allocation2 + $0x8] sm:$0xff]
    %v2061 = vunpack.c.l.bf16 %v2043
    %v2062 = vunpack.c.l.bf16 %v2044
    %v2063 = vunpack.c.l.bf16 %v2045
    %v2064 = vunpack.c.l.bf16 %v2046
    %v2065 = vunpack.c.l.bf16 %v2047
    %v2066 = vunpack.c.l.bf16 %v2048
    %v2067 = vunpack.c.l.bf16 %v2049
    %v2068 = vunpack.c.l.bf16 %v2050
    %v2069 = vunpack.c.l.bf16 %v2051
    %v2070 = vunpack.c.l.bf16 %v2052
    %v2071 = vunpack.c.l.bf16 %v2053
    %v2072 = vunpack.c.l.bf16 %v2054
    %v2073 = vunpack.c.l.bf16 %v2055
    %v2074 = vunpack.c.l.bf16 %v2056
    %v2075 = vunpack.c.l.bf16 %v2057
    %v2076 = vunpack.c.l.bf16 %v2058
    %v2077 = vrot.slane %v2061, 4
    %v2078 = vadd.f32 %v2061, %v2077
    %v2079 = vrot.slane %v2078, 2
    %v2080 = vadd.f32 %v2078, %v2079
    %v2081 = vrot.slane %v2080, 1
    %v2082 = vadd.f32 %v2080, %v2081
    %v2083 = vrot.slane %v2062, 4
    %v2084 = vadd.f32 %v2062, %v2083
    %v2085 = vrot.slane %v2084, 2
    %v2086 = vadd.f32 %v2084, %v2085
    %v2087 = vrot.slane %v2086, 1
    %v2088 = vadd.f32 %v2086, %v2087
    %v2089 = vrot.slane %v2063, 4
    %v2090 = vadd.f32 %v2063, %v2089
    %v2091 = vrot.slane %v2090, 2
    %v2092 = vadd.f32 %v2090, %v2091
    %v2093 = vrot.slane %v2092, 1
    %v2094 = vadd.f32 %v2092, %v2093
    %v2095 = vrot.slane %v2064, 4
    %v2096 = vadd.f32 %v2064, %v2095
    %v2097 = vrot.slane %v2096, 2
    %v2098 = vadd.f32 %v2096, %v2097
    %v2099 = vrot.slane %v2098, 1
    %v2100 = vadd.f32 %v2098, %v2099
    %v2101 = vrot.slane %v2065, 4
    %v2102 = vadd.f32 %v2065, %v2101
    %v2103 = vrot.slane %v2102, 2
    %v2104 = vadd.f32 %v2102, %v2103
    %v2105 = vrot.slane %v2104, 1
    %v2106 = vadd.f32 %v2104, %v2105
    %v2107 = vrot.slane %v2066, 4
    %v2108 = vadd.f32 %v2066, %v2107
    %v2109 = vrot.slane %v2108, 2
    %v2110 = vadd.f32 %v2108, %v2109
    %v2111 = vrot.slane %v2110, 1
    %v2112 = vadd.f32 %v2110, %v2111
    %v2113 = vrot.slane %v2067, 4
    %v2114 = vadd.f32 %v2067, %v2113
    %v2115 = vrot.slane %v2114, 2
    %v2116 = vadd.f32 %v2114, %v2115
    %v2117 = vrot.slane %v2116, 1
    %v2118 = vadd.f32 %v2116, %v2117
    %v2119 = vrot.slane %v2068, 4
    %v2120 = vadd.f32 %v2068, %v2119
    %v2121 = vrot.slane %v2120, 2
    %v2122 = vadd.f32 %v2120, %v2121
    %v2123 = vrot.slane %v2122, 1
    %v2124 = vadd.f32 %v2122, %v2123
    %v2125 = vrot.slane %v2069, 4
    %v2126 = vadd.f32 %v2069, %v2125
    %v2127 = vrot.slane %v2126, 2
    %v2128 = vadd.f32 %v2126, %v2127
    %v2129 = vrot.slane %v2128, 1
    %v2130 = vadd.f32 %v2128, %v2129
    %v2131 = vrot.slane %v2070, 4
    %v2132 = vadd.f32 %v2070, %v2131
    %v2133 = vrot.slane %v2132, 2
    %v2134 = vadd.f32 %v2132, %v2133
    %v2135 = vrot.slane %v2134, 1
    %v2136 = vadd.f32 %v2134, %v2135
    %v2137 = vrot.slane %v2071, 4
    %v2138 = vadd.f32 %v2071, %v2137
    %v2139 = vrot.slane %v2138, 2
    %v2140 = vadd.f32 %v2138, %v2139
    %v2141 = vrot.slane %v2140, 1
    %v2142 = vadd.f32 %v2140, %v2141
    %v2143 = vrot.slane %v2072, 4
    %v2144 = vadd.f32 %v2072, %v2143
    %v2145 = vrot.slane %v2144, 2
    %v2146 = vadd.f32 %v2144, %v2145
    %v2147 = vrot.slane %v2146, 1
    %v2148 = vadd.f32 %v2146, %v2147
    %v2149 = vrot.slane %v2073, 4
    %v2150 = vadd.f32 %v2073, %v2149
    %v2151 = vrot.slane %v2150, 2
    %v2152 = vadd.f32 %v2150, %v2151
    %v2153 = vrot.slane %v2152, 1
    %v2154 = vadd.f32 %v2152, %v2153
    %v2155 = vrot.slane %v2074, 4
    %v2156 = vadd.f32 %v2074, %v2155
    %v2157 = vrot.slane %v2156, 2
    %v2158 = vadd.f32 %v2156, %v2157
    %v2159 = vrot.slane %v2158, 1
    %v2160 = vadd.f32 %v2158, %v2159
    %v2161 = vrot.slane %v2075, 4
    %v2162 = vadd.f32 %v2075, %v2161
    %v2163 = vrot.slane %v2162, 2
    %v2164 = vadd.f32 %v2162, %v2163
    %v2165 = vrot.slane %v2164, 1
    %v2166 = vadd.f32 %v2164, %v2165
    %v2167 = vrot.slane %v2076, 4
    %v2168 = vadd.f32 %v2076, %v2167
    %v2169 = vrot.slane %v2168, 2
    %v2170 = vadd.f32 %v2168, %v2169
    %v2171 = vrot.slane %v2170, 1
    %v2172 = vadd.f32 %v2170, %v2171
    %v2173 = vpack.c.bf16 %v2082, %v2082
    %v2174 = vpack.c.bf16 %v2088, %v2088
    %v2175 = vpack.c.bf16 %v2094, %v2094
    %v2176 = vpack.c.bf16 %v2100, %v2100
    %v2177 = vpack.c.bf16 %v2106, %v2106
    %v2178 = vpack.c.bf16 %v2112, %v2112
    %v2179 = vpack.c.bf16 %v2118, %v2118
    %v2180 = vpack.c.bf16 %v2124, %v2124
    %v2181 = vpack.c.bf16 %v2130, %v2130
    %v2182 = vpack.c.bf16 %v2136, %v2136
    %v2183 = vpack.c.bf16 %v2142, %v2142
    %v2184 = vpack.c.bf16 %v2148, %v2148
    %v2185 = vpack.c.bf16 %v2154, %v2154
    %v2186 = vpack.c.bf16 %v2160, %v2160
    %v2187 = vpack.c.bf16 %v2166, %v2166
    %v2188 = vpack.c.bf16 %v2172, %v2172
    %v2189 = vunpack.c.l.bf16 %v2173
    %v2190 = vunpack.c.l.bf16 %v2174
    %v2191 = vunpack.c.l.bf16 %v2175
    %v2192 = vunpack.c.l.bf16 %v2176
    %v2193 = vunpack.c.l.bf16 %v2177
    %v2194 = vunpack.c.l.bf16 %v2178
    %v2195 = vunpack.c.l.bf16 %v2179
    %v2196 = vunpack.c.l.bf16 %v2180
    %v2197 = vunpack.c.l.bf16 %v2181
    %v2198 = vunpack.c.l.bf16 %v2182
    %v2199 = vunpack.c.l.bf16 %v2183
    %v2200 = vunpack.c.l.bf16 %v2184
    %v2201 = vunpack.c.l.bf16 %v2185
    %v2202 = vunpack.c.l.bf16 %v2186
    %v2203 = vunpack.c.l.bf16 %v2187
    %v2204 = vunpack.c.l.bf16 %v2188
    %v2221 = vsel %vm348, %v2191, %v2189
    %v2222 = vsel %vm350, %v2193, %v2221
    %v2223 = vsel %vm352, %v2195, %v2222
    %v2224 = vsel %vm354, %v2197, %v2223
    %v2225 = vsel %vm356, %v2199, %v2224
    %v2226 = vsel %vm358, %v2201, %v2225
    %v2227 = vsel %vm360, %v2203, %v2226
    %v2228 = vsel %vm348, %v2192, %v2190
    %v2229 = vsel %vm350, %v2194, %v2228
    %v2230 = vsel %vm352, %v2196, %v2229
    %v2231 = vsel %vm354, %v2198, %v2230
    %v2232 = vsel %vm356, %v2200, %v2231
    %v2233 = vsel %vm358, %v2202, %v2232
    %v2234 = vsel %vm360, %v2204, %v2233
    %v2237 = vadd.f32 %v2059, %v2227
    %v2238 = vadd.f32 %v2060, %v2234
    %2239 = vst [vmem:[#allocation2] sm:$0xff] %v2237
    %2240 = vst [vmem:[#allocation2 + $0x8] sm:$0xff] %v2238
    %v2241 = vld [vmem:[#allocation3] sm:$0xff]
    %v2242 = vlaneseq
    %v2243 = vshrl.u32 %v2242, 7
    %v2244 = vsub.s32 0, %v2243
    %v2245 = vrot.slane %v2241, %v2244
    %s2247 = sor.u32 256, 56
    %2248 = vbcast.lane.b32.xlu0 %v2245, %s2247
    %v2249 = vpop.permute.xlu0 %2248
    %v2250 = vlaneseq
    %v2251 = vshrl.u32 %v2250, 7
    %v2252 = vsub.s32 1, %v2251
    %v2253 = vrot.slane %v2241, %v2252
    %s2255 = sor.u32 256, 56
    %2256 = vbcast.lane.b32.xlu0 %v2253, %s2255
    %v2257 = vpop.permute.xlu0 %2256
    %v2258 = vlaneseq
    %v2259 = vshrl.u32 %v2258, 7
    %v2260 = vsub.s32 2, %v2259
    %v2261 = vrot.slane %v2241, %v2260
    %s2263 = sor.u32 256, 56
    %2264 = vbcast.lane.b32.xlu0 %v2261, %s2263
    %v2265 = vpop.permute.xlu0 %2264
    %v2266 = vlaneseq
    %v2267 = vshrl.u32 %v2266, 7
    %v2268 = vsub.s32 3, %v2267
    %v2269 = vrot.slane %v2241, %v2268
    %s2271 = sor.u32 256, 56
    %2272 = vbcast.lane.b32.xlu0 %v2269, %s2271
    %v2273 = vpop.permute.xlu0 %2272
    %v2274 = vlaneseq
    %v2275 = vshrl.u32 %v2274, 7
    %v2276 = vsub.s32 4, %v2275
    %v2277 = vrot.slane %v2241, %v2276
    %s2279 = sor.u32 256, 56
    %2280 = vbcast.lane.b32.xlu0 %v2277, %s2279
    %v2281 = vpop.permute.xlu0 %2280
    %v2282 = vlaneseq
    %v2283 = vshrl.u32 %v2282, 7
    %v2284 = vsub.s32 5, %v2283
    %v2285 = vrot.slane %v2241, %v2284
    %s2287 = sor.u32 256, 56
    %2288 = vbcast.lane.b32.xlu0 %v2285, %s2287
    %v2289 = vpop.permute.xlu0 %2288
    %v2290 = vlaneseq
    %v2291 = vshrl.u32 %v2290, 7
    %v2292 = vsub.s32 6, %v2291
    %v2293 = vrot.slane %v2241, %v2292
    %s2295 = sor.u32 256, 56
    %2296 = vbcast.lane.b32.xlu0 %v2293, %s2295
    %v2297 = vpop.permute.xlu0 %2296
    %v2298 = vlaneseq
    %v2299 = vshrl.u32 %v2298, 7
    %v2300 = vsub.s32 7, %v2299
    %v2301 = vrot.slane %v2241, %v2300
    %s2303 = sor.u32 256, 56
    %2304 = vbcast.lane.b32.xlu0 %v2301, %s2303
    %v2305 = vpop.permute.xlu0 %2304
    %vm2306 = vcmp.eq.s32.totalorder %v2249, %v63
    %vm2307 = vcmp.eq.s32.totalorder %v2249, %v64
    %vm2308 = vcmp.eq.s32.totalorder %v2257, %v63
    %vm2309 = vcmp.eq.s32.totalorder %v2257, %v64
    %vm2310 = vcmp.eq.s32.totalorder %v2265, %v63
    %vm2311 = vcmp.eq.s32.totalorder %v2265, %v64
    %vm2312 = vcmp.eq.s32.totalorder %v2273, %v63
    %vm2313 = vcmp.eq.s32.totalorder %v2273, %v64
    %vm2314 = vcmp.eq.s32.totalorder %v2281, %v63
    %vm2315 = vcmp.eq.s32.totalorder %v2281, %v64
    %vm2316 = vcmp.eq.s32.totalorder %v2289, %v63
    %vm2317 = vcmp.eq.s32.totalorder %v2289, %v64
    %vm2318 = vcmp.eq.s32.totalorder %v2297, %v63
    %vm2319 = vcmp.eq.s32.totalorder %v2297, %v64
    %vm2320 = vcmp.eq.s32.totalorder %v2305, %v63
    %vm2321 = vcmp.eq.s32.totalorder %v2305, %v64
    %v2322 = vsel %vm2306, 1, 0
    %v2323 = vsel %vm2307, 1, 0
    %v2324 = vsel %vm2308, 1, 0
    %v2325 = vsel %vm2309, 1, 0
    %v2326 = vsel %vm2310, 1, 0
    %v2327 = vsel %vm2311, 1, 0
    %v2328 = vsel %vm2312, 1, 0
    %v2329 = vsel %vm2313, 1, 0
    %v2330 = vsel %vm2314, 1, 0
    %v2331 = vsel %vm2315, 1, 0
    %v2332 = vsel %vm2316, 1, 0
    %v2333 = vsel %vm2317, 1, 0
    %v2334 = vsel %vm2318, 1, 0
    %v2335 = vsel %vm2319, 1, 0
    %v2336 = vsel %vm2320, 1, 0
    %v2337 = vsel %vm2321, 1, 0
    %v2338 = vcvt.s32.f32 %v2322
    %v2339 = vcvt.s32.f32 %v2323
    %v2340 = vcvt.s32.f32 %v2324
    %v2341 = vcvt.s32.f32 %v2325
    %v2342 = vcvt.s32.f32 %v2326
    %v2343 = vcvt.s32.f32 %v2327
    %v2344 = vcvt.s32.f32 %v2328
    %v2345 = vcvt.s32.f32 %v2329
    %v2346 = vcvt.s32.f32 %v2330
    %v2347 = vcvt.s32.f32 %v2331
    %v2348 = vcvt.s32.f32 %v2332
    %v2349 = vcvt.s32.f32 %v2333
    %v2350 = vcvt.s32.f32 %v2334
    %v2351 = vcvt.s32.f32 %v2335
    %v2352 = vcvt.s32.f32 %v2336
    %v2353 = vcvt.s32.f32 %v2337
    %v2354 = vpack.c.bf16 %v2338, %v2338
    %v2355 = vpack.c.bf16 %v2339, %v2339
    %v2356 = vpack.c.bf16 %v2340, %v2340
    %v2357 = vpack.c.bf16 %v2341, %v2341
    %v2358 = vpack.c.bf16 %v2342, %v2342
    %v2359 = vpack.c.bf16 %v2343, %v2343
    %v2360 = vpack.c.bf16 %v2344, %v2344
    %v2361 = vpack.c.bf16 %v2345, %v2345
    %v2362 = vpack.c.bf16 %v2346, %v2346
    %v2363 = vpack.c.bf16 %v2347, %v2347
    %v2364 = vpack.c.bf16 %v2348, %v2348
    %v2365 = vpack.c.bf16 %v2349, %v2349
    %v2366 = vpack.c.bf16 %v2350, %v2350
    %v2367 = vpack.c.bf16 %v2351, %v2351
    %v2368 = vpack.c.bf16 %v2352, %v2352
    %v2369 = vpack.c.bf16 %v2353, %v2353
    %v2370 = vld [vmem:[#allocation2] sm:$0xff]
    %v2371 = vld [vmem:[#allocation2 + $0x8] sm:$0xff]
    %v2372 = vunpack.c.l.bf16 %v2354
    %v2373 = vunpack.c.l.bf16 %v2355
    %v2374 = vunpack.c.l.bf16 %v2356
    %v2375 = vunpack.c.l.bf16 %v2357
    %v2376 = vunpack.c.l.bf16 %v2358
    %v2377 = vunpack.c.l.bf16 %v2359
    %v2378 = vunpack.c.l.bf16 %v2360
    %v2379 = vunpack.c.l.bf16 %v2361
    %v2380 = vunpack.c.l.bf16 %v2362
    %v2381 = vunpack.c.l.bf16 %v2363
    %v2382 = vunpack.c.l.bf16 %v2364
    %v2383 = vunpack.c.l.bf16 %v2365
    %v2384 = vunpack.c.l.bf16 %v2366
    %v2385 = vunpack.c.l.bf16 %v2367
    %v2386 = vunpack.c.l.bf16 %v2368
    %v2387 = vunpack.c.l.bf16 %v2369
    %v2388 = vrot.slane %v2372, 4
    %v2389 = vadd.f32 %v2372, %v2388
    %v2390 = vrot.slane %v2389, 2
    %v2391 = vadd.f32 %v2389, %v2390
    %v2392 = vrot.slane %v2391, 1
    %v2393 = vadd.f32 %v2391, %v2392
    %v2394 = vrot.slane %v2373, 4
    %v2395 = vadd.f32 %v2373, %v2394
    %v2396 = vrot.slane %v2395, 2
    %v2397 = vadd.f32 %v2395, %v2396
    %v2398 = vrot.slane %v2397, 1
    %v2399 = vadd.f32 %v2397, %v2398
    %v2400 = vrot.slane %v2374, 4
    %v2401 = vadd.f32 %v2374, %v2400
    %v2402 = vrot.slane %v2401, 2
    %v2403 = vadd.f32 %v2401, %v2402
    %v2404 = vrot.slane %v2403, 1
    %v2405 = vadd.f32 %v2403, %v2404
    %v2406 = vrot.slane %v2375, 4
    %v2407 = vadd.f32 %v2375, %v2406
    %v2408 = vrot.slane %v2407, 2
    %v2409 = vadd.f32 %v2407, %v2408
    %v2410 = vrot.slane %v2409, 1
    %v2411 = vadd.f32 %v2409, %v2410
    %v2412 = vrot.slane %v2376, 4
    %v2413 = vadd.f32 %v2376, %v2412
    %v2414 = vrot.slane %v2413, 2
    %v2415 = vadd.f32 %v2413, %v2414
    %v2416 = vrot.slane %v2415, 1
    %v2417 = vadd.f32 %v2415, %v2416
    %v2418 = vrot.slane %v2377, 4
    %v2419 = vadd.f32 %v2377, %v2418
    %v2420 = vrot.slane %v2419, 2
    %v2421 = vadd.f32 %v2419, %v2420
    %v2422 = vrot.slane %v2421, 1
    %v2423 = vadd.f32 %v2421, %v2422
    %v2424 = vrot.slane %v2378, 4
    %v2425 = vadd.f32 %v2378, %v2424
    %v2426 = vrot.slane %v2425, 2
    %v2427 = vadd.f32 %v2425, %v2426
    %v2428 = vrot.slane %v2427, 1
    %v2429 = vadd.f32 %v2427, %v2428
    %v2430 = vrot.slane %v2379, 4
    %v2431 = vadd.f32 %v2379, %v2430
    %v2432 = vrot.slane %v2431, 2
    %v2433 = vadd.f32 %v2431, %v2432
    %v2434 = vrot.slane %v2433, 1
    %v2435 = vadd.f32 %v2433, %v2434
    %v2436 = vrot.slane %v2380, 4
    %v2437 = vadd.f32 %v2380, %v2436
    %v2438 = vrot.slane %v2437, 2
    %v2439 = vadd.f32 %v2437, %v2438
    %v2440 = vrot.slane %v2439, 1
    %v2441 = vadd.f32 %v2439, %v2440
    %v2442 = vrot.slane %v2381, 4
    %v2443 = vadd.f32 %v2381, %v2442
    %v2444 = vrot.slane %v2443, 2
    %v2445 = vadd.f32 %v2443, %v2444
    %v2446 = vrot.slane %v2445, 1
    %v2447 = vadd.f32 %v2445, %v2446
    %v2448 = vrot.slane %v2382, 4
    %v2449 = vadd.f32 %v2382, %v2448
    %v2450 = vrot.slane %v2449, 2
    %v2451 = vadd.f32 %v2449, %v2450
    %v2452 = vrot.slane %v2451, 1
    %v2453 = vadd.f32 %v2451, %v2452
    %v2454 = vrot.slane %v2383, 4
    %v2455 = vadd.f32 %v2383, %v2454
    %v2456 = vrot.slane %v2455, 2
    %v2457 = vadd.f32 %v2455, %v2456
    %v2458 = vrot.slane %v2457, 1
    %v2459 = vadd.f32 %v2457, %v2458
    %v2460 = vrot.slane %v2384, 4
    %v2461 = vadd.f32 %v2384, %v2460
    %v2462 = vrot.slane %v2461, 2
    %v2463 = vadd.f32 %v2461, %v2462
    %v2464 = vrot.slane %v2463, 1
    %v2465 = vadd.f32 %v2463, %v2464
    %v2466 = vrot.slane %v2385, 4
    %v2467 = vadd.f32 %v2385, %v2466
    %v2468 = vrot.slane %v2467, 2
    %v2469 = vadd.f32 %v2467, %v2468
    %v2470 = vrot.slane %v2469, 1
    %v2471 = vadd.f32 %v2469, %v2470
    %v2472 = vrot.slane %v2386, 4
    %v2473 = vadd.f32 %v2386, %v2472
    %v2474 = vrot.slane %v2473, 2
    %v2475 = vadd.f32 %v2473, %v2474
    %v2476 = vrot.slane %v2475, 1
    %v2477 = vadd.f32 %v2475, %v2476
    %v2478 = vrot.slane %v2387, 4
    %v2479 = vadd.f32 %v2387, %v2478
    %v2480 = vrot.slane %v2479, 2
    %v2481 = vadd.f32 %v2479, %v2480
    %v2482 = vrot.slane %v2481, 1
    %v2483 = vadd.f32 %v2481, %v2482
    %v2484 = vpack.c.bf16 %v2393, %v2393
    %v2485 = vpack.c.bf16 %v2399, %v2399
    %v2486 = vpack.c.bf16 %v2405, %v2405
    %v2487 = vpack.c.bf16 %v2411, %v2411
    %v2488 = vpack.c.bf16 %v2417, %v2417
    %v2489 = vpack.c.bf16 %v2423, %v2423
    %v2490 = vpack.c.bf16 %v2429, %v2429
    %v2491 = vpack.c.bf16 %v2435, %v2435
    %v2492 = vpack.c.bf16 %v2441, %v2441
    %v2493 = vpack.c.bf16 %v2447, %v2447
    %v2494 = vpack.c.bf16 %v2453, %v2453
    %v2495 = vpack.c.bf16 %v2459, %v2459
    %v2496 = vpack.c.bf16 %v2465, %v2465
    %v2497 = vpack.c.bf16 %v2471, %v2471
    %v2498 = vpack.c.bf16 %v2477, %v2477
    %v2499 = vpack.c.bf16 %v2483, %v2483
    %v2500 = vunpack.c.l.bf16 %v2484
    %v2501 = vunpack.c.l.bf16 %v2485
    %v2502 = vunpack.c.l.bf16 %v2486
    %v2503 = vunpack.c.l.bf16 %v2487
    %v2504 = vunpack.c.l.bf16 %v2488
    %v2505 = vunpack.c.l.bf16 %v2489
    %v2506 = vunpack.c.l.bf16 %v2490
    %v2507 = vunpack.c.l.bf16 %v2491
    %v2508 = vunpack.c.l.bf16 %v2492
    %v2509 = vunpack.c.l.bf16 %v2493
    %v2510 = vunpack.c.l.bf16 %v2494
    %v2511 = vunpack.c.l.bf16 %v2495
    %v2512 = vunpack.c.l.bf16 %v2496
    %v2513 = vunpack.c.l.bf16 %v2497
    %v2514 = vunpack.c.l.bf16 %v2498
    %v2515 = vunpack.c.l.bf16 %v2499
    %v2532 = vsel %vm348, %v2502, %v2500
    %v2533 = vsel %vm350, %v2504, %v2532
    %v2534 = vsel %vm352, %v2506, %v2533
    %v2535 = vsel %vm354, %v2508, %v2534
    %v2536 = vsel %vm356, %v2510, %v2535
    %v2537 = vsel %vm358, %v2512, %v2536
    %v2538 = vsel %vm360, %v2514, %v2537
    %v2539 = vsel %vm348, %v2503, %v2501
    %v2540 = vsel %vm350, %v2505, %v2539
    %v2541 = vsel %vm352, %v2507, %v2540
    %v2542 = vsel %vm354, %v2509, %v2541
    %v2543 = vsel %vm356, %v2511, %v2542
    %v2544 = vsel %vm358, %v2513, %v2543
    %v2545 = vsel %vm360, %v2515, %v2544
    %v2548 = vadd.f32 %v2370, %v2538
    %v2549 = vadd.f32 %v2371, %v2545
    %2550 = vst [vmem:[#allocation2] sm:$0xff] %v2548
    %2551 = vst [vmem:[#allocation2 + $0x8] sm:$0xff] %v2549
    %v2552 = vld [vmem:[#allocation3] sm:$0xff]
    %v2553 = vlaneseq
    %v2554 = vshrl.u32 %v2553, 7
    %v2555 = vsub.s32 0, %v2554
    %v2556 = vrot.slane %v2552, %v2555
    %s2558 = sor.u32 256, 64
    %2559 = vbcast.lane.b32.xlu0 %v2556, %s2558
    %v2560 = vpop.permute.xlu0 %2559
    %v2561 = vlaneseq
    %v2562 = vshrl.u32 %v2561, 7
    %v2563 = vsub.s32 1, %v2562
    %v2564 = vrot.slane %v2552, %v2563
    %s2566 = sor.u32 256, 64
    %2567 = vbcast.lane.b32.xlu0 %v2564, %s2566
    %v2568 = vpop.permute.xlu0 %2567
    %v2569 = vlaneseq
    %v2570 = vshrl.u32 %v2569, 7
    %v2571 = vsub.s32 2, %v2570
    %v2572 = vrot.slane %v2552, %v2571
    %s2574 = sor.u32 256, 64
    %2575 = vbcast.lane.b32.xlu0 %v2572, %s2574
    %v2576 = vpop.permute.xlu0 %2575
    %v2577 = vlaneseq
    %v2578 = vshrl.u32 %v2577, 7
    %v2579 = vsub.s32 3, %v2578
    %v2580 = vrot.slane %v2552, %v2579
    %s2582 = sor.u32 256, 64
    %2583 = vbcast.lane.b32.xlu0 %v2580, %s2582
    %v2584 = vpop.permute.xlu0 %2583
    %v2585 = vlaneseq
    %v2586 = vshrl.u32 %v2585, 7
    %v2587 = vsub.s32 4, %v2586
    %v2588 = vrot.slane %v2552, %v2587
    %s2590 = sor.u32 256, 64
    %2591 = vbcast.lane.b32.xlu0 %v2588, %s2590
    %v2592 = vpop.permute.xlu0 %2591
    %v2593 = vlaneseq
    %v2594 = vshrl.u32 %v2593, 7
    %v2595 = vsub.s32 5, %v2594
    %v2596 = vrot.slane %v2552, %v2595
    %s2598 = sor.u32 256, 64
    %2599 = vbcast.lane.b32.xlu0 %v2596, %s2598
    %v2600 = vpop.permute.xlu0 %2599
    %v2601 = vlaneseq
    %v2602 = vshrl.u32 %v2601, 7
    %v2603 = vsub.s32 6, %v2602
    %v2604 = vrot.slane %v2552, %v2603
    %s2606 = sor.u32 256, 64
    %2607 = vbcast.lane.b32.xlu0 %v2604, %s2606
    %v2608 = vpop.permute.xlu0 %2607
    %v2609 = vlaneseq
    %v2610 = vshrl.u32 %v2609, 7
    %v2611 = vsub.s32 7, %v2610
    %v2612 = vrot.slane %v2552, %v2611
    %s2614 = sor.u32 256, 64
    %2615 = vbcast.lane.b32.xlu0 %v2612, %s2614
    %v2616 = vpop.permute.xlu0 %2615
    %vm2617 = vcmp.eq.s32.totalorder %v2560, %v63
    %vm2618 = vcmp.eq.s32.totalorder %v2560, %v64
    %vm2619 = vcmp.eq.s32.totalorder %v2568, %v63
    %vm2620 = vcmp.eq.s32.totalorder %v2568, %v64
    %vm2621 = vcmp.eq.s32.totalorder %v2576, %v63
    %vm2622 = vcmp.eq.s32.totalorder %v2576, %v64
    %vm2623 = vcmp.eq.s32.totalorder %v2584, %v63
    %vm2624 = vcmp.eq.s32.totalorder %v2584, %v64
    %vm2625 = vcmp.eq.s32.totalorder %v2592, %v63
    %vm2626 = vcmp.eq.s32.totalorder %v2592, %v64
    %vm2627 = vcmp.eq.s32.totalorder %v2600, %v63
    %vm2628 = vcmp.eq.s32.totalorder %v2600, %v64
    %vm2629 = vcmp.eq.s32.totalorder %v2608, %v63
    %vm2630 = vcmp.eq.s32.totalorder %v2608, %v64
    %vm2631 = vcmp.eq.s32.totalorder %v2616, %v63
    %vm2632 = vcmp.eq.s32.totalorder %v2616, %v64
    %v2633 = vsel %vm2617, 1, 0
    %v2634 = vsel %vm2618, 1, 0
    %v2635 = vsel %vm2619, 1, 0
    %v2636 = vsel %vm2620, 1, 0
    %v2637 = vsel %vm2621, 1, 0
    %v2638 = vsel %vm2622, 1, 0
    %v2639 = vsel %vm2623, 1, 0
    %v2640 = vsel %vm2624, 1, 0
    %v2641 = vsel %vm2625, 1, 0
    %v2642 = vsel %vm2626, 1, 0
    %v2643 = vsel %vm2627, 1, 0
    %v2644 = vsel %vm2628, 1, 0
    %v2645 = vsel %vm2629, 1, 0
    %v2646 = vsel %vm2630, 1, 0
    %v2647 = vsel %vm2631, 1, 0
    %v2648 = vsel %vm2632, 1, 0
    %v2649 = vcvt.s32.f32 %v2633
    %v2650 = vcvt.s32.f32 %v2634
    %v2651 = vcvt.s32.f32 %v2635
    %v2652 = vcvt.s32.f32 %v2636
    %v2653 = vcvt.s32.f32 %v2637
    %v2654 = vcvt.s32.f32 %v2638
    %v2655 = vcvt.s32.f32 %v2639
    %v2656 = vcvt.s32.f32 %v2640
    %v2657 = vcvt.s32.f32 %v2641
    %v2658 = vcvt.s32.f32 %v2642
    %v2659 = vcvt.s32.f32 %v2643
    %v2660 = vcvt.s32.f32 %v2644
    %v2661 = vcvt.s32.f32 %v2645
    %v2662 = vcvt.s32.f32 %v2646
    %v2663 = vcvt.s32.f32 %v2647
    %v2664 = vcvt.s32.f32 %v2648
    %v2665 = vpack.c.bf16 %v2649, %v2649
    %v2666 = vpack.c.bf16 %v2650, %v2650
    %v2667 = vpack.c.bf16 %v2651, %v2651
    %v2668 = vpack.c.bf16 %v2652, %v2652
    %v2669 = vpack.c.bf16 %v2653, %v2653
    %v2670 = vpack.c.bf16 %v2654, %v2654
    %v2671 = vpack.c.bf16 %v2655, %v2655
    %v2672 = vpack.c.bf16 %v2656, %v2656
    %v2673 = vpack.c.bf16 %v2657, %v2657
    %v2674 = vpack.c.bf16 %v2658, %v2658
    %v2675 = vpack.c.bf16 %v2659, %v2659
    %v2676 = vpack.c.bf16 %v2660, %v2660
    %v2677 = vpack.c.bf16 %v2661, %v2661
    %v2678 = vpack.c.bf16 %v2662, %v2662
    %v2679 = vpack.c.bf16 %v2663, %v2663
    %v2680 = vpack.c.bf16 %v2664, %v2664
    %v2681 = vld [vmem:[#allocation2] sm:$0xff]
    %v2682 = vld [vmem:[#allocation2 + $0x8] sm:$0xff]
    %v2683 = vunpack.c.l.bf16 %v2665
    %v2684 = vunpack.c.l.bf16 %v2666
    %v2685 = vunpack.c.l.bf16 %v2667
    %v2686 = vunpack.c.l.bf16 %v2668
    %v2687 = vunpack.c.l.bf16 %v2669
    %v2688 = vunpack.c.l.bf16 %v2670
    %v2689 = vunpack.c.l.bf16 %v2671
    %v2690 = vunpack.c.l.bf16 %v2672
    %v2691 = vunpack.c.l.bf16 %v2673
    %v2692 = vunpack.c.l.bf16 %v2674
    %v2693 = vunpack.c.l.bf16 %v2675
    %v2694 = vunpack.c.l.bf16 %v2676
    %v2695 = vunpack.c.l.bf16 %v2677
    %v2696 = vunpack.c.l.bf16 %v2678
    %v2697 = vunpack.c.l.bf16 %v2679
    %v2698 = vunpack.c.l.bf16 %v2680
    %v2699 = vrot.slane %v2683, 4
    %v2700 = vadd.f32 %v2683, %v2699
    %v2701 = vrot.slane %v2700, 2
    %v2702 = vadd.f32 %v2700, %v2701
    %v2703 = vrot.slane %v2702, 1
    %v2704 = vadd.f32 %v2702, %v2703
    %v2705 = vrot.slane %v2684, 4
    %v2706 = vadd.f32 %v2684, %v2705
    %v2707 = vrot.slane %v2706, 2
    %v2708 = vadd.f32 %v2706, %v2707
    %v2709 = vrot.slane %v2708, 1
    %v2710 = vadd.f32 %v2708, %v2709
    %v2711 = vrot.slane %v2685, 4
    %v2712 = vadd.f32 %v2685, %v2711
    %v2713 = vrot.slane %v2712, 2
    %v2714 = vadd.f32 %v2712, %v2713
    %v2715 = vrot.slane %v2714, 1
    %v2716 = vadd.f32 %v2714, %v2715
    %v2717 = vrot.slane %v2686, 4
    %v2718 = vadd.f32 %v2686, %v2717
    %v2719 = vrot.slane %v2718, 2
    %v2720 = vadd.f32 %v2718, %v2719
    %v2721 = vrot.slane %v2720, 1
    %v2722 = vadd.f32 %v2720, %v2721
    %v2723 = vrot.slane %v2687, 4
    %v2724 = vadd.f32 %v2687, %v2723
    %v2725 = vrot.slane %v2724, 2
    %v2726 = vadd.f32 %v2724, %v2725
    %v2727 = vrot.slane %v2726, 1
    %v2728 = vadd.f32 %v2726, %v2727
    %v2729 = vrot.slane %v2688, 4
    %v2730 = vadd.f32 %v2688, %v2729
    %v2731 = vrot.slane %v2730, 2
    %v2732 = vadd.f32 %v2730, %v2731
    %v2733 = vrot.slane %v2732, 1
    %v2734 = vadd.f32 %v2732, %v2733
    %v2735 = vrot.slane %v2689, 4
    %v2736 = vadd.f32 %v2689, %v2735
    %v2737 = vrot.slane %v2736, 2
    %v2738 = vadd.f32 %v2736, %v2737
    %v2739 = vrot.slane %v2738, 1
    %v2740 = vadd.f32 %v2738, %v2739
    %v2741 = vrot.slane %v2690, 4
    %v2742 = vadd.f32 %v2690, %v2741
    %v2743 = vrot.slane %v2742, 2
    %v2744 = vadd.f32 %v2742, %v2743
    %v2745 = vrot.slane %v2744, 1
    %v2746 = vadd.f32 %v2744, %v2745
    %v2747 = vrot.slane %v2691, 4
    %v2748 = vadd.f32 %v2691, %v2747
    %v2749 = vrot.slane %v2748, 2
    %v2750 = vadd.f32 %v2748, %v2749
    %v2751 = vrot.slane %v2750, 1
    %v2752 = vadd.f32 %v2750, %v2751
    %v2753 = vrot.slane %v2692, 4
    %v2754 = vadd.f32 %v2692, %v2753
    %v2755 = vrot.slane %v2754, 2
    %v2756 = vadd.f32 %v2754, %v2755
    %v2757 = vrot.slane %v2756, 1
    %v2758 = vadd.f32 %v2756, %v2757
    %v2759 = vrot.slane %v2693, 4
    %v2760 = vadd.f32 %v2693, %v2759
    %v2761 = vrot.slane %v2760, 2
    %v2762 = vadd.f32 %v2760, %v2761
    %v2763 = vrot.slane %v2762, 1
    %v2764 = vadd.f32 %v2762, %v2763
    %v2765 = vrot.slane %v2694, 4
    %v2766 = vadd.f32 %v2694, %v2765
    %v2767 = vrot.slane %v2766, 2
    %v2768 = vadd.f32 %v2766, %v2767
    %v2769 = vrot.slane %v2768, 1
    %v2770 = vadd.f32 %v2768, %v2769
    %v2771 = vrot.slane %v2695, 4
    %v2772 = vadd.f32 %v2695, %v2771
    %v2773 = vrot.slane %v2772, 2
    %v2774 = vadd.f32 %v2772, %v2773
    %v2775 = vrot.slane %v2774, 1
    %v2776 = vadd.f32 %v2774, %v2775
    %v2777 = vrot.slane %v2696, 4
    %v2778 = vadd.f32 %v2696, %v2777
    %v2779 = vrot.slane %v2778, 2
    %v2780 = vadd.f32 %v2778, %v2779
    %v2781 = vrot.slane %v2780, 1
    %v2782 = vadd.f32 %v2780, %v2781
    %v2783 = vrot.slane %v2697, 4
    %v2784 = vadd.f32 %v2697, %v2783
    %v2785 = vrot.slane %v2784, 2
    %v2786 = vadd.f32 %v2784, %v2785
    %v2787 = vrot.slane %v2786, 1
    %v2788 = vadd.f32 %v2786, %v2787
    %v2789 = vrot.slane %v2698, 4
    %v2790 = vadd.f32 %v2698, %v2789
    %v2791 = vrot.slane %v2790, 2
    %v2792 = vadd.f32 %v2790, %v2791
    %v2793 = vrot.slane %v2792, 1
    %v2794 = vadd.f32 %v2792, %v2793
    %v2795 = vpack.c.bf16 %v2704, %v2704
    %v2796 = vpack.c.bf16 %v2710, %v2710
    %v2797 = vpack.c.bf16 %v2716, %v2716
    %v2798 = vpack.c.bf16 %v2722, %v2722
    %v2799 = vpack.c.bf16 %v2728, %v2728
    %v2800 = vpack.c.bf16 %v2734, %v2734
    %v2801 = vpack.c.bf16 %v2740, %v2740
    %v2802 = vpack.c.bf16 %v2746, %v2746
    %v2803 = vpack.c.bf16 %v2752, %v2752
    %v2804 = vpack.c.bf16 %v2758, %v2758
    %v2805 = vpack.c.bf16 %v2764, %v2764
    %v2806 = vpack.c.bf16 %v2770, %v2770
    %v2807 = vpack.c.bf16 %v2776, %v2776
    %v2808 = vpack.c.bf16 %v2782, %v2782
    %v2809 = vpack.c.bf16 %v2788, %v2788
    %v2810 = vpack.c.bf16 %v2794, %v2794
    %v2811 = vunpack.c.l.bf16 %v2795
    %v2812 = vunpack.c.l.bf16 %v2796
    %v2813 = vunpack.c.l.bf16 %v2797
    %v2814 = vunpack.c.l.bf16 %v2798
    %v2815 = vunpack.c.l.bf16 %v2799
    %v2816 = vunpack.c.l.bf16 %v2800
    %v2817 = vunpack.c.l.bf16 %v2801
    %v2818 = vunpack.c.l.bf16 %v2802
    %v2819 = vunpack.c.l.bf16 %v2803
    %v2820 = vunpack.c.l.bf16 %v2804
    %v2821 = vunpack.c.l.bf16 %v2805
    %v2822 = vunpack.c.l.bf16 %v2806
    %v2823 = vunpack.c.l.bf16 %v2807
    %v2824 = vunpack.c.l.bf16 %v2808
    %v2825 = vunpack.c.l.bf16 %v2809
    %v2826 = vunpack.c.l.bf16 %v2810
    %v2843 = vsel %vm348, %v2813, %v2811
    %v2844 = vsel %vm350, %v2815, %v2843
    %v2845 = vsel %vm352, %v2817, %v2844
    %v2846 = vsel %vm354, %v2819, %v2845
    %v2847 = vsel %vm356, %v2821, %v2846
    %v2848 = vsel %vm358, %v2823, %v2847
    %v2849 = vsel %vm360, %v2825, %v2848
    %v2850 = vsel %vm348, %v2814, %v2812
    %v2851 = vsel %vm350, %v2816, %v2850
    %v2852 = vsel %vm352, %v2818, %v2851
    %v2853 = vsel %vm354, %v2820, %v2852
    %v2854 = vsel %vm356, %v2822, %v2853
    %v2855 = vsel %vm358, %v2824, %v2854
    %v2856 = vsel %vm360, %v2826, %v2855
    %v2859 = vadd.f32 %v2681, %v2849
    %v2860 = vadd.f32 %v2682, %v2856
    %2861 = vst [vmem:[#allocation2] sm:$0xff] %v2859
    %2862 = vst [vmem:[#allocation2 + $0x8] sm:$0xff] %v2860
    %v2863 = vld [vmem:[#allocation3] sm:$0xff]
    %v2864 = vlaneseq
    %v2865 = vshrl.u32 %v2864, 7
    %v2866 = vsub.s32 0, %v2865
    %v2867 = vrot.slane %v2863, %v2866
    %s2869 = sor.u32 256, 72
    %2870 = vbcast.lane.b32.xlu0 %v2867, %s2869
    %v2871 = vpop.permute.xlu0 %2870
    %v2872 = vlaneseq
    %v2873 = vshrl.u32 %v2872, 7
    %v2874 = vsub.s32 1, %v2873
    %v2875 = vrot.slane %v2863, %v2874
    %s2877 = sor.u32 256, 72
    %2878 = vbcast.lane.b32.xlu0 %v2875, %s2877
    %v2879 = vpop.permute.xlu0 %2878
    %v2880 = vlaneseq
    %v2881 = vshrl.u32 %v2880, 7
    %v2882 = vsub.s32 2, %v2881
    %v2883 = vrot.slane %v2863, %v2882
    %s2885 = sor.u32 256, 72
    %2886 = vbcast.lane.b32.xlu0 %v2883, %s2885
    %v2887 = vpop.permute.xlu0 %2886
    %v2888 = vlaneseq
    %v2889 = vshrl.u32 %v2888, 7
    %v2890 = vsub.s32 3, %v2889
    %v2891 = vrot.slane %v2863, %v2890
    %s2893 = sor.u32 256, 72
    %2894 = vbcast.lane.b32.xlu0 %v2891, %s2893
    %v2895 = vpop.permute.xlu0 %2894
    %v2896 = vlaneseq
    %v2897 = vshrl.u32 %v2896, 7
    %v2898 = vsub.s32 4, %v2897
    %v2899 = vrot.slane %v2863, %v2898
    %s2901 = sor.u32 256, 72
    %2902 = vbcast.lane.b32.xlu0 %v2899, %s2901
    %v2903 = vpop.permute.xlu0 %2902
    %v2904 = vlaneseq
    %v2905 = vshrl.u32 %v2904, 7
    %v2906 = vsub.s32 5, %v2905
    %v2907 = vrot.slane %v2863, %v2906
    %s2909 = sor.u32 256, 72
    %2910 = vbcast.lane.b32.xlu0 %v2907, %s2909
    %v2911 = vpop.permute.xlu0 %2910
    %v2912 = vlaneseq
    %v2913 = vshrl.u32 %v2912, 7
    %v2914 = vsub.s32 6, %v2913
    %v2915 = vrot.slane %v2863, %v2914
    %s2917 = sor.u32 256, 72
    %2918 = vbcast.lane.b32.xlu0 %v2915, %s2917
    %v2919 = vpop.permute.xlu0 %2918
    %v2920 = vlaneseq
    %v2921 = vshrl.u32 %v2920, 7
    %v2922 = vsub.s32 7, %v2921
    %v2923 = vrot.slane %v2863, %v2922
    %s2925 = sor.u32 256, 72
    %2926 = vbcast.lane.b32.xlu0 %v2923, %s2925
    %v2927 = vpop.permute.xlu0 %2926
    %vm2928 = vcmp.eq.s32.totalorder %v2871, %v63
    %vm2929 = vcmp.eq.s32.totalorder %v2871, %v64
    %vm2930 = vcmp.eq.s32.totalorder %v2879, %v63
    %vm2931 = vcmp.eq.s32.totalorder %v2879, %v64
    %vm2932 = vcmp.eq.s32.totalorder %v2887, %v63
    %vm2933 = vcmp.eq.s32.totalorder %v2887, %v64
    %vm2934 = vcmp.eq.s32.totalorder %v2895, %v63
    %vm2935 = vcmp.eq.s32.totalorder %v2895, %v64
    %vm2936 = vcmp.eq.s32.totalorder %v2903, %v63
    %vm2937 = vcmp.eq.s32.totalorder %v2903, %v64
    %vm2938 = vcmp.eq.s32.totalorder %v2911, %v63
    %vm2939 = vcmp.eq.s32.totalorder %v2911, %v64
    %vm2940 = vcmp.eq.s32.totalorder %v2919, %v63
    %vm2941 = vcmp.eq.s32.totalorder %v2919, %v64
    %vm2942 = vcmp.eq.s32.totalorder %v2927, %v63
    %vm2943 = vcmp.eq.s32.totalorder %v2927, %v64
    %v2944 = vsel %vm2928, 1, 0
    %v2945 = vsel %vm2929, 1, 0
    %v2946 = vsel %vm2930, 1, 0
    %v2947 = vsel %vm2931, 1, 0
    %v2948 = vsel %vm2932, 1, 0
    %v2949 = vsel %vm2933, 1, 0
    %v2950 = vsel %vm2934, 1, 0
    %v2951 = vsel %vm2935, 1, 0
    %v2952 = vsel %vm2936, 1, 0
    %v2953 = vsel %vm2937, 1, 0
    %v2954 = vsel %vm2938, 1, 0
    %v2955 = vsel %vm2939, 1, 0
    %v2956 = vsel %vm2940, 1, 0
    %v2957 = vsel %vm2941, 1, 0
    %v2958 = vsel %vm2942, 1, 0
    %v2959 = vsel %vm2943, 1, 0
    %v2960 = vcvt.s32.f32 %v2944
    %v2961 = vcvt.s32.f32 %v2945
    %v2962 = vcvt.s32.f32 %v2946
    %v2963 = vcvt.s32.f32 %v2947
    %v2964 = vcvt.s32.f32 %v2948
    %v2965 = vcvt.s32.f32 %v2949
    %v2966 = vcvt.s32.f32 %v2950
    %v2967 = vcvt.s32.f32 %v2951
    %v2968 = vcvt.s32.f32 %v2952
    %v2969 = vcvt.s32.f32 %v2953
    %v2970 = vcvt.s32.f32 %v2954
    %v2971 = vcvt.s32.f32 %v2955
    %v2972 = vcvt.s32.f32 %v2956
    %v2973 = vcvt.s32.f32 %v2957
    %v2974 = vcvt.s32.f32 %v2958
    %v2975 = vcvt.s32.f32 %v2959
    %v2976 = vpack.c.bf16 %v2960, %v2960
    %v2977 = vpack.c.bf16 %v2961, %v2961
    %v2978 = vpack.c.bf16 %v2962, %v2962
    %v2979 = vpack.c.bf16 %v2963, %v2963
    %v2980 = vpack.c.bf16 %v2964, %v2964
    %v2981 = vpack.c.bf16 %v2965, %v2965
    %v2982 = vpack.c.bf16 %v2966, %v2966
    %v2983 = vpack.c.bf16 %v2967, %v2967
    %v2984 = vpack.c.bf16 %v2968, %v2968
    %v2985 = vpack.c.bf16 %v2969, %v2969
    %v2986 = vpack.c.bf16 %v2970, %v2970
    %v2987 = vpack.c.bf16 %v2971, %v2971
    %v2988 = vpack.c.bf16 %v2972, %v2972
    %v2989 = vpack.c.bf16 %v2973, %v2973
    %v2990 = vpack.c.bf16 %v2974, %v2974
    %v2991 = vpack.c.bf16 %v2975, %v2975
    %v2992 = vld [vmem:[#allocation2] sm:$0xff]
    %v2993 = vld [vmem:[#allocation2 + $0x8] sm:$0xff]
    %v2994 = vunpack.c.l.bf16 %v2976
    %v2995 = vunpack.c.l.bf16 %v2977
    %v2996 = vunpack.c.l.bf16 %v2978
    %v2997 = vunpack.c.l.bf16 %v2979
    %v2998 = vunpack.c.l.bf16 %v2980
    %v2999 = vunpack.c.l.bf16 %v2981
    %v3000 = vunpack.c.l.bf16 %v2982
    %v3001 = vunpack.c.l.bf16 %v2983
    %v3002 = vunpack.c.l.bf16 %v2984
    %v3003 = vunpack.c.l.bf16 %v2985
    %v3004 = vunpack.c.l.bf16 %v2986
    %v3005 = vunpack.c.l.bf16 %v2987
    %v3006 = vunpack.c.l.bf16 %v2988
    %v3007 = vunpack.c.l.bf16 %v2989
    %v3008 = vunpack.c.l.bf16 %v2990
    %v3009 = vunpack.c.l.bf16 %v2991
    %v3010 = vrot.slane %v2994, 4
    %v3011 = vadd.f32 %v2994, %v3010
    %v3012 = vrot.slane %v3011, 2
    %v3013 = vadd.f32 %v3011, %v3012
    %v3014 = vrot.slane %v3013, 1
    %v3015 = vadd.f32 %v3013, %v3014
    %v3016 = vrot.slane %v2995, 4
    %v3017 = vadd.f32 %v2995, %v3016
    %v3018 = vrot.slane %v3017, 2
    %v3019 = vadd.f32 %v3017, %v3018
    %v3020 = vrot.slane %v3019, 1
    %v3021 = vadd.f32 %v3019, %v3020
    %v3022 = vrot.slane %v2996, 4
    %v3023 = vadd.f32 %v2996, %v3022
    %v3024 = vrot.slane %v3023, 2
    %v3025 = vadd.f32 %v3023, %v3024
    %v3026 = vrot.slane %v3025, 1
    %v3027 = vadd.f32 %v3025, %v3026
    %v3028 = vrot.slane %v2997, 4
    %v3029 = vadd.f32 %v2997, %v3028
    %v3030 = vrot.slane %v3029, 2
    %v3031 = vadd.f32 %v3029, %v3030
    %v3032 = vrot.slane %v3031, 1
    %v3033 = vadd.f32 %v3031, %v3032
    %v3034 = vrot.slane %v2998, 4
    %v3035 = vadd.f32 %v2998, %v3034
    %v3036 = vrot.slane %v3035, 2
    %v3037 = vadd.f32 %v3035, %v3036
    %v3038 = vrot.slane %v3037, 1
    %v3039 = vadd.f32 %v3037, %v3038
    %v3040 = vrot.slane %v2999, 4
    %v3041 = vadd.f32 %v2999, %v3040
    %v3042 = vrot.slane %v3041, 2
    %v3043 = vadd.f32 %v3041, %v3042
    %v3044 = vrot.slane %v3043, 1
    %v3045 = vadd.f32 %v3043, %v3044
    %v3046 = vrot.slane %v3000, 4
    %v3047 = vadd.f32 %v3000, %v3046
    %v3048 = vrot.slane %v3047, 2
    %v3049 = vadd.f32 %v3047, %v3048
    %v3050 = vrot.slane %v3049, 1
    %v3051 = vadd.f32 %v3049, %v3050
    %v3052 = vrot.slane %v3001, 4
    %v3053 = vadd.f32 %v3001, %v3052
    %v3054 = vrot.slane %v3053, 2
    %v3055 = vadd.f32 %v3053, %v3054
    %v3056 = vrot.slane %v3055, 1
    %v3057 = vadd.f32 %v3055, %v3056
    %v3058 = vrot.slane %v3002, 4
    %v3059 = vadd.f32 %v3002, %v3058
    %v3060 = vrot.slane %v3059, 2
    %v3061 = vadd.f32 %v3059, %v3060
    %v3062 = vrot.slane %v3061, 1
    %v3063 = vadd.f32 %v3061, %v3062
    %v3064 = vrot.slane %v3003, 4
    %v3065 = vadd.f32 %v3003, %v3064
    %v3066 = vrot.slane %v3065, 2
    %v3067 = vadd.f32 %v3065, %v3066
    %v3068 = vrot.slane %v3067, 1
    %v3069 = vadd.f32 %v3067, %v3068
    %v3070 = vrot.slane %v3004, 4
    %v3071 = vadd.f32 %v3004, %v3070
    %v3072 = vrot.slane %v3071, 2
    %v3073 = vadd.f32 %v3071, %v3072
    %v3074 = vrot.slane %v3073, 1
    %v3075 = vadd.f32 %v3073, %v3074
    %v3076 = vrot.slane %v3005, 4
    %v3077 = vadd.f32 %v3005, %v3076
    %v3078 = vrot.slane %v3077, 2
    %v3079 = vadd.f32 %v3077, %v3078
    %v3080 = vrot.slane %v3079, 1
    %v3081 = vadd.f32 %v3079, %v3080
    %v3082 = vrot.slane %v3006, 4
    %v3083 = vadd.f32 %v3006, %v3082
    %v3084 = vrot.slane %v3083, 2
    %v3085 = vadd.f32 %v3083, %v3084
    %v3086 = vrot.slane %v3085, 1
    %v3087 = vadd.f32 %v3085, %v3086
    %v3088 = vrot.slane %v3007, 4
    %v3089 = vadd.f32 %v3007, %v3088
    %v3090 = vrot.slane %v3089, 2
    %v3091 = vadd.f32 %v3089, %v3090
    %v3092 = vrot.slane %v3091, 1
    %v3093 = vadd.f32 %v3091, %v3092
    %v3094 = vrot.slane %v3008, 4
    %v3095 = vadd.f32 %v3008, %v3094
    %v3096 = vrot.slane %v3095, 2
    %v3097 = vadd.f32 %v3095, %v3096
    %v3098 = vrot.slane %v3097, 1
    %v3099 = vadd.f32 %v3097, %v3098
    %v3100 = vrot.slane %v3009, 4
    %v3101 = vadd.f32 %v3009, %v3100
    %v3102 = vrot.slane %v3101, 2
    %v3103 = vadd.f32 %v3101, %v3102
    %v3104 = vrot.slane %v3103, 1
    %v3105 = vadd.f32 %v3103, %v3104
    %v3106 = vpack.c.bf16 %v3015, %v3015
    %v3107 = vpack.c.bf16 %v3021, %v3021
    %v3108 = vpack.c.bf16 %v3027, %v3027
    %v3109 = vpack.c.bf16 %v3033, %v3033
    %v3110 = vpack.c.bf16 %v3039, %v3039
    %v3111 = vpack.c.bf16 %v3045, %v3045
    %v3112 = vpack.c.bf16 %v3051, %v3051
    %v3113 = vpack.c.bf16 %v3057, %v3057
    %v3114 = vpack.c.bf16 %v3063, %v3063
    %v3115 = vpack.c.bf16 %v3069, %v3069
    %v3116 = vpack.c.bf16 %v3075, %v3075
    %v3117 = vpack.c.bf16 %v3081, %v3081
    %v3118 = vpack.c.bf16 %v3087, %v3087
    %v3119 = vpack.c.bf16 %v3093, %v3093
    %v3120 = vpack.c.bf16 %v3099, %v3099
    %v3121 = vpack.c.bf16 %v3105, %v3105
    %v3122 = vunpack.c.l.bf16 %v3106
    %v3123 = vunpack.c.l.bf16 %v3107
    %v3124 = vunpack.c.l.bf16 %v3108
    %v3125 = vunpack.c.l.bf16 %v3109
    %v3126 = vunpack.c.l.bf16 %v3110
    %v3127 = vunpack.c.l.bf16 %v3111
    %v3128 = vunpack.c.l.bf16 %v3112
    %v3129 = vunpack.c.l.bf16 %v3113
    %v3130 = vunpack.c.l.bf16 %v3114
    %v3131 = vunpack.c.l.bf16 %v3115
    %v3132 = vunpack.c.l.bf16 %v3116
    %v3133 = vunpack.c.l.bf16 %v3117
    %v3134 = vunpack.c.l.bf16 %v3118
    %v3135 = vunpack.c.l.bf16 %v3119
    %v3136 = vunpack.c.l.bf16 %v3120
    %v3137 = vunpack.c.l.bf16 %v3121
    %v3154 = vsel %vm348, %v3124, %v3122
    %v3155 = vsel %vm350, %v3126, %v3154
    %v3156 = vsel %vm352, %v3128, %v3155
    %v3157 = vsel %vm354, %v3130, %v3156
    %v3158 = vsel %vm356, %v3132, %v3157
    %v3159 = vsel %vm358, %v3134, %v3158
    %v3160 = vsel %vm360, %v3136, %v3159
    %v3161 = vsel %vm348, %v3125, %v3123
    %v3162 = vsel %vm350, %v3127, %v3161
    %v3163 = vsel %vm352, %v3129, %v3162
    %v3164 = vsel %vm354, %v3131, %v3163
    %v3165 = vsel %vm356, %v3133, %v3164
    %v3166 = vsel %vm358, %v3135, %v3165
    %v3167 = vsel %vm360, %v3137, %v3166
    %v3170 = vadd.f32 %v2992, %v3160
    %v3171 = vadd.f32 %v2993, %v3167
    %3172 = vst [vmem:[#allocation2] sm:$0xff] %v3170
    %3173 = vst [vmem:[#allocation2 + $0x8] sm:$0xff] %v3171
    %v3174 = vld [vmem:[#allocation3] sm:$0xff]
    %v3175 = vlaneseq
    %v3176 = vshrl.u32 %v3175, 7
    %v3177 = vsub.s32 0, %v3176
    %v3178 = vrot.slane %v3174, %v3177
    %s3180 = sor.u32 256, 80
    %3181 = vbcast.lane.b32.xlu0 %v3178, %s3180
    %v3182 = vpop.permute.xlu0 %3181
    %v3183 = vlaneseq
    %v3184 = vshrl.u32 %v3183, 7
    %v3185 = vsub.s32 1, %v3184
    %v3186 = vrot.slane %v3174, %v3185
    %s3188 = sor.u32 256, 80
    %3189 = vbcast.lane.b32.xlu0 %v3186, %s3188
    %v3190 = vpop.permute.xlu0 %3189
    %v3191 = vlaneseq
    %v3192 = vshrl.u32 %v3191, 7
    %v3193 = vsub.s32 2, %v3192
    %v3194 = vrot.slane %v3174, %v3193
    %s3196 = sor.u32 256, 80
    %3197 = vbcast.lane.b32.xlu0 %v3194, %s3196
    %v3198 = vpop.permute.xlu0 %3197
    %v3199 = vlaneseq
    %v3200 = vshrl.u32 %v3199, 7
    %v3201 = vsub.s32 3, %v3200
    %v3202 = vrot.slane %v3174, %v3201
    %s3204 = sor.u32 256, 80
    %3205 = vbcast.lane.b32.xlu0 %v3202, %s3204
    %v3206 = vpop.permute.xlu0 %3205
    %v3207 = vlaneseq
    %v3208 = vshrl.u32 %v3207, 7
    %v3209 = vsub.s32 4, %v3208
    %v3210 = vrot.slane %v3174, %v3209
    %s3212 = sor.u32 256, 80
    %3213 = vbcast.lane.b32.xlu0 %v3210, %s3212
    %v3214 = vpop.permute.xlu0 %3213
    %v3215 = vlaneseq
    %v3216 = vshrl.u32 %v3215, 7
    %v3217 = vsub.s32 5, %v3216
    %v3218 = vrot.slane %v3174, %v3217
    %s3220 = sor.u32 256, 80
    %3221 = vbcast.lane.b32.xlu0 %v3218, %s3220
    %v3222 = vpop.permute.xlu0 %3221
    %v3223 = vlaneseq
    %v3224 = vshrl.u32 %v3223, 7
    %v3225 = vsub.s32 6, %v3224
    %v3226 = vrot.slane %v3174, %v3225
    %s3228 = sor.u32 256, 80
    %3229 = vbcast.lane.b32.xlu0 %v3226, %s3228
    %v3230 = vpop.permute.xlu0 %3229
    %v3231 = vlaneseq
    %v3232 = vshrl.u32 %v3231, 7
    %v3233 = vsub.s32 7, %v3232
    %v3234 = vrot.slane %v3174, %v3233
    %s3236 = sor.u32 256, 80
    %3237 = vbcast.lane.b32.xlu0 %v3234, %s3236
    %v3238 = vpop.permute.xlu0 %3237
    %vm3239 = vcmp.eq.s32.totalorder %v3182, %v63
    %vm3240 = vcmp.eq.s32.totalorder %v3182, %v64
    %vm3241 = vcmp.eq.s32.totalorder %v3190, %v63
    %vm3242 = vcmp.eq.s32.totalorder %v3190, %v64
    %vm3243 = vcmp.eq.s32.totalorder %v3198, %v63
    %vm3244 = vcmp.eq.s32.totalorder %v3198, %v64
    %vm3245 = vcmp.eq.s32.totalorder %v3206, %v63
    %vm3246 = vcmp.eq.s32.totalorder %v3206, %v64
    %vm3247 = vcmp.eq.s32.totalorder %v3214, %v63
    %vm3248 = vcmp.eq.s32.totalorder %v3214, %v64
    %vm3249 = vcmp.eq.s32.totalorder %v3222, %v63
    %vm3250 = vcmp.eq.s32.totalorder %v3222, %v64
    %vm3251 = vcmp.eq.s32.totalorder %v3230, %v63
    %vm3252 = vcmp.eq.s32.totalorder %v3230, %v64
    %vm3253 = vcmp.eq.s32.totalorder %v3238, %v63
    %vm3254 = vcmp.eq.s32.totalorder %v3238, %v64
    %v3255 = vsel %vm3239, 1, 0
    %v3256 = vsel %vm3240, 1, 0
    %v3257 = vsel %vm3241, 1, 0
    %v3258 = vsel %vm3242, 1, 0
    %v3259 = vsel %vm3243, 1, 0
    %v3260 = vsel %vm3244, 1, 0
    %v3261 = vsel %vm3245, 1, 0
    %v3262 = vsel %vm3246, 1, 0
    %v3263 = vsel %vm3247, 1, 0
    %v3264 = vsel %vm3248, 1, 0
    %v3265 = vsel %vm3249, 1, 0
    %v3266 = vsel %vm3250, 1, 0
    %v3267 = vsel %vm3251, 1, 0
    %v3268 = vsel %vm3252, 1, 0
    %v3269 = vsel %vm3253, 1, 0
    %v3270 = vsel %vm3254, 1, 0
    %v3271 = vcvt.s32.f32 %v3255
    %v3272 = vcvt.s32.f32 %v3256
    %v3273 = vcvt.s32.f32 %v3257
    %v3274 = vcvt.s32.f32 %v3258
    %v3275 = vcvt.s32.f32 %v3259
    %v3276 = vcvt.s32.f32 %v3260
    %v3277 = vcvt.s32.f32 %v3261
    %v3278 = vcvt.s32.f32 %v3262
    %v3279 = vcvt.s32.f32 %v3263
    %v3280 = vcvt.s32.f32 %v3264
    %v3281 = vcvt.s32.f32 %v3265
    %v3282 = vcvt.s32.f32 %v3266
    %v3283 = vcvt.s32.f32 %v3267
    %v3284 = vcvt.s32.f32 %v3268
    %v3285 = vcvt.s32.f32 %v3269
    %v3286 = vcvt.s32.f32 %v3270
    %v3287 = vpack.c.bf16 %v3271, %v3271
    %v3288 = vpack.c.bf16 %v3272, %v3272
    %v3289 = vpack.c.bf16 %v3273, %v3273
    %v3290 = vpack.c.bf16 %v3274, %v3274
    %v3291 = vpack.c.bf16 %v3275, %v3275
    %v3292 = vpack.c.bf16 %v3276, %v3276
    %v3293 = vpack.c.bf16 %v3277, %v3277
    %v3294 = vpack.c.bf16 %v3278, %v3278
    %v3295 = vpack.c.bf16 %v3279, %v3279
    %v3296 = vpack.c.bf16 %v3280, %v3280
    %v3297 = vpack.c.bf16 %v3281, %v3281
    %v3298 = vpack.c.bf16 %v3282, %v3282
    %v3299 = vpack.c.bf16 %v3283, %v3283
    %v3300 = vpack.c.bf16 %v3284, %v3284
    %v3301 = vpack.c.bf16 %v3285, %v3285
    %v3302 = vpack.c.bf16 %v3286, %v3286
    %v3303 = vld [vmem:[#allocation2] sm:$0xff]
    %v3304 = vld [vmem:[#allocation2 + $0x8] sm:$0xff]
    %v3305 = vunpack.c.l.bf16 %v3287
    %v3306 = vunpack.c.l.bf16 %v3288
    %v3307 = vunpack.c.l.bf16 %v3289
    %v3308 = vunpack.c.l.bf16 %v3290
    %v3309 = vunpack.c.l.bf16 %v3291
    %v3310 = vunpack.c.l.bf16 %v3292
    %v3311 = vunpack.c.l.bf16 %v3293
    %v3312 = vunpack.c.l.bf16 %v3294
    %v3313 = vunpack.c.l.bf16 %v3295
    %v3314 = vunpack.c.l.bf16 %v3296
    %v3315 = vunpack.c.l.bf16 %v3297
    %v3316 = vunpack.c.l.bf16 %v3298
    %v3317 = vunpack.c.l.bf16 %v3299
    %v3318 = vunpack.c.l.bf16 %v3300
    %v3319 = vunpack.c.l.bf16 %v3301
    %v3320 = vunpack.c.l.bf16 %v3302
    %v3321 = vrot.slane %v3305, 4
    %v3322 = vadd.f32 %v3305, %v3321
    %v3323 = vrot.slane %v3322, 2
    %v3324 = vadd.f32 %v3322, %v3323
    %v3325 = vrot.slane %v3324, 1
    %v3326 = vadd.f32 %v3324, %v3325
    %v3327 = vrot.slane %v3306, 4
    %v3328 = vadd.f32 %v3306, %v3327
    %v3329 = vrot.slane %v3328, 2
    %v3330 = vadd.f32 %v3328, %v3329
    %v3331 = vrot.slane %v3330, 1
    %v3332 = vadd.f32 %v3330, %v3331
    %v3333 = vrot.slane %v3307, 4
    %v3334 = vadd.f32 %v3307, %v3333
    %v3335 = vrot.slane %v3334, 2
    %v3336 = vadd.f32 %v3334, %v3335
    %v3337 = vrot.slane %v3336, 1
    %v3338 = vadd.f32 %v3336, %v3337
    %v3339 = vrot.slane %v3308, 4
    %v3340 = vadd.f32 %v3308, %v3339
    %v3341 = vrot.slane %v3340, 2
    %v3342 = vadd.f32 %v3340, %v3341
    %v3343 = vrot.slane %v3342, 1
    %v3344 = vadd.f32 %v3342, %v3343
    %v3345 = vrot.slane %v3309, 4
    %v3346 = vadd.f32 %v3309, %v3345
    %v3347 = vrot.slane %v3346, 2
    %v3348 = vadd.f32 %v3346, %v3347
    %v3349 = vrot.slane %v3348, 1
    %v3350 = vadd.f32 %v3348, %v3349
    %v3351 = vrot.slane %v3310, 4
    %v3352 = vadd.f32 %v3310, %v3351
    %v3353 = vrot.slane %v3352, 2
    %v3354 = vadd.f32 %v3352, %v3353
    %v3355 = vrot.slane %v3354, 1
    %v3356 = vadd.f32 %v3354, %v3355
    %v3357 = vrot.slane %v3311, 4
    %v3358 = vadd.f32 %v3311, %v3357
    %v3359 = vrot.slane %v3358, 2
    %v3360 = vadd.f32 %v3358, %v3359
    %v3361 = vrot.slane %v3360, 1
    %v3362 = vadd.f32 %v3360, %v3361
    %v3363 = vrot.slane %v3312, 4
    %v3364 = vadd.f32 %v3312, %v3363
    %v3365 = vrot.slane %v3364, 2
    %v3366 = vadd.f32 %v3364, %v3365
    %v3367 = vrot.slane %v3366, 1
    %v3368 = vadd.f32 %v3366, %v3367
    %v3369 = vrot.slane %v3313, 4
    %v3370 = vadd.f32 %v3313, %v3369
    %v3371 = vrot.slane %v3370, 2
    %v3372 = vadd.f32 %v3370, %v3371
    %v3373 = vrot.slane %v3372, 1
    %v3374 = vadd.f32 %v3372, %v3373
    %v3375 = vrot.slane %v3314, 4
    %v3376 = vadd.f32 %v3314, %v3375
    %v3377 = vrot.slane %v3376, 2
    %v3378 = vadd.f32 %v3376, %v3377
    %v3379 = vrot.slane %v3378, 1
    %v3380 = vadd.f32 %v3378, %v3379
    %v3381 = vrot.slane %v3315, 4
    %v3382 = vadd.f32 %v3315, %v3381
    %v3383 = vrot.slane %v3382, 2
    %v3384 = vadd.f32 %v3382, %v3383
    %v3385 = vrot.slane %v3384, 1
    %v3386 = vadd.f32 %v3384, %v3385
    %v3387 = vrot.slane %v3316, 4
    %v3388 = vadd.f32 %v3316, %v3387
    %v3389 = vrot.slane %v3388, 2
    %v3390 = vadd.f32 %v3388, %v3389
    %v3391 = vrot.slane %v3390, 1
    %v3392 = vadd.f32 %v3390, %v3391
    %v3393 = vrot.slane %v3317, 4
    %v3394 = vadd.f32 %v3317, %v3393
    %v3395 = vrot.slane %v3394, 2
    %v3396 = vadd.f32 %v3394, %v3395
    %v3397 = vrot.slane %v3396, 1
    %v3398 = vadd.f32 %v3396, %v3397
    %v3399 = vrot.slane %v3318, 4
    %v3400 = vadd.f32 %v3318, %v3399
    %v3401 = vrot.slane %v3400, 2
    %v3402 = vadd.f32 %v3400, %v3401
    %v3403 = vrot.slane %v3402, 1
    %v3404 = vadd.f32 %v3402, %v3403
    %v3405 = vrot.slane %v3319, 4
    %v3406 = vadd.f32 %v3319, %v3405
    %v3407 = vrot.slane %v3406, 2
    %v3408 = vadd.f32 %v3406, %v3407
    %v3409 = vrot.slane %v3408, 1
    %v3410 = vadd.f32 %v3408, %v3409
    %v3411 = vrot.slane %v3320, 4
    %v3412 = vadd.f32 %v3320, %v3411
    %v3413 = vrot.slane %v3412, 2
    %v3414 = vadd.f32 %v3412, %v3413
    %v3415 = vrot.slane %v3414, 1
    %v3416 = vadd.f32 %v3414, %v3415
    %v3417 = vpack.c.bf16 %v3326, %v3326
    %v3418 = vpack.c.bf16 %v3332, %v3332
    %v3419 = vpack.c.bf16 %v3338, %v3338
    %v3420 = vpack.c.bf16 %v3344, %v3344
    %v3421 = vpack.c.bf16 %v3350, %v3350
    %v3422 = vpack.c.bf16 %v3356, %v3356
    %v3423 = vpack.c.bf16 %v3362, %v3362
    %v3424 = vpack.c.bf16 %v3368, %v3368
    %v3425 = vpack.c.bf16 %v3374, %v3374
    %v3426 = vpack.c.bf16 %v3380, %v3380
    %v3427 = vpack.c.bf16 %v3386, %v3386
    %v3428 = vpack.c.bf16 %v3392, %v3392
    %v3429 = vpack.c.bf16 %v3398, %v3398
    %v3430 = vpack.c.bf16 %v3404, %v3404
    %v3431 = vpack.c.bf16 %v3410, %v3410
    %v3432 = vpack.c.bf16 %v3416, %v3416
    %v3433 = vunpack.c.l.bf16 %v3417
    %v3434 = vunpack.c.l.bf16 %v3418
    %v3435 = vunpack.c.l.bf16 %v3419
    %v3436 = vunpack.c.l.bf16 %v3420
    %v3437 = vunpack.c.l.bf16 %v3421
    %v3438 = vunpack.c.l.bf16 %v3422
    %v3439 = vunpack.c.l.bf16 %v3423
    %v3440 = vunpack.c.l.bf16 %v3424
    %v3441 = vunpack.c.l.bf16 %v3425
    %v3442 = vunpack.c.l.bf16 %v3426
    %v3443 = vunpack.c.l.bf16 %v3427
    %v3444 = vunpack.c.l.bf16 %v3428
    %v3445 = vunpack.c.l.bf16 %v3429
    %v3446 = vunpack.c.l.bf16 %v3430
    %v3447 = vunpack.c.l.bf16 %v3431
    %v3448 = vunpack.c.l.bf16 %v3432
    %v3465 = vsel %vm348, %v3435, %v3433
    %v3466 = vsel %vm350, %v3437, %v3465
    %v3467 = vsel %vm352, %v3439, %v3466
    %v3468 = vsel %vm354, %v3441, %v3467
    %v3469 = vsel %vm356, %v3443, %v3468
    %v3470 = vsel %vm358, %v3445, %v3469
    %v3471 = vsel %vm360, %v3447, %v3470
    %v3472 = vsel %vm348, %v3436, %v3434
    %v3473 = vsel %vm350, %v3438, %v3472
    %v3474 = vsel %vm352, %v3440, %v3473
    %v3475 = vsel %vm354, %v3442, %v3474
    %v3476 = vsel %vm356, %v3444, %v3475
    %v3477 = vsel %vm358, %v3446, %v3476
    %v3478 = vsel %vm360, %v3448, %v3477
    %v3481 = vadd.f32 %v3303, %v3471
    %v3482 = vadd.f32 %v3304, %v3478
    %3483 = vst [vmem:[#allocation2] sm:$0xff] %v3481
    %3484 = vst [vmem:[#allocation2 + $0x8] sm:$0xff] %v3482
    %v3485 = vld [vmem:[#allocation3] sm:$0xff]
    %v3486 = vlaneseq
    %v3487 = vshrl.u32 %v3486, 7
    %v3488 = vsub.s32 0, %v3487
    %v3489 = vrot.slane %v3485, %v3488
    %s3491 = sor.u32 256, 88
    %3492 = vbcast.lane.b32.xlu0 %v3489, %s3491
    %v3493 = vpop.permute.xlu0 %3492
    %v3494 = vlaneseq
    %v3495 = vshrl.u32 %v3494, 7
    %v3496 = vsub.s32 1, %v3495
    %v3497 = vrot.slane %v3485, %v3496
    %s3499 = sor.u32 256, 88
    %3500 = vbcast.lane.b32.xlu0 %v3497, %s3499
    %v3501 = vpop.permute.xlu0 %3500
    %v3502 = vlaneseq
    %v3503 = vshrl.u32 %v3502, 7
    %v3504 = vsub.s32 2, %v3503
    %v3505 = vrot.slane %v3485, %v3504
    %s3507 = sor.u32 256, 88
    %3508 = vbcast.lane.b32.xlu0 %v3505, %s3507
    %v3509 = vpop.permute.xlu0 %3508
    %v3510 = vlaneseq
    %v3511 = vshrl.u32 %v3510, 7
    %v3512 = vsub.s32 3, %v3511
    %v3513 = vrot.slane %v3485, %v3512
    %s3515 = sor.u32 256, 88
    %3516 = vbcast.lane.b32.xlu0 %v3513, %s3515
    %v3517 = vpop.permute.xlu0 %3516
    %v3518 = vlaneseq
    %v3519 = vshrl.u32 %v3518, 7
    %v3520 = vsub.s32 4, %v3519
    %v3521 = vrot.slane %v3485, %v3520
    %s3523 = sor.u32 256, 88
    %3524 = vbcast.lane.b32.xlu0 %v3521, %s3523
    %v3525 = vpop.permute.xlu0 %3524
    %v3526 = vlaneseq
    %v3527 = vshrl.u32 %v3526, 7
    %v3528 = vsub.s32 5, %v3527
    %v3529 = vrot.slane %v3485, %v3528
    %s3531 = sor.u32 256, 88
    %3532 = vbcast.lane.b32.xlu0 %v3529, %s3531
    %v3533 = vpop.permute.xlu0 %3532
    %v3534 = vlaneseq
    %v3535 = vshrl.u32 %v3534, 7
    %v3536 = vsub.s32 6, %v3535
    %v3537 = vrot.slane %v3485, %v3536
    %s3539 = sor.u32 256, 88
    %3540 = vbcast.lane.b32.xlu0 %v3537, %s3539
    %v3541 = vpop.permute.xlu0 %3540
    %v3542 = vlaneseq
    %v3543 = vshrl.u32 %v3542, 7
    %v3544 = vsub.s32 7, %v3543
    %v3545 = vrot.slane %v3485, %v3544
    %s3547 = sor.u32 256, 88
    %3548 = vbcast.lane.b32.xlu0 %v3545, %s3547
    %v3549 = vpop.permute.xlu0 %3548
    %vm3550 = vcmp.eq.s32.totalorder %v3493, %v63
    %vm3551 = vcmp.eq.s32.totalorder %v3493, %v64
    %vm3552 = vcmp.eq.s32.totalorder %v3501, %v63
    %vm3553 = vcmp.eq.s32.totalorder %v3501, %v64
    %vm3554 = vcmp.eq.s32.totalorder %v3509, %v63
    %vm3555 = vcmp.eq.s32.totalorder %v3509, %v64
    %vm3556 = vcmp.eq.s32.totalorder %v3517, %v63
    %vm3557 = vcmp.eq.s32.totalorder %v3517, %v64
    %vm3558 = vcmp.eq.s32.totalorder %v3525, %v63
    %vm3559 = vcmp.eq.s32.totalorder %v3525, %v64
    %vm3560 = vcmp.eq.s32.totalorder %v3533, %v63
    %vm3561 = vcmp.eq.s32.totalorder %v3533, %v64
    %vm3562 = vcmp.eq.s32.totalorder %v3541, %v63
    %vm3563 = vcmp.eq.s32.totalorder %v3541, %v64
    %vm3564 = vcmp.eq.s32.totalorder %v3549, %v63
    %vm3565 = vcmp.eq.s32.totalorder %v3549, %v64
    %v3566 = vsel %vm3550, 1, 0
    %v3567 = vsel %vm3551, 1, 0
    %v3568 = vsel %vm3552, 1, 0
    %v3569 = vsel %vm3553, 1, 0
    %v3570 = vsel %vm3554, 1, 0
    %v3571 = vsel %vm3555, 1, 0
    %v3572 = vsel %vm3556, 1, 0
    %v3573 = vsel %vm3557, 1, 0
    %v3574 = vsel %vm3558, 1, 0
    %v3575 = vsel %vm3559, 1, 0
    %v3576 = vsel %vm3560, 1, 0
    %v3577 = vsel %vm3561, 1, 0
    %v3578 = vsel %vm3562, 1, 0
    %v3579 = vsel %vm3563, 1, 0
    %v3580 = vsel %vm3564, 1, 0
    %v3581 = vsel %vm3565, 1, 0
    %v3582 = vcvt.s32.f32 %v3566
    %v3583 = vcvt.s32.f32 %v3567
    %v3584 = vcvt.s32.f32 %v3568
    %v3585 = vcvt.s32.f32 %v3569
    %v3586 = vcvt.s32.f32 %v3570
    %v3587 = vcvt.s32.f32 %v3571
    %v3588 = vcvt.s32.f32 %v3572
    %v3589 = vcvt.s32.f32 %v3573
    %v3590 = vcvt.s32.f32 %v3574
    %v3591 = vcvt.s32.f32 %v3575
    %v3592 = vcvt.s32.f32 %v3576
    %v3593 = vcvt.s32.f32 %v3577
    %v3594 = vcvt.s32.f32 %v3578
    %v3595 = vcvt.s32.f32 %v3579
    %v3596 = vcvt.s32.f32 %v3580
    %v3597 = vcvt.s32.f32 %v3581
    %v3598 = vpack.c.bf16 %v3582, %v3582
    %v3599 = vpack.c.bf16 %v3583, %v3583
    %v3600 = vpack.c.bf16 %v3584, %v3584
    %v3601 = vpack.c.bf16 %v3585, %v3585
    %v3602 = vpack.c.bf16 %v3586, %v3586
    %v3603 = vpack.c.bf16 %v3587, %v3587
    %v3604 = vpack.c.bf16 %v3588, %v3588
    %v3605 = vpack.c.bf16 %v3589, %v3589
    %v3606 = vpack.c.bf16 %v3590, %v3590
    %v3607 = vpack.c.bf16 %v3591, %v3591
    %v3608 = vpack.c.bf16 %v3592, %v3592
    %v3609 = vpack.c.bf16 %v3593, %v3593
    %v3610 = vpack.c.bf16 %v3594, %v3594
    %v3611 = vpack.c.bf16 %v3595, %v3595
    %v3612 = vpack.c.bf16 %v3596, %v3596
    %v3613 = vpack.c.bf16 %v3597, %v3597
    %v3614 = vld [vmem:[#allocation2] sm:$0xff]
    %v3615 = vld [vmem:[#allocation2 + $0x8] sm:$0xff]
    %v3616 = vunpack.c.l.bf16 %v3598
    %v3617 = vunpack.c.l.bf16 %v3599
    %v3618 = vunpack.c.l.bf16 %v3600
    %v3619 = vunpack.c.l.bf16 %v3601
    %v3620 = vunpack.c.l.bf16 %v3602
    %v3621 = vunpack.c.l.bf16 %v3603
    %v3622 = vunpack.c.l.bf16 %v3604
    %v3623 = vunpack.c.l.bf16 %v3605
    %v3624 = vunpack.c.l.bf16 %v3606
    %v3625 = vunpack.c.l.bf16 %v3607
    %v3626 = vunpack.c.l.bf16 %v3608
    %v3627 = vunpack.c.l.bf16 %v3609
    %v3628 = vunpack.c.l.bf16 %v3610
    %v3629 = vunpack.c.l.bf16 %v3611
    %v3630 = vunpack.c.l.bf16 %v3612
    %v3631 = vunpack.c.l.bf16 %v3613
    %v3632 = vrot.slane %v3616, 4
    %v3633 = vadd.f32 %v3616, %v3632
    %v3634 = vrot.slane %v3633, 2
    %v3635 = vadd.f32 %v3633, %v3634
    %v3636 = vrot.slane %v3635, 1
    %v3637 = vadd.f32 %v3635, %v3636
    %v3638 = vrot.slane %v3617, 4
    %v3639 = vadd.f32 %v3617, %v3638
    %v3640 = vrot.slane %v3639, 2
    %v3641 = vadd.f32 %v3639, %v3640
    %v3642 = vrot.slane %v3641, 1
    %v3643 = vadd.f32 %v3641, %v3642
    %v3644 = vrot.slane %v3618, 4
    %v3645 = vadd.f32 %v3618, %v3644
    %v3646 = vrot.slane %v3645, 2
    %v3647 = vadd.f32 %v3645, %v3646
    %v3648 = vrot.slane %v3647, 1
    %v3649 = vadd.f32 %v3647, %v3648
    %v3650 = vrot.slane %v3619, 4
    %v3651 = vadd.f32 %v3619, %v3650
    %v3652 = vrot.slane %v3651, 2
    %v3653 = vadd.f32 %v3651, %v3652
    %v3654 = vrot.slane %v3653, 1
    %v3655 = vadd.f32 %v3653, %v3654
    %v3656 = vrot.slane %v3620, 4
    %v3657 = vadd.f32 %v3620, %v3656
    %v3658 = vrot.slane %v3657, 2
    %v3659 = vadd.f32 %v3657, %v3658
    %v3660 = vrot.slane %v3659, 1
    %v3661 = vadd.f32 %v3659, %v3660
    %v3662 = vrot.slane %v3621, 4
    %v3663 = vadd.f32 %v3621, %v3662
    %v3664 = vrot.slane %v3663, 2
    %v3665 = vadd.f32 %v3663, %v3664
    %v3666 = vrot.slane %v3665, 1
    %v3667 = vadd.f32 %v3665, %v3666
    %v3668 = vrot.slane %v3622, 4
    %v3669 = vadd.f32 %v3622, %v3668
    %v3670 = vrot.slane %v3669, 2
    %v3671 = vadd.f32 %v3669, %v3670
    %v3672 = vrot.slane %v3671, 1
    %v3673 = vadd.f32 %v3671, %v3672
    %v3674 = vrot.slane %v3623, 4
    %v3675 = vadd.f32 %v3623, %v3674
    %v3676 = vrot.slane %v3675, 2
    %v3677 = vadd.f32 %v3675, %v3676
    %v3678 = vrot.slane %v3677, 1
    %v3679 = vadd.f32 %v3677, %v3678
    %v3680 = vrot.slane %v3624, 4
    %v3681 = vadd.f32 %v3624, %v3680
    %v3682 = vrot.slane %v3681, 2
    %v3683 = vadd.f32 %v3681, %v3682
    %v3684 = vrot.slane %v3683, 1
    %v3685 = vadd.f32 %v3683, %v3684
    %v3686 = vrot.slane %v3625, 4
    %v3687 = vadd.f32 %v3625, %v3686
    %v3688 = vrot.slane %v3687, 2
    %v3689 = vadd.f32 %v3687, %v3688
    %v3690 = vrot.slane %v3689, 1
    %v3691 = vadd.f32 %v3689, %v3690
    %v3692 = vrot.slane %v3626, 4
    %v3693 = vadd.f32 %v3626, %v3692
    %v3694 = vrot.slane %v3693, 2
    %v3695 = vadd.f32 %v3693, %v3694
    %v3696 = vrot.slane %v3695, 1
    %v3697 = vadd.f32 %v3695, %v3696
    %v3698 = vrot.slane %v3627, 4
    %v3699 = vadd.f32 %v3627, %v3698
    %v3700 = vrot.slane %v3699, 2
    %v3701 = vadd.f32 %v3699, %v3700
    %v3702 = vrot.slane %v3701, 1
    %v3703 = vadd.f32 %v3701, %v3702
    %v3704 = vrot.slane %v3628, 4
    %v3705 = vadd.f32 %v3628, %v3704
    %v3706 = vrot.slane %v3705, 2
    %v3707 = vadd.f32 %v3705, %v3706
    %v3708 = vrot.slane %v3707, 1
    %v3709 = vadd.f32 %v3707, %v3708
    %v3710 = vrot.slane %v3629, 4
    %v3711 = vadd.f32 %v3629, %v3710
    %v3712 = vrot.slane %v3711, 2
    %v3713 = vadd.f32 %v3711, %v3712
    %v3714 = vrot.slane %v3713, 1
    %v3715 = vadd.f32 %v3713, %v3714
    %v3716 = vrot.slane %v3630, 4
    %v3717 = vadd.f32 %v3630, %v3716
    %v3718 = vrot.slane %v3717, 2
    %v3719 = vadd.f32 %v3717, %v3718
    %v3720 = vrot.slane %v3719, 1
    %v3721 = vadd.f32 %v3719, %v3720
    %v3722 = vrot.slane %v3631, 4
    %v3723 = vadd.f32 %v3631, %v3722
    %v3724 = vrot.slane %v3723, 2
    %v3725 = vadd.f32 %v3723, %v3724
    %v3726 = vrot.slane %v3725, 1
    %v3727 = vadd.f32 %v3725, %v3726
    %v3728 = vpack.c.bf16 %v3637, %v3637
    %v3729 = vpack.c.bf16 %v3643, %v3643
    %v3730 = vpack.c.bf16 %v3649, %v3649
    %v3731 = vpack.c.bf16 %v3655, %v3655
    %v3732 = vpack.c.bf16 %v3661, %v3661
    %v3733 = vpack.c.bf16 %v3667, %v3667
    %v3734 = vpack.c.bf16 %v3673, %v3673
    %v3735 = vpack.c.bf16 %v3679, %v3679
    %v3736 = vpack.c.bf16 %v3685, %v3685
    %v3737 = vpack.c.bf16 %v3691, %v3691
    %v3738 = vpack.c.bf16 %v3697, %v3697
    %v3739 = vpack.c.bf16 %v3703, %v3703
    %v3740 = vpack.c.bf16 %v3709, %v3709
    %v3741 = vpack.c.bf16 %v3715, %v3715
    %v3742 = vpack.c.bf16 %v3721, %v3721
    %v3743 = vpack.c.bf16 %v3727, %v3727
    %v3744 = vunpack.c.l.bf16 %v3728
    %v3745 = vunpack.c.l.bf16 %v3729
    %v3746 = vunpack.c.l.bf16 %v3730
    %v3747 = vunpack.c.l.bf16 %v3731
    %v3748 = vunpack.c.l.bf16 %v3732
    %v3749 = vunpack.c.l.bf16 %v3733
    %v3750 = vunpack.c.l.bf16 %v3734
    %v3751 = vunpack.c.l.bf16 %v3735
    %v3752 = vunpack.c.l.bf16 %v3736
    %v3753 = vunpack.c.l.bf16 %v3737
    %v3754 = vunpack.c.l.bf16 %v3738
    %v3755 = vunpack.c.l.bf16 %v3739
    %v3756 = vunpack.c.l.bf16 %v3740
    %v3757 = vunpack.c.l.bf16 %v3741
    %v3758 = vunpack.c.l.bf16 %v3742
    %v3759 = vunpack.c.l.bf16 %v3743
    %v3776 = vsel %vm348, %v3746, %v3744
    %v3777 = vsel %vm350, %v3748, %v3776
    %v3778 = vsel %vm352, %v3750, %v3777
    %v3779 = vsel %vm354, %v3752, %v3778
    %v3780 = vsel %vm356, %v3754, %v3779
    %v3781 = vsel %vm358, %v3756, %v3780
    %v3782 = vsel %vm360, %v3758, %v3781
    %v3783 = vsel %vm348, %v3747, %v3745
    %v3784 = vsel %vm350, %v3749, %v3783
    %v3785 = vsel %vm352, %v3751, %v3784
    %v3786 = vsel %vm354, %v3753, %v3785
    %v3787 = vsel %vm356, %v3755, %v3786
    %v3788 = vsel %vm358, %v3757, %v3787
    %v3789 = vsel %vm360, %v3759, %v3788
    %v3792 = vadd.f32 %v3614, %v3782
    %v3793 = vadd.f32 %v3615, %v3789
    %3794 = vst [vmem:[#allocation2] sm:$0xff] %v3792
    %3795 = vst [vmem:[#allocation2 + $0x8] sm:$0xff] %v3793
    %v3796 = vld [vmem:[#allocation3] sm:$0xff]
    %v3797 = vlaneseq
    %v3798 = vshrl.u32 %v3797, 7
    %v3799 = vsub.s32 0, %v3798
    %v3800 = vrot.slane %v3796, %v3799
    %s3802 = sor.u32 256, 96
    %3803 = vbcast.lane.b32.xlu0 %v3800, %s3802
    %v3804 = vpop.permute.xlu0 %3803
    %v3805 = vlaneseq
    %v3806 = vshrl.u32 %v3805, 7
    %v3807 = vsub.s32 1, %v3806
    %v3808 = vrot.slane %v3796, %v3807
    %s3810 = sor.u32 256, 96
    %3811 = vbcast.lane.b32.xlu0 %v3808, %s3810
    %v3812 = vpop.permute.xlu0 %3811
    %v3813 = vlaneseq
    %v3814 = vshrl.u32 %v3813, 7
    %v3815 = vsub.s32 2, %v3814
    %v3816 = vrot.slane %v3796, %v3815
    %s3818 = sor.u32 256, 96
    %3819 = vbcast.lane.b32.xlu0 %v3816, %s3818
    %v3820 = vpop.permute.xlu0 %3819
    %v3821 = vlaneseq
    %v3822 = vshrl.u32 %v3821, 7
    %v3823 = vsub.s32 3, %v3822
    %v3824 = vrot.slane %v3796, %v3823
    %s3826 = sor.u32 256, 96
    %3827 = vbcast.lane.b32.xlu0 %v3824, %s3826
    %v3828 = vpop.permute.xlu0 %3827
    %v3829 = vlaneseq
    %v3830 = vshrl.u32 %v3829, 7
    %v3831 = vsub.s32 4, %v3830
    %v3832 = vrot.slane %v3796, %v3831
    %s3834 = sor.u32 256, 96
    %3835 = vbcast.lane.b32.xlu0 %v3832, %s3834
    %v3836 = vpop.permute.xlu0 %3835
    %v3837 = vlaneseq
    %v3838 = vshrl.u32 %v3837, 7
    %v3839 = vsub.s32 5, %v3838
    %v3840 = vrot.slane %v3796, %v3839
    %s3842 = sor.u32 256, 96
    %3843 = vbcast.lane.b32.xlu0 %v3840, %s3842
    %v3844 = vpop.permute.xlu0 %3843
    %v3845 = vlaneseq
    %v3846 = vshrl.u32 %v3845, 7
    %v3847 = vsub.s32 6, %v3846
    %v3848 = vrot.slane %v3796, %v3847
    %s3850 = sor.u32 256, 96
    %3851 = vbcast.lane.b32.xlu0 %v3848, %s3850
    %v3852 = vpop.permute.xlu0 %3851
    %v3853 = vlaneseq
    %v3854 = vshrl.u32 %v3853, 7
    %v3855 = vsub.s32 7, %v3854
    %v3856 = vrot.slane %v3796, %v3855
    %s3858 = sor.u32 256, 96
    %3859 = vbcast.lane.b32.xlu0 %v3856, %s3858
    %v3860 = vpop.permute.xlu0 %3859
    %vm3861 = vcmp.eq.s32.totalorder %v3804, %v63
    %vm3862 = vcmp.eq.s32.totalorder %v3804, %v64
    %vm3863 = vcmp.eq.s32.totalorder %v3812, %v63
    %vm3864 = vcmp.eq.s32.totalorder %v3812, %v64
    %vm3865 = vcmp.eq.s32.totalorder %v3820, %v63
    %vm3866 = vcmp.eq.s32.totalorder %v3820, %v64
    %vm3867 = vcmp.eq.s32.totalorder %v3828, %v63
    %vm3868 = vcmp.eq.s32.totalorder %v3828, %v64
    %vm3869 = vcmp.eq.s32.totalorder %v3836, %v63
    %vm3870 = vcmp.eq.s32.totalorder %v3836, %v64
    %vm3871 = vcmp.eq.s32.totalorder %v3844, %v63
    %vm3872 = vcmp.eq.s32.totalorder %v3844, %v64
    %vm3873 = vcmp.eq.s32.totalorder %v3852, %v63
    %vm3874 = vcmp.eq.s32.totalorder %v3852, %v64
    %vm3875 = vcmp.eq.s32.totalorder %v3860, %v63
    %vm3876 = vcmp.eq.s32.totalorder %v3860, %v64
    %v3877 = vsel %vm3861, 1, 0
    %v3878 = vsel %vm3862, 1, 0
    %v3879 = vsel %vm3863, 1, 0
    %v3880 = vsel %vm3864, 1, 0
    %v3881 = vsel %vm3865, 1, 0
    %v3882 = vsel %vm3866, 1, 0
    %v3883 = vsel %vm3867, 1, 0
    %v3884 = vsel %vm3868, 1, 0
    %v3885 = vsel %vm3869, 1, 0
    %v3886 = vsel %vm3870, 1, 0
    %v3887 = vsel %vm3871, 1, 0
    %v3888 = vsel %vm3872, 1, 0
    %v3889 = vsel %vm3873, 1, 0
    %v3890 = vsel %vm3874, 1, 0
    %v3891 = vsel %vm3875, 1, 0
    %v3892 = vsel %vm3876, 1, 0
    %v3893 = vcvt.s32.f32 %v3877
    %v3894 = vcvt.s32.f32 %v3878
    %v3895 = vcvt.s32.f32 %v3879
    %v3896 = vcvt.s32.f32 %v3880
    %v3897 = vcvt.s32.f32 %v3881
    %v3898 = vcvt.s32.f32 %v3882
    %v3899 = vcvt.s32.f32 %v3883
    %v3900 = vcvt.s32.f32 %v3884
    %v3901 = vcvt.s32.f32 %v3885
    %v3902 = vcvt.s32.f32 %v3886
    %v3903 = vcvt.s32.f32 %v3887
    %v3904 = vcvt.s32.f32 %v3888
    %v3905 = vcvt.s32.f32 %v3889
    %v3906 = vcvt.s32.f32 %v3890
    %v3907 = vcvt.s32.f32 %v3891
    %v3908 = vcvt.s32.f32 %v3892
    %v3909 = vpack.c.bf16 %v3893, %v3893
    %v3910 = vpack.c.bf16 %v3894, %v3894
    %v3911 = vpack.c.bf16 %v3895, %v3895
    %v3912 = vpack.c.bf16 %v3896, %v3896
    %v3913 = vpack.c.bf16 %v3897, %v3897
    %v3914 = vpack.c.bf16 %v3898, %v3898
    %v3915 = vpack.c.bf16 %v3899, %v3899
    %v3916 = vpack.c.bf16 %v3900, %v3900
    %v3917 = vpack.c.bf16 %v3901, %v3901
    %v3918 = vpack.c.bf16 %v3902, %v3902
    %v3919 = vpack.c.bf16 %v3903, %v3903
    %v3920 = vpack.c.bf16 %v3904, %v3904
    %v3921 = vpack.c.bf16 %v3905, %v3905
    %v3922 = vpack.c.bf16 %v3906, %v3906
    %v3923 = vpack.c.bf16 %v3907, %v3907
    %v3924 = vpack.c.bf16 %v3908, %v3908
    %v3925 = vld [vmem:[#allocation2] sm:$0xff]
    %v3926 = vld [vmem:[#allocation2 + $0x8] sm:$0xff]
    %v3927 = vunpack.c.l.bf16 %v3909
    %v3928 = vunpack.c.l.bf16 %v3910
    %v3929 = vunpack.c.l.bf16 %v3911
    %v3930 = vunpack.c.l.bf16 %v3912
    %v3931 = vunpack.c.l.bf16 %v3913
    %v3932 = vunpack.c.l.bf16 %v3914
    %v3933 = vunpack.c.l.bf16 %v3915
    %v3934 = vunpack.c.l.bf16 %v3916
    %v3935 = vunpack.c.l.bf16 %v3917
    %v3936 = vunpack.c.l.bf16 %v3918
    %v3937 = vunpack.c.l.bf16 %v3919
    %v3938 = vunpack.c.l.bf16 %v3920
    %v3939 = vunpack.c.l.bf16 %v3921
    %v3940 = vunpack.c.l.bf16 %v3922
    %v3941 = vunpack.c.l.bf16 %v3923
    %v3942 = vunpack.c.l.bf16 %v3924
    %v3943 = vrot.slane %v3927, 4
    %v3944 = vadd.f32 %v3927, %v3943
    %v3945 = vrot.slane %v3944, 2
    %v3946 = vadd.f32 %v3944, %v3945
    %v3947 = vrot.slane %v3946, 1
    %v3948 = vadd.f32 %v3946, %v3947
    %v3949 = vrot.slane %v3928, 4
    %v3950 = vadd.f32 %v3928, %v3949
    %v3951 = vrot.slane %v3950, 2
    %v3952 = vadd.f32 %v3950, %v3951
    %v3953 = vrot.slane %v3952, 1
    %v3954 = vadd.f32 %v3952, %v3953
    %v3955 = vrot.slane %v3929, 4
    %v3956 = vadd.f32 %v3929, %v3955
    %v3957 = vrot.slane %v3956, 2
    %v3958 = vadd.f32 %v3956, %v3957
    %v3959 = vrot.slane %v3958, 1
    %v3960 = vadd.f32 %v3958, %v3959
    %v3961 = vrot.slane %v3930, 4
    %v3962 = vadd.f32 %v3930, %v3961
    %v3963 = vrot.slane %v3962, 2
    %v3964 = vadd.f32 %v3962, %v3963
    %v3965 = vrot.slane %v3964, 1
    %v3966 = vadd.f32 %v3964, %v3965
    %v3967 = vrot.slane %v3931, 4
    %v3968 = vadd.f32 %v3931, %v3967
    %v3969 = vrot.slane %v3968, 2
    %v3970 = vadd.f32 %v3968, %v3969
    %v3971 = vrot.slane %v3970, 1
    %v3972 = vadd.f32 %v3970, %v3971
    %v3973 = vrot.slane %v3932, 4
    %v3974 = vadd.f32 %v3932, %v3973
    %v3975 = vrot.slane %v3974, 2
    %v3976 = vadd.f32 %v3974, %v3975
    %v3977 = vrot.slane %v3976, 1
    %v3978 = vadd.f32 %v3976, %v3977
    %v3979 = vrot.slane %v3933, 4
    %v3980 = vadd.f32 %v3933, %v3979
    %v3981 = vrot.slane %v3980, 2
    %v3982 = vadd.f32 %v3980, %v3981
    %v3983 = vrot.slane %v3982, 1
    %v3984 = vadd.f32 %v3982, %v3983
    %v3985 = vrot.slane %v3934, 4
    %v3986 = vadd.f32 %v3934, %v3985
    %v3987 = vrot.slane %v3986, 2
    %v3988 = vadd.f32 %v3986, %v3987
    %v3989 = vrot.slane %v3988, 1
    %v3990 = vadd.f32 %v3988, %v3989
    %v3991 = vrot.slane %v3935, 4
    %v3992 = vadd.f32 %v3935, %v3991
    %v3993 = vrot.slane %v3992, 2
    %v3994 = vadd.f32 %v3992, %v3993
    %v3995 = vrot.slane %v3994, 1
    %v3996 = vadd.f32 %v3994, %v3995
    %v3997 = vrot.slane %v3936, 4
    %v3998 = vadd.f32 %v3936, %v3997
    %v3999 = vrot.slane %v3998, 2
    %v4000 = vadd.f32 %v3998, %v3999
    %v4001 = vrot.slane %v4000, 1
    %v4002 = vadd.f32 %v4000, %v4001
    %v4003 = vrot.slane %v3937, 4
    %v4004 = vadd.f32 %v3937, %v4003
    %v4005 = vrot.slane %v4004, 2
    %v4006 = vadd.f32 %v4004, %v4005
    %v4007 = vrot.slane %v4006, 1
    %v4008 = vadd.f32 %v4006, %v4007
    %v4009 = vrot.slane %v3938, 4
    %v4010 = vadd.f32 %v3938, %v4009
    %v4011 = vrot.slane %v4010, 2
    %v4012 = vadd.f32 %v4010, %v4011
    %v4013 = vrot.slane %v4012, 1
    %v4014 = vadd.f32 %v4012, %v4013
    %v4015 = vrot.slane %v3939, 4
    %v4016 = vadd.f32 %v3939, %v4015
    %v4017 = vrot.slane %v4016, 2
    %v4018 = vadd.f32 %v4016, %v4017
    %v4019 = vrot.slane %v4018, 1
    %v4020 = vadd.f32 %v4018, %v4019
    %v4021 = vrot.slane %v3940, 4
    %v4022 = vadd.f32 %v3940, %v4021
    %v4023 = vrot.slane %v4022, 2
    %v4024 = vadd.f32 %v4022, %v4023
    %v4025 = vrot.slane %v4024, 1
    %v4026 = vadd.f32 %v4024, %v4025
    %v4027 = vrot.slane %v3941, 4
    %v4028 = vadd.f32 %v3941, %v4027
    %v4029 = vrot.slane %v4028, 2
    %v4030 = vadd.f32 %v4028, %v4029
    %v4031 = vrot.slane %v4030, 1
    %v4032 = vadd.f32 %v4030, %v4031
    %v4033 = vrot.slane %v3942, 4
    %v4034 = vadd.f32 %v3942, %v4033
    %v4035 = vrot.slane %v4034, 2
    %v4036 = vadd.f32 %v4034, %v4035
    %v4037 = vrot.slane %v4036, 1
    %v4038 = vadd.f32 %v4036, %v4037
    %v4039 = vpack.c.bf16 %v3948, %v3948
    %v4040 = vpack.c.bf16 %v3954, %v3954
    %v4041 = vpack.c.bf16 %v3960, %v3960
    %v4042 = vpack.c.bf16 %v3966, %v3966
    %v4043 = vpack.c.bf16 %v3972, %v3972
    %v4044 = vpack.c.bf16 %v3978, %v3978
    %v4045 = vpack.c.bf16 %v3984, %v3984
    %v4046 = vpack.c.bf16 %v3990, %v3990
    %v4047 = vpack.c.bf16 %v3996, %v3996
    %v4048 = vpack.c.bf16 %v4002, %v4002
    %v4049 = vpack.c.bf16 %v4008, %v4008
    %v4050 = vpack.c.bf16 %v4014, %v4014
    %v4051 = vpack.c.bf16 %v4020, %v4020
    %v4052 = vpack.c.bf16 %v4026, %v4026
    %v4053 = vpack.c.bf16 %v4032, %v4032
    %v4054 = vpack.c.bf16 %v4038, %v4038
    %v4055 = vunpack.c.l.bf16 %v4039
    %v4056 = vunpack.c.l.bf16 %v4040
    %v4057 = vunpack.c.l.bf16 %v4041
    %v4058 = vunpack.c.l.bf16 %v4042
    %v4059 = vunpack.c.l.bf16 %v4043
    %v4060 = vunpack.c.l.bf16 %v4044
    %v4061 = vunpack.c.l.bf16 %v4045
    %v4062 = vunpack.c.l.bf16 %v4046
    %v4063 = vunpack.c.l.bf16 %v4047
    %v4064 = vunpack.c.l.bf16 %v4048
    %v4065 = vunpack.c.l.bf16 %v4049
    %v4066 = vunpack.c.l.bf16 %v4050
    %v4067 = vunpack.c.l.bf16 %v4051
    %v4068 = vunpack.c.l.bf16 %v4052
    %v4069 = vunpack.c.l.bf16 %v4053
    %v4070 = vunpack.c.l.bf16 %v4054
    %v4087 = vsel %vm348, %v4057, %v4055
    %v4088 = vsel %vm350, %v4059, %v4087
    %v4089 = vsel %vm352, %v4061, %v4088
    %v4090 = vsel %vm354, %v4063, %v4089
    %v4091 = vsel %vm356, %v4065, %v4090
    %v4092 = vsel %vm358, %v4067, %v4091
    %v4093 = vsel %vm360, %v4069, %v4092
    %v4094 = vsel %vm348, %v4058, %v4056
    %v4095 = vsel %vm350, %v4060, %v4094
    %v4096 = vsel %vm352, %v4062, %v4095
    %v4097 = vsel %vm354, %v4064, %v4096
    %v4098 = vsel %vm356, %v4066, %v4097
    %v4099 = vsel %vm358, %v4068, %v4098
    %v4100 = vsel %vm360, %v4070, %v4099
    %v4103 = vadd.f32 %v3925, %v4093
    %v4104 = vadd.f32 %v3926, %v4100
    %4105 = vst [vmem:[#allocation2] sm:$0xff] %v4103
    %4106 = vst [vmem:[#allocation2 + $0x8] sm:$0xff] %v4104
    %v4107 = vld [vmem:[#allocation3] sm:$0xff]
    %v4108 = vlaneseq
    %v4109 = vshrl.u32 %v4108, 7
    %v4110 = vsub.s32 0, %v4109
    %v4111 = vrot.slane %v4107, %v4110
    %s4113 = sor.u32 256, 104
    %4114 = vbcast.lane.b32.xlu0 %v4111, %s4113
    %v4115 = vpop.permute.xlu0 %4114
    %v4116 = vlaneseq
    %v4117 = vshrl.u32 %v4116, 7
    %v4118 = vsub.s32 1, %v4117
    %v4119 = vrot.slane %v4107, %v4118
    %s4121 = sor.u32 256, 104
    %4122 = vbcast.lane.b32.xlu0 %v4119, %s4121
    %v4123 = vpop.permute.xlu0 %4122
    %v4124 = vlaneseq
    %v4125 = vshrl.u32 %v4124, 7
    %v4126 = vsub.s32 2, %v4125
    %v4127 = vrot.slane %v4107, %v4126
    %s4129 = sor.u32 256, 104
    %4130 = vbcast.lane.b32.xlu0 %v4127, %s4129
    %v4131 = vpop.permute.xlu0 %4130
    %v4132 = vlaneseq
    %v4133 = vshrl.u32 %v4132, 7
    %v4134 = vsub.s32 3, %v4133
    %v4135 = vrot.slane %v4107, %v4134
    %s4137 = sor.u32 256, 104
    %4138 = vbcast.lane.b32.xlu0 %v4135, %s4137
    %v4139 = vpop.permute.xlu0 %4138
    %v4140 = vlaneseq
    %v4141 = vshrl.u32 %v4140, 7
    %v4142 = vsub.s32 4, %v4141
    %v4143 = vrot.slane %v4107, %v4142
    %s4145 = sor.u32 256, 104
    %4146 = vbcast.lane.b32.xlu0 %v4143, %s4145
    %v4147 = vpop.permute.xlu0 %4146
    %v4148 = vlaneseq
    %v4149 = vshrl.u32 %v4148, 7
    %v4150 = vsub.s32 5, %v4149
    %v4151 = vrot.slane %v4107, %v4150
    %s4153 = sor.u32 256, 104
    %4154 = vbcast.lane.b32.xlu0 %v4151, %s4153
    %v4155 = vpop.permute.xlu0 %4154
    %v4156 = vlaneseq
    %v4157 = vshrl.u32 %v4156, 7
    %v4158 = vsub.s32 6, %v4157
    %v4159 = vrot.slane %v4107, %v4158
    %s4161 = sor.u32 256, 104
    %4162 = vbcast.lane.b32.xlu0 %v4159, %s4161
    %v4163 = vpop.permute.xlu0 %4162
    %v4164 = vlaneseq
    %v4165 = vshrl.u32 %v4164, 7
    %v4166 = vsub.s32 7, %v4165
    %v4167 = vrot.slane %v4107, %v4166
    %s4169 = sor.u32 256, 104
    %4170 = vbcast.lane.b32.xlu0 %v4167, %s4169
    %v4171 = vpop.permute.xlu0 %4170
    %vm4172 = vcmp.eq.s32.totalorder %v4115, %v63
    %vm4173 = vcmp.eq.s32.totalorder %v4115, %v64
    %vm4174 = vcmp.eq.s32.totalorder %v4123, %v63
    %vm4175 = vcmp.eq.s32.totalorder %v4123, %v64
    %vm4176 = vcmp.eq.s32.totalorder %v4131, %v63
    %vm4177 = vcmp.eq.s32.totalorder %v4131, %v64
    %vm4178 = vcmp.eq.s32.totalorder %v4139, %v63
    %vm4179 = vcmp.eq.s32.totalorder %v4139, %v64
    %vm4180 = vcmp.eq.s32.totalorder %v4147, %v63
    %vm4181 = vcmp.eq.s32.totalorder %v4147, %v64
    %vm4182 = vcmp.eq.s32.totalorder %v4155, %v63
    %vm4183 = vcmp.eq.s32.totalorder %v4155, %v64
    %vm4184 = vcmp.eq.s32.totalorder %v4163, %v63
    %vm4185 = vcmp.eq.s32.totalorder %v4163, %v64
    %vm4186 = vcmp.eq.s32.totalorder %v4171, %v63
    %vm4187 = vcmp.eq.s32.totalorder %v4171, %v64
    %v4188 = vsel %vm4172, 1, 0
    %v4189 = vsel %vm4173, 1, 0
    %v4190 = vsel %vm4174, 1, 0
    %v4191 = vsel %vm4175, 1, 0
    %v4192 = vsel %vm4176, 1, 0
    %v4193 = vsel %vm4177, 1, 0
    %v4194 = vsel %vm4178, 1, 0
    %v4195 = vsel %vm4179, 1, 0
    %v4196 = vsel %vm4180, 1, 0
    %v4197 = vsel %vm4181, 1, 0
    %v4198 = vsel %vm4182, 1, 0
    %v4199 = vsel %vm4183, 1, 0
    %v4200 = vsel %vm4184, 1, 0
    %v4201 = vsel %vm4185, 1, 0
    %v4202 = vsel %vm4186, 1, 0
    %v4203 = vsel %vm4187, 1, 0
    %v4204 = vcvt.s32.f32 %v4188
    %v4205 = vcvt.s32.f32 %v4189
    %v4206 = vcvt.s32.f32 %v4190
    %v4207 = vcvt.s32.f32 %v4191
    %v4208 = vcvt.s32.f32 %v4192
    %v4209 = vcvt.s32.f32 %v4193
    %v4210 = vcvt.s32.f32 %v4194
    %v4211 = vcvt.s32.f32 %v4195
    %v4212 = vcvt.s32.f32 %v4196
    %v4213 = vcvt.s32.f32 %v4197
    %v4214 = vcvt.s32.f32 %v4198
    %v4215 = vcvt.s32.f32 %v4199
    %v4216 = vcvt.s32.f32 %v4200
    %v4217 = vcvt.s32.f32 %v4201
    %v4218 = vcvt.s32.f32 %v4202
    %v4219 = vcvt.s32.f32 %v4203
    %v4220 = vpack.c.bf16 %v4204, %v4204
    %v4221 = vpack.c.bf16 %v4205, %v4205
    %v4222 = vpack.c.bf16 %v4206, %v4206
    %v4223 = vpack.c.bf16 %v4207, %v4207
    %v4224 = vpack.c.bf16 %v4208, %v4208
    %v4225 = vpack.c.bf16 %v4209, %v4209
    %v4226 = vpack.c.bf16 %v4210, %v4210
    %v4227 = vpack.c.bf16 %v4211, %v4211
    %v4228 = vpack.c.bf16 %v4212, %v4212
    %v4229 = vpack.c.bf16 %v4213, %v4213
    %v4230 = vpack.c.bf16 %v4214, %v4214
    %v4231 = vpack.c.bf16 %v4215, %v4215
    %v4232 = vpack.c.bf16 %v4216, %v4216
    %v4233 = vpack.c.bf16 %v4217, %v4217
    %v4234 = vpack.c.bf16 %v4218, %v4218
    %v4235 = vpack.c.bf16 %v4219, %v4219
    %v4236 = vld [vmem:[#allocation2] sm:$0xff]
    %v4237 = vld [vmem:[#allocation2 + $0x8] sm:$0xff]
    %v4238 = vunpack.c.l.bf16 %v4220
    %v4239 = vunpack.c.l.bf16 %v4221
    %v4240 = vunpack.c.l.bf16 %v4222
    %v4241 = vunpack.c.l.bf16 %v4223
    %v4242 = vunpack.c.l.bf16 %v4224
    %v4243 = vunpack.c.l.bf16 %v4225
    %v4244 = vunpack.c.l.bf16 %v4226
    %v4245 = vunpack.c.l.bf16 %v4227
    %v4246 = vunpack.c.l.bf16 %v4228
    %v4247 = vunpack.c.l.bf16 %v4229
    %v4248 = vunpack.c.l.bf16 %v4230
    %v4249 = vunpack.c.l.bf16 %v4231
    %v4250 = vunpack.c.l.bf16 %v4232
    %v4251 = vunpack.c.l.bf16 %v4233
    %v4252 = vunpack.c.l.bf16 %v4234
    %v4253 = vunpack.c.l.bf16 %v4235
    %v4254 = vrot.slane %v4238, 4
    %v4255 = vadd.f32 %v4238, %v4254
    %v4256 = vrot.slane %v4255, 2
    %v4257 = vadd.f32 %v4255, %v4256
    %v4258 = vrot.slane %v4257, 1
    %v4259 = vadd.f32 %v4257, %v4258
    %v4260 = vrot.slane %v4239, 4
    %v4261 = vadd.f32 %v4239, %v4260
    %v4262 = vrot.slane %v4261, 2
    %v4263 = vadd.f32 %v4261, %v4262
    %v4264 = vrot.slane %v4263, 1
    %v4265 = vadd.f32 %v4263, %v4264
    %v4266 = vrot.slane %v4240, 4
    %v4267 = vadd.f32 %v4240, %v4266
    %v4268 = vrot.slane %v4267, 2
    %v4269 = vadd.f32 %v4267, %v4268
    %v4270 = vrot.slane %v4269, 1
    %v4271 = vadd.f32 %v4269, %v4270
    %v4272 = vrot.slane %v4241, 4
    %v4273 = vadd.f32 %v4241, %v4272
    %v4274 = vrot.slane %v4273, 2
    %v4275 = vadd.f32 %v4273, %v4274
    %v4276 = vrot.slane %v4275, 1
    %v4277 = vadd.f32 %v4275, %v4276
    %v4278 = vrot.slane %v4242, 4
    %v4279 = vadd.f32 %v4242, %v4278
    %v4280 = vrot.slane %v4279, 2
    %v4281 = vadd.f32 %v4279, %v4280
    %v4282 = vrot.slane %v4281, 1
    %v4283 = vadd.f32 %v4281, %v4282
    %v4284 = vrot.slane %v4243, 4
    %v4285 = vadd.f32 %v4243, %v4284
    %v4286 = vrot.slane %v4285, 2
    %v4287 = vadd.f32 %v4285, %v4286
    %v4288 = vrot.slane %v4287, 1
    %v4289 = vadd.f32 %v4287, %v4288
    %v4290 = vrot.slane %v4244, 4
    %v4291 = vadd.f32 %v4244, %v4290
    %v4292 = vrot.slane %v4291, 2
    %v4293 = vadd.f32 %v4291, %v4292
    %v4294 = vrot.slane %v4293, 1
    %v4295 = vadd.f32 %v4293, %v4294
    %v4296 = vrot.slane %v4245, 4
    %v4297 = vadd.f32 %v4245, %v4296
    %v4298 = vrot.slane %v4297, 2
    %v4299 = vadd.f32 %v4297, %v4298
    %v4300 = vrot.slane %v4299, 1
    %v4301 = vadd.f32 %v4299, %v4300
    %v4302 = vrot.slane %v4246, 4
    %v4303 = vadd.f32 %v4246, %v4302
    %v4304 = vrot.slane %v4303, 2
    %v4305 = vadd.f32 %v4303, %v4304
    %v4306 = vrot.slane %v4305, 1
    %v4307 = vadd.f32 %v4305, %v4306
    %v4308 = vrot.slane %v4247, 4
    %v4309 = vadd.f32 %v4247, %v4308
    %v4310 = vrot.slane %v4309, 2
    %v4311 = vadd.f32 %v4309, %v4310
    %v4312 = vrot.slane %v4311, 1
    %v4313 = vadd.f32 %v4311, %v4312
    %v4314 = vrot.slane %v4248, 4
    %v4315 = vadd.f32 %v4248, %v4314
    %v4316 = vrot.slane %v4315, 2
    %v4317 = vadd.f32 %v4315, %v4316
    %v4318 = vrot.slane %v4317, 1
    %v4319 = vadd.f32 %v4317, %v4318
    %v4320 = vrot.slane %v4249, 4
    %v4321 = vadd.f32 %v4249, %v4320
    %v4322 = vrot.slane %v4321, 2
    %v4323 = vadd.f32 %v4321, %v4322
    %v4324 = vrot.slane %v4323, 1
    %v4325 = vadd.f32 %v4323, %v4324
    %v4326 = vrot.slane %v4250, 4
    %v4327 = vadd.f32 %v4250, %v4326
    %v4328 = vrot.slane %v4327, 2
    %v4329 = vadd.f32 %v4327, %v4328
    %v4330 = vrot.slane %v4329, 1
    %v4331 = vadd.f32 %v4329, %v4330
    %v4332 = vrot.slane %v4251, 4
    %v4333 = vadd.f32 %v4251, %v4332
    %v4334 = vrot.slane %v4333, 2
    %v4335 = vadd.f32 %v4333, %v4334
    %v4336 = vrot.slane %v4335, 1
    %v4337 = vadd.f32 %v4335, %v4336
    %v4338 = vrot.slane %v4252, 4
    %v4339 = vadd.f32 %v4252, %v4338
    %v4340 = vrot.slane %v4339, 2
    %v4341 = vadd.f32 %v4339, %v4340
    %v4342 = vrot.slane %v4341, 1
    %v4343 = vadd.f32 %v4341, %v4342
    %v4344 = vrot.slane %v4253, 4
    %v4345 = vadd.f32 %v4253, %v4344
    %v4346 = vrot.slane %v4345, 2
    %v4347 = vadd.f32 %v4345, %v4346
    %v4348 = vrot.slane %v4347, 1
    %v4349 = vadd.f32 %v4347, %v4348
    %v4350 = vpack.c.bf16 %v4259, %v4259
    %v4351 = vpack.c.bf16 %v4265, %v4265
    %v4352 = vpack.c.bf16 %v4271, %v4271
    %v4353 = vpack.c.bf16 %v4277, %v4277
    %v4354 = vpack.c.bf16 %v4283, %v4283
    %v4355 = vpack.c.bf16 %v4289, %v4289
    %v4356 = vpack.c.bf16 %v4295, %v4295
    %v4357 = vpack.c.bf16 %v4301, %v4301
    %v4358 = vpack.c.bf16 %v4307, %v4307
    %v4359 = vpack.c.bf16 %v4313, %v4313
    %v4360 = vpack.c.bf16 %v4319, %v4319
    %v4361 = vpack.c.bf16 %v4325, %v4325
    %v4362 = vpack.c.bf16 %v4331, %v4331
    %v4363 = vpack.c.bf16 %v4337, %v4337
    %v4364 = vpack.c.bf16 %v4343, %v4343
    %v4365 = vpack.c.bf16 %v4349, %v4349
    %v4366 = vunpack.c.l.bf16 %v4350
    %v4367 = vunpack.c.l.bf16 %v4351
    %v4368 = vunpack.c.l.bf16 %v4352
    %v4369 = vunpack.c.l.bf16 %v4353
    %v4370 = vunpack.c.l.bf16 %v4354
    %v4371 = vunpack.c.l.bf16 %v4355
    %v4372 = vunpack.c.l.bf16 %v4356
    %v4373 = vunpack.c.l.bf16 %v4357
    %v4374 = vunpack.c.l.bf16 %v4358
    %v4375 = vunpack.c.l.bf16 %v4359
    %v4376 = vunpack.c.l.bf16 %v4360
    %v4377 = vunpack.c.l.bf16 %v4361
    %v4378 = vunpack.c.l.bf16 %v4362
    %v4379 = vunpack.c.l.bf16 %v4363
    %v4380 = vunpack.c.l.bf16 %v4364
    %v4381 = vunpack.c.l.bf16 %v4365
    %v4398 = vsel %vm348, %v4368, %v4366
    %v4399 = vsel %vm350, %v4370, %v4398
    %v4400 = vsel %vm352, %v4372, %v4399
    %v4401 = vsel %vm354, %v4374, %v4400
    %v4402 = vsel %vm356, %v4376, %v4401
    %v4403 = vsel %vm358, %v4378, %v4402
    %v4404 = vsel %vm360, %v4380, %v4403
    %v4405 = vsel %vm348, %v4369, %v4367
    %v4406 = vsel %vm350, %v4371, %v4405
    %v4407 = vsel %vm352, %v4373, %v4406
    %v4408 = vsel %vm354, %v4375, %v4407
    %v4409 = vsel %vm356, %v4377, %v4408
    %v4410 = vsel %vm358, %v4379, %v4409
    %v4411 = vsel %vm360, %v4381, %v4410
    %v4414 = vadd.f32 %v4236, %v4404
    %v4415 = vadd.f32 %v4237, %v4411
    %4416 = vst [vmem:[#allocation2] sm:$0xff] %v4414
    %4417 = vst [vmem:[#allocation2 + $0x8] sm:$0xff] %v4415
    %v4418 = vld [vmem:[#allocation3] sm:$0xff]
    %v4419 = vlaneseq
    %v4420 = vshrl.u32 %v4419, 7
    %v4421 = vsub.s32 0, %v4420
    %v4422 = vrot.slane %v4418, %v4421
    %s4424 = sor.u32 256, 112
    %4425 = vbcast.lane.b32.xlu0 %v4422, %s4424
    %v4426 = vpop.permute.xlu0 %4425
    %v4427 = vlaneseq
    %v4428 = vshrl.u32 %v4427, 7
    %v4429 = vsub.s32 1, %v4428
    %v4430 = vrot.slane %v4418, %v4429
    %s4432 = sor.u32 256, 112
    %4433 = vbcast.lane.b32.xlu0 %v4430, %s4432
    %v4434 = vpop.permute.xlu0 %4433
    %v4435 = vlaneseq
    %v4436 = vshrl.u32 %v4435, 7
    %v4437 = vsub.s32 2, %v4436
    %v4438 = vrot.slane %v4418, %v4437
    %s4440 = sor.u32 256, 112
    %4441 = vbcast.lane.b32.xlu0 %v4438, %s4440
    %v4442 = vpop.permute.xlu0 %4441
    %v4443 = vlaneseq
    %v4444 = vshrl.u32 %v4443, 7
    %v4445 = vsub.s32 3, %v4444
    %v4446 = vrot.slane %v4418, %v4445
    %s4448 = sor.u32 256, 112
    %4449 = vbcast.lane.b32.xlu0 %v4446, %s4448
    %v4450 = vpop.permute.xlu0 %4449
    %v4451 = vlaneseq
    %v4452 = vshrl.u32 %v4451, 7
    %v4453 = vsub.s32 4, %v4452
    %v4454 = vrot.slane %v4418, %v4453
    %s4456 = sor.u32 256, 112
    %4457 = vbcast.lane.b32.xlu0 %v4454, %s4456
    %v4458 = vpop.permute.xlu0 %4457
    %v4459 = vlaneseq
    %v4460 = vshrl.u32 %v4459, 7
    %v4461 = vsub.s32 5, %v4460
    %v4462 = vrot.slane %v4418, %v4461
    %s4464 = sor.u32 256, 112
    %4465 = vbcast.lane.b32.xlu0 %v4462, %s4464
    %v4466 = vpop.permute.xlu0 %4465
    %v4467 = vlaneseq
    %v4468 = vshrl.u32 %v4467, 7
    %v4469 = vsub.s32 6, %v4468
    %v4470 = vrot.slane %v4418, %v4469
    %s4472 = sor.u32 256, 112
    %4473 = vbcast.lane.b32.xlu0 %v4470, %s4472
    %v4474 = vpop.permute.xlu0 %4473
    %v4475 = vlaneseq
    %v4476 = vshrl.u32 %v4475, 7
    %v4477 = vsub.s32 7, %v4476
    %v4478 = vrot.slane %v4418, %v4477
    %s4480 = sor.u32 256, 112
    %4481 = vbcast.lane.b32.xlu0 %v4478, %s4480
    %v4482 = vpop.permute.xlu0 %4481
    %vm4483 = vcmp.eq.s32.totalorder %v4426, %v63
    %vm4484 = vcmp.eq.s32.totalorder %v4426, %v64
    %vm4485 = vcmp.eq.s32.totalorder %v4434, %v63
    %vm4486 = vcmp.eq.s32.totalorder %v4434, %v64
    %vm4487 = vcmp.eq.s32.totalorder %v4442, %v63
    %vm4488 = vcmp.eq.s32.totalorder %v4442, %v64
    %vm4489 = vcmp.eq.s32.totalorder %v4450, %v63
    %vm4490 = vcmp.eq.s32.totalorder %v4450, %v64
    %vm4491 = vcmp.eq.s32.totalorder %v4458, %v63
    %vm4492 = vcmp.eq.s32.totalorder %v4458, %v64
    %vm4493 = vcmp.eq.s32.totalorder %v4466, %v63
    %vm4494 = vcmp.eq.s32.totalorder %v4466, %v64
    %vm4495 = vcmp.eq.s32.totalorder %v4474, %v63
    %vm4496 = vcmp.eq.s32.totalorder %v4474, %v64
    %vm4497 = vcmp.eq.s32.totalorder %v4482, %v63
    %vm4498 = vcmp.eq.s32.totalorder %v4482, %v64
    %v4499 = vsel %vm4483, 1, 0
    %v4500 = vsel %vm4484, 1, 0
    %v4501 = vsel %vm4485, 1, 0
    %v4502 = vsel %vm4486, 1, 0
    %v4503 = vsel %vm4487, 1, 0
    %v4504 = vsel %vm4488, 1, 0
    %v4505 = vsel %vm4489, 1, 0
    %v4506 = vsel %vm4490, 1, 0
    %v4507 = vsel %vm4491, 1, 0
    %v4508 = vsel %vm4492, 1, 0
    %v4509 = vsel %vm4493, 1, 0
    %v4510 = vsel %vm4494, 1, 0
    %v4511 = vsel %vm4495, 1, 0
    %v4512 = vsel %vm4496, 1, 0
    %v4513 = vsel %vm4497, 1, 0
    %v4514 = vsel %vm4498, 1, 0
    %v4515 = vcvt.s32.f32 %v4499
    %v4516 = vcvt.s32.f32 %v4500
    %v4517 = vcvt.s32.f32 %v4501
    %v4518 = vcvt.s32.f32 %v4502
    %v4519 = vcvt.s32.f32 %v4503
    %v4520 = vcvt.s32.f32 %v4504
    %v4521 = vcvt.s32.f32 %v4505
    %v4522 = vcvt.s32.f32 %v4506
    %v4523 = vcvt.s32.f32 %v4507
    %v4524 = vcvt.s32.f32 %v4508
    %v4525 = vcvt.s32.f32 %v4509
    %v4526 = vcvt.s32.f32 %v4510
    %v4527 = vcvt.s32.f32 %v4511
    %v4528 = vcvt.s32.f32 %v4512
    %v4529 = vcvt.s32.f32 %v4513
    %v4530 = vcvt.s32.f32 %v4514
    %v4531 = vpack.c.bf16 %v4515, %v4515
    %v4532 = vpack.c.bf16 %v4516, %v4516
    %v4533 = vpack.c.bf16 %v4517, %v4517
    %v4534 = vpack.c.bf16 %v4518, %v4518
    %v4535 = vpack.c.bf16 %v4519, %v4519
    %v4536 = vpack.c.bf16 %v4520, %v4520
    %v4537 = vpack.c.bf16 %v4521, %v4521
    %v4538 = vpack.c.bf16 %v4522, %v4522
    %v4539 = vpack.c.bf16 %v4523, %v4523
    %v4540 = vpack.c.bf16 %v4524, %v4524
    %v4541 = vpack.c.bf16 %v4525, %v4525
    %v4542 = vpack.c.bf16 %v4526, %v4526
    %v4543 = vpack.c.bf16 %v4527, %v4527
    %v4544 = vpack.c.bf16 %v4528, %v4528
    %v4545 = vpack.c.bf16 %v4529, %v4529
    %v4546 = vpack.c.bf16 %v4530, %v4530
    %v4547 = vld [vmem:[#allocation2] sm:$0xff]
    %v4548 = vld [vmem:[#allocation2 + $0x8] sm:$0xff]
    %v4549 = vunpack.c.l.bf16 %v4531
    %v4550 = vunpack.c.l.bf16 %v4532
    %v4551 = vunpack.c.l.bf16 %v4533
    %v4552 = vunpack.c.l.bf16 %v4534
    %v4553 = vunpack.c.l.bf16 %v4535
    %v4554 = vunpack.c.l.bf16 %v4536
    %v4555 = vunpack.c.l.bf16 %v4537
    %v4556 = vunpack.c.l.bf16 %v4538
    %v4557 = vunpack.c.l.bf16 %v4539
    %v4558 = vunpack.c.l.bf16 %v4540
    %v4559 = vunpack.c.l.bf16 %v4541
    %v4560 = vunpack.c.l.bf16 %v4542
    %v4561 = vunpack.c.l.bf16 %v4543
    %v4562 = vunpack.c.l.bf16 %v4544
    %v4563 = vunpack.c.l.bf16 %v4545
    %v4564 = vunpack.c.l.bf16 %v4546
    %v4565 = vrot.slane %v4549, 4
    %v4566 = vadd.f32 %v4549, %v4565
    %v4567 = vrot.slane %v4566, 2
    %v4568 = vadd.f32 %v4566, %v4567
    %v4569 = vrot.slane %v4568, 1
    %v4570 = vadd.f32 %v4568, %v4569
    %v4571 = vrot.slane %v4550, 4
    %v4572 = vadd.f32 %v4550, %v4571
    %v4573 = vrot.slane %v4572, 2
    %v4574 = vadd.f32 %v4572, %v4573
    %v4575 = vrot.slane %v4574, 1
    %v4576 = vadd.f32 %v4574, %v4575
    %v4577 = vrot.slane %v4551, 4
    %v4578 = vadd.f32 %v4551, %v4577
    %v4579 = vrot.slane %v4578, 2
    %v4580 = vadd.f32 %v4578, %v4579
    %v4581 = vrot.slane %v4580, 1
    %v4582 = vadd.f32 %v4580, %v4581
    %v4583 = vrot.slane %v4552, 4
    %v4584 = vadd.f32 %v4552, %v4583
    %v4585 = vrot.slane %v4584, 2
    %v4586 = vadd.f32 %v4584, %v4585
    %v4587 = vrot.slane %v4586, 1
    %v4588 = vadd.f32 %v4586, %v4587
    %v4589 = vrot.slane %v4553, 4
    %v4590 = vadd.f32 %v4553, %v4589
    %v4591 = vrot.slane %v4590, 2
    %v4592 = vadd.f32 %v4590, %v4591
    %v4593 = vrot.slane %v4592, 1
    %v4594 = vadd.f32 %v4592, %v4593
    %v4595 = vrot.slane %v4554, 4
    %v4596 = vadd.f32 %v4554, %v4595
    %v4597 = vrot.slane %v4596, 2
    %v4598 = vadd.f32 %v4596, %v4597
    %v4599 = vrot.slane %v4598, 1
    %v4600 = vadd.f32 %v4598, %v4599
    %v4601 = vrot.slane %v4555, 4
    %v4602 = vadd.f32 %v4555, %v4601
    %v4603 = vrot.slane %v4602, 2
    %v4604 = vadd.f32 %v4602, %v4603
    %v4605 = vrot.slane %v4604, 1
    %v4606 = vadd.f32 %v4604, %v4605
    %v4607 = vrot.slane %v4556, 4
    %v4608 = vadd.f32 %v4556, %v4607
    %v4609 = vrot.slane %v4608, 2
    %v4610 = vadd.f32 %v4608, %v4609
    %v4611 = vrot.slane %v4610, 1
    %v4612 = vadd.f32 %v4610, %v4611
    %v4613 = vrot.slane %v4557, 4
    %v4614 = vadd.f32 %v4557, %v4613
    %v4615 = vrot.slane %v4614, 2
    %v4616 = vadd.f32 %v4614, %v4615
    %v4617 = vrot.slane %v4616, 1
    %v4618 = vadd.f32 %v4616, %v4617
    %v4619 = vrot.slane %v4558, 4
    %v4620 = vadd.f32 %v4558, %v4619
    %v4621 = vrot.slane %v4620, 2
    %v4622 = vadd.f32 %v4620, %v4621
    %v4623 = vrot.slane %v4622, 1
    %v4624 = vadd.f32 %v4622, %v4623
    %v4625 = vrot.slane %v4559, 4
    %v4626 = vadd.f32 %v4559, %v4625
    %v4627 = vrot.slane %v4626, 2
    %v4628 = vadd.f32 %v4626, %v4627
    %v4629 = vrot.slane %v4628, 1
    %v4630 = vadd.f32 %v4628, %v4629
    %v4631 = vrot.slane %v4560, 4
    %v4632 = vadd.f32 %v4560, %v4631
    %v4633 = vrot.slane %v4632, 2
    %v4634 = vadd.f32 %v4632, %v4633
    %v4635 = vrot.slane %v4634, 1
    %v4636 = vadd.f32 %v4634, %v4635
    %v4637 = vrot.slane %v4561, 4
    %v4638 = vadd.f32 %v4561, %v4637
    %v4639 = vrot.slane %v4638, 2
    %v4640 = vadd.f32 %v4638, %v4639
    %v4641 = vrot.slane %v4640, 1
    %v4642 = vadd.f32 %v4640, %v4641
    %v4643 = vrot.slane %v4562, 4
    %v4644 = vadd.f32 %v4562, %v4643
    %v4645 = vrot.slane %v4644, 2
    %v4646 = vadd.f32 %v4644, %v4645
    %v4647 = vrot.slane %v4646, 1
    %v4648 = vadd.f32 %v4646, %v4647
    %v4649 = vrot.slane %v4563, 4
    %v4650 = vadd.f32 %v4563, %v4649
    %v4651 = vrot.slane %v4650, 2
    %v4652 = vadd.f32 %v4650, %v4651
    %v4653 = vrot.slane %v4652, 1
    %v4654 = vadd.f32 %v4652, %v4653
    %v4655 = vrot.slane %v4564, 4
    %v4656 = vadd.f32 %v4564, %v4655
    %v4657 = vrot.slane %v4656, 2
    %v4658 = vadd.f32 %v4656, %v4657
    %v4659 = vrot.slane %v4658, 1
    %v4660 = vadd.f32 %v4658, %v4659
    %v4661 = vpack.c.bf16 %v4570, %v4570
    %v4662 = vpack.c.bf16 %v4576, %v4576
    %v4663 = vpack.c.bf16 %v4582, %v4582
    %v4664 = vpack.c.bf16 %v4588, %v4588
    %v4665 = vpack.c.bf16 %v4594, %v4594
    %v4666 = vpack.c.bf16 %v4600, %v4600
    %v4667 = vpack.c.bf16 %v4606, %v4606
    %v4668 = vpack.c.bf16 %v4612, %v4612
    %v4669 = vpack.c.bf16 %v4618, %v4618
    %v4670 = vpack.c.bf16 %v4624, %v4624
    %v4671 = vpack.c.bf16 %v4630, %v4630
    %v4672 = vpack.c.bf16 %v4636, %v4636
    %v4673 = vpack.c.bf16 %v4642, %v4642
    %v4674 = vpack.c.bf16 %v4648, %v4648
    %v4675 = vpack.c.bf16 %v4654, %v4654
    %v4676 = vpack.c.bf16 %v4660, %v4660
    %v4677 = vunpack.c.l.bf16 %v4661
    %v4678 = vunpack.c.l.bf16 %v4662
    %v4679 = vunpack.c.l.bf16 %v4663
    %v4680 = vunpack.c.l.bf16 %v4664
    %v4681 = vunpack.c.l.bf16 %v4665
    %v4682 = vunpack.c.l.bf16 %v4666
    %v4683 = vunpack.c.l.bf16 %v4667
    %v4684 = vunpack.c.l.bf16 %v4668
    %v4685 = vunpack.c.l.bf16 %v4669
    %v4686 = vunpack.c.l.bf16 %v4670
    %v4687 = vunpack.c.l.bf16 %v4671
    %v4688 = vunpack.c.l.bf16 %v4672
    %v4689 = vunpack.c.l.bf16 %v4673
    %v4690 = vunpack.c.l.bf16 %v4674
    %v4691 = vunpack.c.l.bf16 %v4675
    %v4692 = vunpack.c.l.bf16 %v4676
    %v4709 = vsel %vm348, %v4679, %v4677
    %v4710 = vsel %vm350, %v4681, %v4709
    %v4711 = vsel %vm352, %v4683, %v4710
    %v4712 = vsel %vm354, %v4685, %v4711
    %v4713 = vsel %vm356, %v4687, %v4712
    %v4714 = vsel %vm358, %v4689, %v4713
    %v4715 = vsel %vm360, %v4691, %v4714
    %v4716 = vsel %vm348, %v4680, %v4678
    %v4717 = vsel %vm350, %v4682, %v4716
    %v4718 = vsel %vm352, %v4684, %v4717
    %v4719 = vsel %vm354, %v4686, %v4718
    %v4720 = vsel %vm356, %v4688, %v4719
    %v4721 = vsel %vm358, %v4690, %v4720
    %v4722 = vsel %vm360, %v4692, %v4721
    %v4725 = vadd.f32 %v4547, %v4715
    %v4726 = vadd.f32 %v4548, %v4722
    %4727 = vst [vmem:[#allocation2] sm:$0xff] %v4725
    %4728 = vst [vmem:[#allocation2 + $0x8] sm:$0xff] %v4726
    %v4729 = vld [vmem:[#allocation3] sm:$0xff]
    %v4730 = vlaneseq
    %v4731 = vshrl.u32 %v4730, 7
    %v4732 = vsub.s32 0, %v4731
    %v4733 = vrot.slane %v4729, %v4732
    %s4735 = sor.u32 256, 120
    %4736 = vbcast.lane.b32.xlu0 %v4733, %s4735
    %v4737 = vpop.permute.xlu0 %4736
    %v4738 = vlaneseq
    %v4739 = vshrl.u32 %v4738, 7
    %v4740 = vsub.s32 1, %v4739
    %v4741 = vrot.slane %v4729, %v4740
    %s4743 = sor.u32 256, 120
    %4744 = vbcast.lane.b32.xlu0 %v4741, %s4743
    %v4745 = vpop.permute.xlu0 %4744
    %v4746 = vlaneseq
    %v4747 = vshrl.u32 %v4746, 7
    %v4748 = vsub.s32 2, %v4747
    %v4749 = vrot.slane %v4729, %v4748
    %s4751 = sor.u32 256, 120
    %4752 = vbcast.lane.b32.xlu0 %v4749, %s4751
    %v4753 = vpop.permute.xlu0 %4752
    %v4754 = vlaneseq
    %v4755 = vshrl.u32 %v4754, 7
    %v4756 = vsub.s32 3, %v4755
    %v4757 = vrot.slane %v4729, %v4756
    %s4759 = sor.u32 256, 120
    %4760 = vbcast.lane.b32.xlu0 %v4757, %s4759
    %v4761 = vpop.permute.xlu0 %4760
    %v4762 = vlaneseq
    %v4763 = vshrl.u32 %v4762, 7
    %v4764 = vsub.s32 4, %v4763
    %v4765 = vrot.slane %v4729, %v4764
    %s4767 = sor.u32 256, 120
    %4768 = vbcast.lane.b32.xlu0 %v4765, %s4767
    %v4769 = vpop.permute.xlu0 %4768
    %v4770 = vlaneseq
    %v4771 = vshrl.u32 %v4770, 7
    %v4772 = vsub.s32 5, %v4771
    %v4773 = vrot.slane %v4729, %v4772
    %s4775 = sor.u32 256, 120
    %4776 = vbcast.lane.b32.xlu0 %v4773, %s4775
    %v4777 = vpop.permute.xlu0 %4776
    %v4778 = vlaneseq
    %v4779 = vshrl.u32 %v4778, 7
    %v4780 = vsub.s32 6, %v4779
    %v4781 = vrot.slane %v4729, %v4780
    %s4783 = sor.u32 256, 120
    %4784 = vbcast.lane.b32.xlu0 %v4781, %s4783
    %v4785 = vpop.permute.xlu0 %4784
    %v4786 = vlaneseq
    %v4787 = vshrl.u32 %v4786, 7
    %v4788 = vsub.s32 7, %v4787
    %v4789 = vrot.slane %v4729, %v4788
    %s4791 = sor.u32 256, 120
    %4792 = vbcast.lane.b32.xlu0 %v4789, %s4791
    %v4793 = vpop.permute.xlu0 %4792
    %vm4794 = vcmp.eq.s32.totalorder %v4737, %v63
    %vm4795 = vcmp.eq.s32.totalorder %v4737, %v64
    %vm4796 = vcmp.eq.s32.totalorder %v4745, %v63
    %vm4797 = vcmp.eq.s32.totalorder %v4745, %v64
    %vm4798 = vcmp.eq.s32.totalorder %v4753, %v63
    %vm4799 = vcmp.eq.s32.totalorder %v4753, %v64
    %vm4800 = vcmp.eq.s32.totalorder %v4761, %v63
    %vm4801 = vcmp.eq.s32.totalorder %v4761, %v64
    %vm4802 = vcmp.eq.s32.totalorder %v4769, %v63
    %vm4803 = vcmp.eq.s32.totalorder %v4769, %v64
    %vm4804 = vcmp.eq.s32.totalorder %v4777, %v63
    %vm4805 = vcmp.eq.s32.totalorder %v4777, %v64
    %vm4806 = vcmp.eq.s32.totalorder %v4785, %v63
    %vm4807 = vcmp.eq.s32.totalorder %v4785, %v64
    %vm4808 = vcmp.eq.s32.totalorder %v4793, %v63
    %vm4809 = vcmp.eq.s32.totalorder %v4793, %v64
    %v4810 = vsel %vm4794, 1, 0
    %v4811 = vsel %vm4795, 1, 0
    %v4812 = vsel %vm4796, 1, 0
    %v4813 = vsel %vm4797, 1, 0
    %v4814 = vsel %vm4798, 1, 0
    %v4815 = vsel %vm4799, 1, 0
    %v4816 = vsel %vm4800, 1, 0
    %v4817 = vsel %vm4801, 1, 0
    %v4818 = vsel %vm4802, 1, 0
    %v4819 = vsel %vm4803, 1, 0
    %v4820 = vsel %vm4804, 1, 0
    %v4821 = vsel %vm4805, 1, 0
    %v4822 = vsel %vm4806, 1, 0
    %v4823 = vsel %vm4807, 1, 0
    %v4824 = vsel %vm4808, 1, 0
    %v4825 = vsel %vm4809, 1, 0
    %v4826 = vcvt.s32.f32 %v4810
    %v4827 = vcvt.s32.f32 %v4811
    %v4828 = vcvt.s32.f32 %v4812
    %v4829 = vcvt.s32.f32 %v4813
    %v4830 = vcvt.s32.f32 %v4814
    %v4831 = vcvt.s32.f32 %v4815
    %v4832 = vcvt.s32.f32 %v4816
    %v4833 = vcvt.s32.f32 %v4817
    %v4834 = vcvt.s32.f32 %v4818
    %v4835 = vcvt.s32.f32 %v4819
    %v4836 = vcvt.s32.f32 %v4820
    %v4837 = vcvt.s32.f32 %v4821
    %v4838 = vcvt.s32.f32 %v4822
    %v4839 = vcvt.s32.f32 %v4823
    %v4840 = vcvt.s32.f32 %v4824
    %v4841 = vcvt.s32.f32 %v4825
    %v4842 = vpack.c.bf16 %v4826, %v4826
    %v4843 = vpack.c.bf16 %v4827, %v4827
    %v4844 = vpack.c.bf16 %v4828, %v4828
    %v4845 = vpack.c.bf16 %v4829, %v4829
    %v4846 = vpack.c.bf16 %v4830, %v4830
    %v4847 = vpack.c.bf16 %v4831, %v4831
    %v4848 = vpack.c.bf16 %v4832, %v4832
    %v4849 = vpack.c.bf16 %v4833, %v4833
    %v4850 = vpack.c.bf16 %v4834, %v4834
    %v4851 = vpack.c.bf16 %v4835, %v4835
    %v4852 = vpack.c.bf16 %v4836, %v4836
    %v4853 = vpack.c.bf16 %v4837, %v4837
    %v4854 = vpack.c.bf16 %v4838, %v4838
    %v4855 = vpack.c.bf16 %v4839, %v4839
    %v4856 = vpack.c.bf16 %v4840, %v4840
    %v4857 = vpack.c.bf16 %v4841, %v4841
    %v4858 = vld [vmem:[#allocation2] sm:$0xff]
    %v4859 = vld [vmem:[#allocation2 + $0x8] sm:$0xff]
    %v4860 = vunpack.c.l.bf16 %v4842
    %v4861 = vunpack.c.l.bf16 %v4843
    %v4862 = vunpack.c.l.bf16 %v4844
    %v4863 = vunpack.c.l.bf16 %v4845
    %v4864 = vunpack.c.l.bf16 %v4846
    %v4865 = vunpack.c.l.bf16 %v4847
    %v4866 = vunpack.c.l.bf16 %v4848
    %v4867 = vunpack.c.l.bf16 %v4849
    %v4868 = vunpack.c.l.bf16 %v4850
    %v4869 = vunpack.c.l.bf16 %v4851
    %v4870 = vunpack.c.l.bf16 %v4852
    %v4871 = vunpack.c.l.bf16 %v4853
    %v4872 = vunpack.c.l.bf16 %v4854
    %v4873 = vunpack.c.l.bf16 %v4855
    %v4874 = vunpack.c.l.bf16 %v4856
    %v4875 = vunpack.c.l.bf16 %v4857
    %v4876 = vrot.slane %v4860, 4
    %v4877 = vadd.f32 %v4860, %v4876
    %v4878 = vrot.slane %v4877, 2
    %v4879 = vadd.f32 %v4877, %v4878
    %v4880 = vrot.slane %v4879, 1
    %v4881 = vadd.f32 %v4879, %v4880
    %v4882 = vrot.slane %v4861, 4
    %v4883 = vadd.f32 %v4861, %v4882
    %v4884 = vrot.slane %v4883, 2
    %v4885 = vadd.f32 %v4883, %v4884
    %v4886 = vrot.slane %v4885, 1
    %v4887 = vadd.f32 %v4885, %v4886
    %v4888 = vrot.slane %v4862, 4
    %v4889 = vadd.f32 %v4862, %v4888
    %v4890 = vrot.slane %v4889, 2
    %v4891 = vadd.f32 %v4889, %v4890
    %v4892 = vrot.slane %v4891, 1
    %v4893 = vadd.f32 %v4891, %v4892
    %v4894 = vrot.slane %v4863, 4
    %v4895 = vadd.f32 %v4863, %v4894
    %v4896 = vrot.slane %v4895, 2
    %v4897 = vadd.f32 %v4895, %v4896
    %v4898 = vrot.slane %v4897, 1
    %v4899 = vadd.f32 %v4897, %v4898
    %v4900 = vrot.slane %v4864, 4
    %v4901 = vadd.f32 %v4864, %v4900
    %v4902 = vrot.slane %v4901, 2
    %v4903 = vadd.f32 %v4901, %v4902
    %v4904 = vrot.slane %v4903, 1
    %v4905 = vadd.f32 %v4903, %v4904
    %v4906 = vrot.slane %v4865, 4
    %v4907 = vadd.f32 %v4865, %v4906
    %v4908 = vrot.slane %v4907, 2
    %v4909 = vadd.f32 %v4907, %v4908
    %v4910 = vrot.slane %v4909, 1
    %v4911 = vadd.f32 %v4909, %v4910
    %v4912 = vrot.slane %v4866, 4
    %v4913 = vadd.f32 %v4866, %v4912
    %v4914 = vrot.slane %v4913, 2
    %v4915 = vadd.f32 %v4913, %v4914
    %v4916 = vrot.slane %v4915, 1
    %v4917 = vadd.f32 %v4915, %v4916
    %v4918 = vrot.slane %v4867, 4
    %v4919 = vadd.f32 %v4867, %v4918
    %v4920 = vrot.slane %v4919, 2
    %v4921 = vadd.f32 %v4919, %v4920
    %v4922 = vrot.slane %v4921, 1
    %v4923 = vadd.f32 %v4921, %v4922
    %v4924 = vrot.slane %v4868, 4
    %v4925 = vadd.f32 %v4868, %v4924
    %v4926 = vrot.slane %v4925, 2
    %v4927 = vadd.f32 %v4925, %v4926
    %v4928 = vrot.slane %v4927, 1
    %v4929 = vadd.f32 %v4927, %v4928
    %v4930 = vrot.slane %v4869, 4
    %v4931 = vadd.f32 %v4869, %v4930
    %v4932 = vrot.slane %v4931, 2
    %v4933 = vadd.f32 %v4931, %v4932
    %v4934 = vrot.slane %v4933, 1
    %v4935 = vadd.f32 %v4933, %v4934
    %v4936 = vrot.slane %v4870, 4
    %v4937 = vadd.f32 %v4870, %v4936
    %v4938 = vrot.slane %v4937, 2
    %v4939 = vadd.f32 %v4937, %v4938
    %v4940 = vrot.slane %v4939, 1
    %v4941 = vadd.f32 %v4939, %v4940
    %v4942 = vrot.slane %v4871, 4
    %v4943 = vadd.f32 %v4871, %v4942
    %v4944 = vrot.slane %v4943, 2
    %v4945 = vadd.f32 %v4943, %v4944
    %v4946 = vrot.slane %v4945, 1
    %v4947 = vadd.f32 %v4945, %v4946
    %v4948 = vrot.slane %v4872, 4
    %v4949 = vadd.f32 %v4872, %v4948
    %v4950 = vrot.slane %v4949, 2
    %v4951 = vadd.f32 %v4949, %v4950
    %v4952 = vrot.slane %v4951, 1
    %v4953 = vadd.f32 %v4951, %v4952
    %v4954 = vrot.slane %v4873, 4
    %v4955 = vadd.f32 %v4873, %v4954
    %v4956 = vrot.slane %v4955, 2
    %v4957 = vadd.f32 %v4955, %v4956
    %v4958 = vrot.slane %v4957, 1
    %v4959 = vadd.f32 %v4957, %v4958
    %v4960 = vrot.slane %v4874, 4
    %v4961 = vadd.f32 %v4874, %v4960
    %v4962 = vrot.slane %v4961, 2
    %v4963 = vadd.f32 %v4961, %v4962
    %v4964 = vrot.slane %v4963, 1
    %v4965 = vadd.f32 %v4963, %v4964
    %v4966 = vrot.slane %v4875, 4
    %v4967 = vadd.f32 %v4875, %v4966
    %v4968 = vrot.slane %v4967, 2
    %v4969 = vadd.f32 %v4967, %v4968
    %v4970 = vrot.slane %v4969, 1
    %v4971 = vadd.f32 %v4969, %v4970
    %v4972 = vpack.c.bf16 %v4881, %v4881
    %v4973 = vpack.c.bf16 %v4887, %v4887
    %v4974 = vpack.c.bf16 %v4893, %v4893
    %v4975 = vpack.c.bf16 %v4899, %v4899
    %v4976 = vpack.c.bf16 %v4905, %v4905
    %v4977 = vpack.c.bf16 %v4911, %v4911
    %v4978 = vpack.c.bf16 %v4917, %v4917
    %v4979 = vpack.c.bf16 %v4923, %v4923
    %v4980 = vpack.c.bf16 %v4929, %v4929
    %v4981 = vpack.c.bf16 %v4935, %v4935
    %v4982 = vpack.c.bf16 %v4941, %v4941
    %v4983 = vpack.c.bf16 %v4947, %v4947
    %v4984 = vpack.c.bf16 %v4953, %v4953
    %v4985 = vpack.c.bf16 %v4959, %v4959
    %v4986 = vpack.c.bf16 %v4965, %v4965
    %v4987 = vpack.c.bf16 %v4971, %v4971
    %v4988 = vunpack.c.l.bf16 %v4972
    %v4989 = vunpack.c.l.bf16 %v4973
    %v4990 = vunpack.c.l.bf16 %v4974
    %v4991 = vunpack.c.l.bf16 %v4975
    %v4992 = vunpack.c.l.bf16 %v4976
    %v4993 = vunpack.c.l.bf16 %v4977
    %v4994 = vunpack.c.l.bf16 %v4978
    %v4995 = vunpack.c.l.bf16 %v4979
    %v4996 = vunpack.c.l.bf16 %v4980
    %v4997 = vunpack.c.l.bf16 %v4981
    %v4998 = vunpack.c.l.bf16 %v4982
    %v4999 = vunpack.c.l.bf16 %v4983
    %v5000 = vunpack.c.l.bf16 %v4984
    %v5001 = vunpack.c.l.bf16 %v4985
    %v5002 = vunpack.c.l.bf16 %v4986
    %v5003 = vunpack.c.l.bf16 %v4987
    %v5020 = vsel %vm348, %v4990, %v4988
    %v5021 = vsel %vm350, %v4992, %v5020
    %v5022 = vsel %vm352, %v4994, %v5021
    %v5023 = vsel %vm354, %v4996, %v5022
    %v5024 = vsel %vm356, %v4998, %v5023
    %v5025 = vsel %vm358, %v5000, %v5024
    %v5026 = vsel %vm360, %v5002, %v5025
    %v5027 = vsel %vm348, %v4991, %v4989
    %v5028 = vsel %vm350, %v4993, %v5027
    %v5029 = vsel %vm352, %v4995, %v5028
    %v5030 = vsel %vm354, %v4997, %v5029
    %v5031 = vsel %vm356, %v4999, %v5030
    %v5032 = vsel %vm358, %v5001, %v5031
    %v5033 = vsel %vm360, %v5003, %v5032
    %v5036 = vadd.f32 %v4858, %v5026
    %v5037 = vadd.f32 %v4859, %v5033
    %5038 = vst [vmem:[#allocation2] sm:$0xff] %v5036
    %5039 = vst [vmem:[#allocation2 + $0x8] sm:$0xff] %v5037
    %v5040 = vld [vmem:[#allocation2] sm:$0xff]
    %v5041 = vld [vmem:[#allocation2 + $0x8] sm:$0xff]
    %vm5042 = vcmp.eq.s32.totalorder %v63, 0
    %vm5043 = vcmp.eq.s32.totalorder %v64, 0
    %v5044 = vsel %vm5042, 0.0, %v5040
    %v5045 = vsel %vm5043, 0.0, %v5041
    %v5046 = vadd.f32 %v5044, %v5045
    %5047 = vadd.xlane.f32.xlu0 %v5046
    %v5048 = vpop.xlane.xlu0 %5047
    %v5049 = vmax.f32 %v5048, 1.0
    %v5050 = vrcp.pop %v5049
    %v5051 = vld [vmem:[#allocation6] sm:$0xff]
    %v5052 = vld [vmem:[#allocation6 + $0x8] sm:$0xff]
    %v5053 = vld [vmem:[#allocation6 + $0x10] sm:$0xff]
    %v5054 = vld [vmem:[#allocation6 + $0x18] sm:$0xff]
    %v5055 = vld [vmem:[#allocation6 + $0x20] sm:$0xff]
    %v5056 = vld [vmem:[#allocation6 + $0x28] sm:$0xff]
    %v5057 = vld [vmem:[#allocation6 + $0x30] sm:$0xff]
    %v5058 = vld [vmem:[#allocation6 + $0x38] sm:$0xff]
    %v5059 = vld [vmem:[#allocation6 + $0x40] sm:$0xff]
    %v5060 = vld [vmem:[#allocation6 + $0x48] sm:$0xff]
    %v5061 = vld [vmem:[#allocation6 + $0x50] sm:$0xff]
    %v5062 = vld [vmem:[#allocation6 + $0x58] sm:$0xff]
    %v5063 = vld [vmem:[#allocation6 + $0x60] sm:$0xff]
    %v5064 = vld [vmem:[#allocation6 + $0x68] sm:$0xff]
    %v5065 = vld [vmem:[#allocation6 + $0x70] sm:$0xff]
    %v5066 = vld [vmem:[#allocation6 + $0x78] sm:$0xff]
    %v5067 = vld [vmem:[#allocation6 + $0x80] sm:$0xff]
    %v5068 = vld [vmem:[#allocation6 + $0x88] sm:$0xff]
    %v5069 = vld [vmem:[#allocation6 + $0x90] sm:$0xff]
    %v5070 = vld [vmem:[#allocation6 + $0x98] sm:$0xff]
    %v5071 = vld [vmem:[#allocation6 + $0xa0] sm:$0xff]
    %v5072 = vld [vmem:[#allocation6 + $0xa8] sm:$0xff]
    %v5073 = vld [vmem:[#allocation6 + $0xb0] sm:$0xff]
    %v5074 = vld [vmem:[#allocation6 + $0xb8] sm:$0xff]
    %v5075 = vld [vmem:[#allocation6 + $0xc0] sm:$0xff]
    %v5076 = vld [vmem:[#allocation6 + $0xc8] sm:$0xff]
    %v5077 = vld [vmem:[#allocation6 + $0xd0] sm:$0xff]
    %v5078 = vld [vmem:[#allocation6 + $0xd8] sm:$0xff]
    %v5079 = vld [vmem:[#allocation6 + $0xe0] sm:$0xff]
    %v5080 = vld [vmem:[#allocation6 + $0xe8] sm:$0xff]
    %v5081 = vld [vmem:[#allocation6 + $0xf0] sm:$0xff]
    %v5082 = vld [vmem:[#allocation6 + $0xf8] sm:$0xff]
    %5083 = vmatprep.subr.mxu0 0.0
    %5084 = vmatpush1.msra.mxu0 %v5066
    %5085 = vmatprep.subr.mxu0 0.0
    %5086 = vmatpush1.msra.mxu0 %v5065
    %5087 = vmatprep.subr.mxu0 0.0
    %5088 = vmatpush1.msra.mxu0 %v5064
    %5089 = vmatprep.subr.mxu0 0.0
    %5090 = vmatpush1.msra.mxu0 %v5063
    %5091 = vmatprep.subr.mxu0 0.0
    %5092 = vmatpush1.msra.mxu0 %v5062
    %5093 = vmatprep.subr.mxu0 0.0
    %5094 = vmatpush1.msra.mxu0 %v5061
    %5095 = vmatprep.subr.mxu0 0.0
    %5096 = vmatpush1.msra.mxu0 %v5060
    %5097 = vmatprep.subr.mxu0 0.0
    %5098 = vmatpush1.msra.mxu0 %v5059
    %5099 = vmatprep.subr.mxu0 0.0
    %5100 = vmatpush1.msra.mxu0 %v5058
    %5101 = vmatprep.subr.mxu0 0.0
    %5102 = vmatpush1.msra.mxu0 %v5057
    %5103 = vmatprep.subr.mxu0 0.0
    %5104 = vmatpush1.msra.mxu0 %v5056
    %5105 = vmatprep.subr.mxu0 0.0
    %5106 = vmatpush1.msra.mxu0 %v5055
    %5107 = vmatprep.subr.mxu0 0.0
    %5108 = vmatpush1.msra.mxu0 %v5054
    %5109 = vmatprep.subr.mxu0 0.0
    %5110 = vmatpush1.msra.mxu0 %v5053
    %5111 = vmatprep.subr.mxu0 0.0
    %5112 = vmatpush1.msra.mxu0 %v5052
    %5113 = vmatprep.subr.mxu0 0.0
    %5114 = vmatpush1.msra.mxu0 %v5051
    %5115 = vmatprep.subr.mxu0 0.0
    %5116 = vmatpush2.msra.mxu0 %v5082
    %5117 = vmatprep.subr.mxu0 0.0
    %5118 = vmatpush2.msra.mxu0 %v5081
    %5119 = vmatprep.subr.mxu0 0.0
    %5120 = vmatpush2.msra.mxu0 %v5080
    %5121 = vmatprep.subr.mxu0 0.0
    %5122 = vmatpush2.msra.mxu0 %v5079
    %5123 = vmatprep.subr.mxu0 0.0
    %5124 = vmatpush2.msra.mxu0 %v5078
    %5125 = vmatprep.subr.mxu0 0.0
    %5126 = vmatpush2.msra.mxu0 %v5077
    %5127 = vmatprep.subr.mxu0 0.0
    %5128 = vmatpush2.msra.mxu0 %v5076
    %5129 = vmatprep.subr.mxu0 0.0
    %5130 = vmatpush2.msra.mxu0 %v5075
    %5131 = vmatprep.subr.mxu0 0.0
    %5132 = vmatpush2.msra.mxu0 %v5074
    %5133 = vmatprep.subr.mxu0 0.0
    %5134 = vmatpush2.msra.mxu0 %v5073
    %5135 = vmatprep.subr.mxu0 0.0
    %5136 = vmatpush2.msra.mxu0 %v5072
    %5137 = vmatprep.subr.mxu0 0.0
    %5138 = vmatpush2.msra.mxu0 %v5071
    %5139 = vmatprep.subr.mxu0 0.0
    %5140 = vmatpush2.msra.mxu0 %v5070
    %5141 = vmatprep.subr.mxu0 0.0
    %5142 = vmatpush2.msra.mxu0 %v5069
    %5143 = vmatprep.subr.mxu0 0.0
    %5144 = vmatpush2.msra.mxu0 %v5068
    %5145 = vmatprep.subr.mxu0 0.0
    %5146 = vmatpush2.msra.mxu0 %v5067
    %5147 = vmatprep.mubr.f32.mxu0 %v5045
    %5148 = vmatmul.mubr.f32.gmra.mxu0 %v5044
    %v5149 = vpop.f32.mrf.mxu0
    %v5150 = vadd.f32 0.0, %v5149
    %v5151 = vpop.f32.mrf.mxu0
    %5152 = vdwg.mxu0
    %v5153 = vmul.f32 %v5150, %v5050
    %v5154 = vld [vmem:[%s2] sm:$0x1]
    %v5156 = vlaneseq
    %v5157 = vshrl.u32 %v5156, 7
    %v5158 = vsub.s32 0, %v5157
    %v5159 = vrot.slane %v5154, %v5158
    %v5161 = vadd.f32 %v5153, %v5159
    %v5162 = vmax.f32 %v5161, 0.0
    %v5163 = vld [vmem:[#allocation8] sm:$0xff]
    %v5164 = vld [vmem:[#allocation8 + $0x8] sm:$0xff]
    %v5165 = vld [vmem:[#allocation8 + $0x10] sm:$0xff]
    %v5166 = vld [vmem:[#allocation8 + $0x18] sm:$0xff]
    %v5167 = vld [vmem:[#allocation8 + $0x20] sm:$0xff]
    %v5168 = vld [vmem:[#allocation8 + $0x28] sm:$0xff]
    %v5169 = vld [vmem:[#allocation8 + $0x30] sm:$0xff]
    %v5170 = vld [vmem:[#allocation8 + $0x38] sm:$0xff]
    %v5171 = vld [vmem:[#allocation8 + $0x40] sm:$0xff]
    %v5172 = vld [vmem:[#allocation8 + $0x48] sm:$0xff]
    %v5173 = vld [vmem:[#allocation8 + $0x50] sm:$0xff]
    %v5174 = vld [vmem:[#allocation8 + $0x58] sm:$0xff]
    %v5175 = vld [vmem:[#allocation8 + $0x60] sm:$0xff]
    %v5176 = vld [vmem:[#allocation8 + $0x68] sm:$0xff]
    %v5177 = vld [vmem:[#allocation8 + $0x70] sm:$0xff]
    %v5178 = vld [vmem:[#allocation8 + $0x78] sm:$0xff]
    %v5179 = vld [vmem:[%s4] sm:$0x1]
    %v5181 = vlaneseq
    %v5182 = vshrl.u32 %v5181, 7
    %v5183 = vsub.s32 0, %v5182
    %v5184 = vrot.slane %v5179, %v5183
    %5186 = vmatprep.subr.mxu0 0.0
    %5187 = vmatpush1.msra.mxu0 %v5178
    %5188 = vmatprep.subr.mxu0 0.0
    %5189 = vmatpush1.msra.mxu0 %v5177
    %5190 = vmatprep.subr.mxu0 0.0
    %5191 = vmatpush1.msra.mxu0 %v5176
    %5192 = vmatprep.subr.mxu0 0.0
    %5193 = vmatpush1.msra.mxu0 %v5175
    %5194 = vmatprep.subr.mxu0 0.0
    %5195 = vmatpush1.msra.mxu0 %v5174
    %5196 = vmatprep.subr.mxu0 0.0
    %5197 = vmatpush1.msra.mxu0 %v5173
    %5198 = vmatprep.subr.mxu0 0.0
    %5199 = vmatpush1.msra.mxu0 %v5172
    %5200 = vmatprep.subr.mxu0 0.0
    %5201 = vmatpush1.msra.mxu0 %v5171
    %5202 = vmatprep.subr.mxu0 0.0
    %5203 = vmatpush1.msra.mxu0 %v5170
    %5204 = vmatprep.subr.mxu0 0.0
    %5205 = vmatpush1.msra.mxu0 %v5169
    %5206 = vmatprep.subr.mxu0 0.0
    %5207 = vmatpush1.msra.mxu0 %v5168
    %5208 = vmatprep.subr.mxu0 0.0
    %5209 = vmatpush1.msra.mxu0 %v5167
    %5210 = vmatprep.subr.mxu0 0.0
    %5211 = vmatpush1.msra.mxu0 %v5166
    %5212 = vmatprep.subr.mxu0 0.0
    %5213 = vmatpush1.msra.mxu0 %v5165
    %5214 = vmatprep.subr.mxu0 0.0
    %5215 = vmatpush1.msra.mxu0 %v5164
    %5216 = vmatprep.subr.mxu0 0.0
    %5217 = vmatpush1.msra.mxu0 %v5163
    %5218 = vmatprep.subr.mxu0 0.0
    %5219 = vmatpush2.msra.mxu0 0.0
    %5220 = vmatprep.subr.mxu0 0.0
    %5221 = vmatpush2.msra.mxu0 0.0
    %5222 = vmatprep.subr.mxu0 0.0
    %5223 = vmatpush2.msra.mxu0 0.0
    %5224 = vmatprep.subr.mxu0 0.0
    %5225 = vmatpush2.msra.mxu0 0.0
    %5226 = vmatprep.subr.mxu0 0.0
    %5227 = vmatpush2.msra.mxu0 0.0
    %5228 = vmatprep.subr.mxu0 0.0
    %5229 = vmatpush2.msra.mxu0 0.0
    %5230 = vmatprep.subr.mxu0 0.0
    %5231 = vmatpush2.msra.mxu0 0.0
    %5232 = vmatprep.subr.mxu0 0.0
    %5233 = vmatpush2.msra.mxu0 0.0
    %5234 = vmatprep.subr.mxu0 0.0
    %5235 = vmatpush2.msra.mxu0 0.0
    %5236 = vmatprep.subr.mxu0 0.0
    %5237 = vmatpush2.msra.mxu0 0.0
    %5238 = vmatprep.subr.mxu0 0.0
    %5239 = vmatpush2.msra.mxu0 0.0
    %5240 = vmatprep.subr.mxu0 0.0
    %5241 = vmatpush2.msra.mxu0 0.0
    %5242 = vmatprep.subr.mxu0 0.0
    %5243 = vmatpush2.msra.mxu0 0.0
    %5244 = vmatprep.subr.mxu0 0.0
    %5245 = vmatpush2.msra.mxu0 0.0
    %5246 = vmatprep.subr.mxu0 0.0
    %5247 = vmatpush2.msra.mxu0 0.0
    %5248 = vmatprep.subr.mxu0 0.0
    %5249 = vmatpush2.msra.mxu0 0.0
    %5250 = vmatprep.mubr.f32.mxu0 0.0
    %5251 = vmatmul.mubr.f32.gmra.mxu0 %v5162
    %v5252 = vpop.f32.mrf.mxu0
    %v5253 = vadd.f32 %v5184, %v5252
    %v5254 = vpop.f32.mrf.mxu0
    %5255 = vdwg.mxu0
    %5256 = vst [vmem:[#allocation9] sm:$0xff] %v5253
    // Predicated region
    $region34: #{tpu_custom_call.1} parent=1 // pred_check
      _
    $region35: #{tpu_custom_call.1} parent=1 // pred_check_branch
      %5258 = sbr.rel (0) target = $region37
    $region36: #{tpu_custom_call.1} parent=1 // pred_region
      %s5260 = ssub.s32 128, 128
      %5261 = vsyncadd [#allocation5], %s5260
      %s5263 = sshll.u32 [#allocation9], 4
      %s5264 = int_to_ptr.vmem [resolvable:$true] %s5263
      %5266 = dma.vmem_to_hbm [thread:$0]  %s5264, 128, %s5, [#allocation5]
    $region37: #{tpu_custom_call.1} parent=1 // pred_fallthru
      _
    // Predicated region
    $region38: #{tpu_custom_call.1} parent=1 // pred_check
      _
    $region39: #{tpu_custom_call.1} parent=1 // pred_check_branch
      %5268 = sbr.rel (0) target = $region41
    $region40: #{tpu_custom_call.1} parent=1 // pred_region
      %5269 = dma.done [#allocation5], 128
    $region41: #{tpu_custom_call.1} parent=1 // pred_fallthru
      _
    %5270 = vsyncpa [#allocation4], 1
    %5271 = vsyncpa [#allocation7], 1
    %5272 = vsyncpa [#allocation5], 1

</llo_original>
